<compile_context>
chip_gen: v6e
topology: v6e:2x2x1
jax: 0.10.0
libtpu: 0.0.40
codegen_flags: <defaults>
</compile_context>

<pallas_src>
import jax
import jax.numpy as jnp
from jax import lax
from jax.experimental import pallas as pl
from jax.experimental.pallas import tpu as pltpu

LATENT_DIM = 50
INPUT_DIM = 784
INTER_DIMS = [500, 500, 2000]
BN_EPS = 1e-5
LANE = 128


def _round_up(n, m):
    return ((n + m - 1) // m) * m


# Hardware-friendly (padded) dims.
K0 = _round_up(LATENT_DIM, 64)         # 64  (multiple of bf16/int8 sublane tile)
D1 = _round_up(INTER_DIMS[-1], LANE)   # 2048
D2 = _round_up(INTER_DIMS[-2], LANE)   # 512
D3 = _round_up(INTER_DIMS[-3], LANE)   # 512
D4 = _round_up(INPUT_DIM, LANE)        # 896

# Lane offsets of each layer's (gamma|scale, beta|bias) pair inside `aux`.
OFF1, OFF2, OFF3, OFF4 = 0, D1, D1 + D2, D1 + D2 + D3
AUX_W = D1 + D2 + D3 + D4              # 3968 (multiple of 128)


# --------------------------------------------------------------------------
# Kernel
# --------------------------------------------------------------------------
def generator_kernel(x_ref, qw1_ref, qw2_ref, qw3_ref, qw4_ref, aux_ref, o_ref):
    """Whole forward pass on one grid point; everything resident in VMEM.

    Weights arrive as int8 and are dequantized (cast only) to bf16 on the VPU;
    the MXU accumulates in f32.  Zero-padded feature lanes stay exactly zero
    through BN (gamma_pad = beta_pad = 0) and ReLU, and zero-padded weight
    rows contribute nothing to the next matmul, so padding never changes the
    math.
    """
    aux = aux_ref[...]                       # [2, AUX_W] f32
    row_a = aux[0:1, :]                      # gammas (layers 1-3) | s4 (layer 4)
    row_b = aux[1:2, :]                      # betas  (layers 1-3) | b4 (layer 4)

    def linear_bn_relu(h, qw_ref, off, width):
        # Linear (bias dropped: it cancels under training-mode BatchNorm).
        # int8 -> bf16 dequant is a plain cast: the per-column quantization
        # scale cancels exactly under the BN normalization below.
        w = qw_ref[...].astype(jnp.bfloat16)
        y = jnp.dot(h, w, preferred_element_type=jnp.float32)
        # BatchNorm1d, training mode: batch mean + biased variance (two-pass),
        # affine folded into a single per-feature scale/shift.
        mean = jnp.mean(y, axis=0, keepdims=True)
        var = jnp.mean(jnp.square(y - mean), axis=0, keepdims=True)
        gamma = row_a[:, off:off + width]
        beta = row_b[:, off:off + width]
        scale = gamma * lax.rsqrt(var + BN_EPS)
        shift = beta - mean * scale
        # Affine + ReLU; cast to bf16 only as the next matmul operand.
        return jnp.maximum(y * scale + shift, 0.0).astype(jnp.bfloat16)

    h = x_ref[...].astype(jnp.bfloat16)
    h = linear_bn_relu(h, qw1_ref, OFF1, D1)
    h = linear_bn_relu(h, qw2_ref, OFF2, D2)
    h = linear_bn_relu(h, qw3_ref, OFF3, D3)

    # Final Linear: apply the int8 dequant scale per output column, add bias.
    w4 = qw4_ref[...].astype(jnp.bfloat16)
    y = jnp.dot(h, w4, preferred_element_type=jnp.float32)
    s4 = row_a[:, OFF4:OFF4 + D4]
    b4 = row_b[:, OFF4:OFF4 + D4]
    y = y * s4 + b4
    # Drop padded output columns in-kernel -> caller needs no slice op.
    o_ref[...] = jax.nn.sigmoid(y[:, :INPUT_DIM]).astype(o_ref.dtype)


# --------------------------------------------------------------------------
# Parameter preparation (one-time, outside the per-call jit)
# --------------------------------------------------------------------------
def _quantize_per_col(w):
    """Symmetric per-output-channel int8 quantization: w ~= q * scale."""
    amax = jnp.max(jnp.abs(w), axis=0, keepdims=True)
    scale = jnp.maximum(amax, 1e-12) / 127.0
    q = jnp.clip(jnp.round(w / scale), -127.0, 127.0).astype(jnp.int8)
    return q, scale.astype(jnp.float32)


def _pad2(a, r, c):
    return jnp.pad(a, ((0, r - a.shape[0]), (0, c - a.shape[1])))


def prepare_params(params):
    """Quantize, pad and pack the model parameters once."""
    (w1, b1, g1, be1, w2, b2, g2, be2, w3, b3, g3, be3, w4, b4) = params
    del b1, b2, b3  # cancelled exactly by BN's mean subtraction

    q1, _ = _quantize_per_col(w1)   # scales cancel under BN -> not stored
    q2, _ = _quantize_per_col(w2)
    q3, _ = _quantize_per_col(w3)
    q4, s4 = _quantize_per_col(w4)  # scale needed: no BN after layer 4

    # One packed buffer for all tiny per-feature vectors (one DMA, not eight).
    aux = jnp.zeros((2, AUX_W), jnp.float32)
    aux = aux.at[0:1, OFF1:OFF1 + g1.shape[1]].set(g1)
    aux = aux.at[1:2, OFF1:OFF1 + be1.shape[1]].set(be1)
    aux = aux.at[0:1, OFF2:OFF2 + g2.shape[1]].set(g2)
    aux = aux.at[1:2, OFF2:OFF2 + be2.shape[1]].set(be2)
    aux = aux.at[0:1, OFF3:OFF3 + g3.shape[1]].set(g3)
    aux = aux.at[1:2, OFF3:OFF3 + be3.shape[1]].set(be3)
    aux = aux.at[0:1, OFF4:OFF4 + s4.shape[1]].set(s4)
    aux = aux.at[1:2, OFF4:OFF4 + b4.shape[1]].set(b4)

    prepped = (
        _pad2(q1, K0, D1),
        _pad2(q2, D1, D2),
        _pad2(q3, D2, D3),
        _pad2(q4, D3, D4),
        aux,
    )
    # Materialize once so nothing is re-quantized / re-padded per call.
    return tuple(jax.block_until_ready(jax.device_put(p)) for p in prepped)


# --------------------------------------------------------------------------
# Forward wrapper
# --------------------------------------------------------------------------
@jax.jit
def generator_forward(x, prepped):
    """x: [B, LATENT_DIM] f32 -> [B, INPUT_DIM] f32 (BatchNorm in training mode)."""
    B = x.shape[0]
    # Only the tiny input needs a per-call pad (50 -> 64 lanes).
    x_p = jnp.pad(x, ((0, 0), (0, K0 - LATENT_DIM)))

    vmem = pl.BlockSpec(memory_space=pltpu.MemorySpace.VMEM)

    weight_bytes = K0 * D1 + D1 * D2 + D2 * D3 + D3 * D4        # int8
    cost = pl.CostEstimate(
        flops=2 * B * (K0 * D1 + D1 * D2 + D2 * D3 + D3 * D4),
        transcendentals=B * (INPUT_DIM + D1 + D2 + D3),
        bytes_accessed=weight_bytes + 2 * AUX_W * 4 + B * K0 * 4
        + B * INPUT_DIM * 4,
    )

    return pl.pallas_call(
        generator_kernel,
        out_shape=jax.ShapeDtypeStruct((B, INPUT_DIM), jnp.float32),
        in_specs=[vmem] * (1 + len(prepped)),
        out_specs=vmem,
        compiler_params=pltpu.CompilerParams(vmem_limit_bytes=24 << 20),
        cost_estimate=cost,
    )(x_p, *prepped)


# --------------------------------------------------------------------------
# Synthetic params + references
# --------------------------------------------------------------------------
def init_params(key):
    """Deterministic synthetic parameters (shapes match the PyTorch module)."""
    dims = [LATENT_DIM, INTER_DIMS[-1], INTER_DIMS[-2], INTER_DIMS[-3], INPUT_DIM]
    keys = jax.random.split(key, 16)
    params, ki = [], 0
    for i in range(3):  # 3 x (Linear + BN)
        fan_in, fan_out = dims[i], dims[i + 1]
        w = 0.02 * jax.random.normal(keys[ki], (fan_in, fan_out), jnp.float32); ki += 1
        b = 0.1 * jax.random.normal(keys[ki], (1, fan_out), jnp.float32); ki += 1
        gamma = 1.0 + 0.1 * jax.random.normal(keys[ki], (1, fan_out), jnp.float32); ki += 1
        beta = 0.1 * jax.random.normal(keys[ki], (1, fan_out), jnp.float32); ki += 1
        params += [w, b, gamma, beta]
    w4 = 0.02 * jax.random.normal(keys[ki], (dims[3], dims[4]), jnp.float32); ki += 1
    b4 = 0.1 * jax.random.normal(keys[ki], (1, dims[4]), jnp.float32); ki += 1
    params += [w4, b4]
    return tuple(params)


def reference_forward_f32(x, params):
    """Full-precision f32 reference of the original module (training-mode BN)."""
    (w1, b1, g1, be1, w2, b2, g2, be2, w3, b3, g3, be3, w4, b4) = params

    def lbr(h, w, b, g, be):
        y = h @ w + b
        mean = jnp.mean(y, axis=0, keepdims=True)
        var = jnp.mean((y - mean) ** 2, axis=0, keepdims=True)
        y = (y - mean) / jnp.sqrt(var + BN_EPS) * g + be
        return jnp.maximum(y, 0.0)

    h = lbr(x, w1, b1, g1, be1)
    h = lbr(h, w2, b2, g2, be2)
    h = lbr(h, w3, b3, g3, be3)
    return jax.nn.sigmoid(h @ w4 + b4)


def reference_forward_quantized(x, params):
    """Pure-JAX reference reproducing the kernel's numerics (int8 weights fed
    as bf16 to a f32-accumulating matmul; per-column scales cancelled by BN)."""
    (w1, b1, g1, be1, w2, b2, g2, be2, w3, b3, g3, be3, w4, b4) = params
    q1, _ = _quantize_per_col(w1)
    q2, _ = _quantize_per_col(w2)
    q3, _ = _quantize_per_col(w3)
    q4, s4 = _quantize_per_col(w4)

    def mm(h, q):
        return jnp.dot(h.astype(jnp.bfloat16), q.astype(jnp.bfloat16),
                       preferred_element_type=jnp.float32)

    def lbr(h, q, g, be):
        y = mm(h, q)
        mean = jnp.mean(y, axis=0, keepdims=True)
        var = jnp.mean((y - mean) ** 2, axis=0, keepdims=True)
        y = (y - mean) * (g / jnp.sqrt(var + BN_EPS)) + be
        return jnp.maximum(y, 0.0)

    h = lbr(x, q1, g1, be1)
    h = lbr(h, q2, g2, be2)
    h = lbr(h, q3, g3, be3)
    return jax.nn.sigmoid(mm(h, q4) * s4 + b4)


if __name__ == "__main__":
    key = jax.random.PRNGKey(0)
    k_param, k_x = jax.random.split(key)

    params = init_params(k_param)
    prepped = prepare_params(params)

    B = 8
    x = jax.random.normal(k_x, (B, LATENT_DIM), jnp.float32)

    out = jax.block_until_ready(generator_forward(x, prepped))
    assert out.shape == (B, INPUT_DIM), out.shape
    assert bool(jnp.all(jnp.isfinite(out)))

    # Strict check against a reference with the kernel's exact numerics.
    ref_q = reference_forward_quantized(x, params)
    err_q = float(jnp.max(jnp.abs(out - ref_q)))
    assert err_q < 1e-2, f"kernel vs bit-matched reference: max err {err_q}"

    # Loose check against the full-precision original forward
    # (bounds int8-quantization + bf16 error).
    ref_f = reference_forward_f32(x, params)
    err_f = float(jnp.max(jnp.abs(out - ref_f)))
    assert err_f < 5e-2, f"kernel vs f32 reference: max err {err_f}"

    print("KERNEL_OK")
</pallas_src>

<mosaic_0001>
module attributes {stable_mosaic.version = 11 : i64} {
  func.func @generator_kernel(%arg0: memref<8x64xf32, #tpu.memory_space<vmem>>, %arg1: memref<64x2048xi8, #tpu.memory_space<vmem>>, %arg2: memref<2048x512xi8, #tpu.memory_space<vmem>>, %arg3: memref<512x512xi8, #tpu.memory_space<vmem>>, %arg4: memref<512x896xi8, #tpu.memory_space<vmem>>, %arg5: memref<2x3968xf32, #tpu.memory_space<vmem>>, %arg6: memref<8x784xf32, #tpu.memory_space<vmem>>) attributes {dimension_semantics = [], scalar_prefetch = 0 : i64, scratch_operands = 0 : i64, tpu.core_type = #tpu.core_type<tc>} {
    %c0 = arith.constant 0 : index
    %c0_0 = arith.constant 0 : index
    %0 = vector.load %arg5[%c0, %c0_0] : memref<2x3968xf32, #tpu.memory_space<vmem>>, vector<2x3968xf32>
    %1 = vector.extract_strided_slice %0 {offsets = [0, 0], sizes = [1, 3968], strides = [1, 1]} : vector<2x3968xf32> to vector<1x3968xf32>
    %2 = vector.extract_strided_slice %0 {offsets = [1, 0], sizes = [1, 3968], strides = [1, 1]} : vector<2x3968xf32> to vector<1x3968xf32>
    %c0_1 = arith.constant 0 : index
    %c0_2 = arith.constant 0 : index
    %3 = vector.load %arg0[%c0_1, %c0_2] : memref<8x64xf32, #tpu.memory_space<vmem>>, vector<8x64xf32>
    %4 = arith.truncf %3 : vector<8x64xf32> to vector<8x64xbf16>
    %c0_3 = arith.constant 0 : index
    %c0_4 = arith.constant 0 : index
    %5 = vector.load %arg1[%c0_3, %c0_4] : memref<64x2048xi8, #tpu.memory_space<vmem>>, vector<64x2048xi8>
    %6 = arith.sitofp %5 : vector<64x2048xi8> to vector<64x2048xbf16>
    %cst = arith.constant dense<0.000000e+00> : vector<8x2048xf32>
    %7 = tpu.matmul %4, %6, %cst {dimension_numbers = #tpu.dot_dimension_numbers<[1], [0], [0], [1], [0, 0, 1, 1], [], []>} : vector<8x64xbf16>, vector<64x2048xbf16>, vector<8x2048xf32> -> vector<8x2048xf32>
    %cst_5 = arith.constant dense<0.000000e+00> : vector<2048xf32>
    %8 = vector.multi_reduction <add>, %7, %cst_5 [0] : vector<8x2048xf32> to vector<2048xf32>
    %9 = vector.shape_cast %8 : vector<2048xf32> to vector<1x2048xf32>
    %cst_6 = arith.constant 8.000000e+00 : f32
    %10 = vector.broadcast %cst_6 : f32 to vector<1x2048xf32>
    %11 = arith.divf %9, %10 : vector<1x2048xf32>
    %12 = vector.broadcast %11 : vector<1x2048xf32> to vector<8x2048xf32>
    %13 = arith.subf %7, %12 : vector<8x2048xf32>
    %14 = arith.mulf %13, %13 : vector<8x2048xf32>
    %cst_7 = arith.constant dense<0.000000e+00> : vector<2048xf32>
    %15 = vector.multi_reduction <add>, %14, %cst_7 [0] : vector<8x2048xf32> to vector<2048xf32>
    %16 = vector.shape_cast %15 : vector<2048xf32> to vector<1x2048xf32>
    %cst_8 = arith.constant 8.000000e+00 : f32
    %17 = vector.broadcast %cst_8 : f32 to vector<1x2048xf32>
    %18 = arith.divf %16, %17 : vector<1x2048xf32>
    %19 = vector.extract_strided_slice %1 {offsets = [0, 0], sizes = [1, 2048], strides = [1, 1]} : vector<1x3968xf32> to vector<1x2048xf32>
    %20 = vector.extract_strided_slice %2 {offsets = [0, 0], sizes = [1, 2048], strides = [1, 1]} : vector<1x3968xf32> to vector<1x2048xf32>
    %cst_9 = arith.constant 9.99999974E-6 : f32
    %21 = vector.broadcast %cst_9 : f32 to vector<1x2048xf32>
    %22 = arith.addf %18, %21 : vector<1x2048xf32>
    %23 = math.rsqrt %22 : vector<1x2048xf32>
    %24 = arith.mulf %19, %23 : vector<1x2048xf32>
    %25 = arith.mulf %11, %24 : vector<1x2048xf32>
    %26 = arith.subf %20, %25 : vector<1x2048xf32>
    %27 = vector.broadcast %24 : vector<1x2048xf32> to vector<8x2048xf32>
    %28 = arith.mulf %7, %27 : vector<8x2048xf32>
    %29 = vector.broadcast %26 : vector<1x2048xf32> to vector<8x2048xf32>
    %30 = arith.addf %28, %29 : vector<8x2048xf32>
    %cst_10 = arith.constant 0.000000e+00 : f32
    %31 = vector.broadcast %cst_10 : f32 to vector<8x2048xf32>
    %32 = arith.maximumf %30, %31 : vector<8x2048xf32>
    %33 = arith.truncf %32 : vector<8x2048xf32> to vector<8x2048xbf16>
    %c0_11 = arith.constant 0 : index
    %c0_12 = arith.constant 0 : index
    %34 = vector.load %arg2[%c0_11, %c0_12] : memref<2048x512xi8, #tpu.memory_space<vmem>>, vector<2048x512xi8>
    %35 = arith.sitofp %34 : vector<2048x512xi8> to vector<2048x512xbf16>
    %cst_13 = arith.constant dense<0.000000e+00> : vector<8x512xf32>
    %36 = tpu.matmul %33, %35, %cst_13 {dimension_numbers = #tpu.dot_dimension_numbers<[1], [0], [0], [1], [0, 0, 1, 1], [], []>} : vector<8x2048xbf16>, vector<2048x512xbf16>, vector<8x512xf32> -> vector<8x512xf32>
    %cst_14 = arith.constant dense<0.000000e+00> : vector<512xf32>
    %37 = vector.multi_reduction <add>, %36, %cst_14 [0] : vector<8x512xf32> to vector<512xf32>
    %38 = vector.shape_cast %37 : vector<512xf32> to vector<1x512xf32>
    %cst_15 = arith.constant 8.000000e+00 : f32
    %39 = vector.broadcast %cst_15 : f32 to vector<1x512xf32>
    %40 = arith.divf %38, %39 : vector<1x512xf32>
    %41 = vector.broadcast %40 : vector<1x512xf32> to vector<8x512xf32>
    %42 = arith.subf %36, %41 : vector<8x512xf32>
    %43 = arith.mulf %42, %42 : vector<8x512xf32>
    %cst_16 = arith.constant dense<0.000000e+00> : vector<512xf32>
    %44 = vector.multi_reduction <add>, %43, %cst_16 [0] : vector<8x512xf32> to vector<512xf32>
    %45 = vector.shape_cast %44 : vector<512xf32> to vector<1x512xf32>
    %cst_17 = arith.constant 8.000000e+00 : f32
    %46 = vector.broadcast %cst_17 : f32 to vector<1x512xf32>
    %47 = arith.divf %45, %46 : vector<1x512xf32>
    %48 = vector.extract_strided_slice %1 {offsets = [0, 2048], sizes = [1, 512], strides = [1, 1]} : vector<1x3968xf32> to vector<1x512xf32>
    %49 = vector.extract_strided_slice %2 {offsets = [0, 2048], sizes = [1, 512], strides = [1, 1]} : vector<1x3968xf32> to vector<1x512xf32>
    %cst_18 = arith.constant 9.99999974E-6 : f32
    %50 = vector.broadcast %cst_18 : f32 to vector<1x512xf32>
    %51 = arith.addf %47, %50 : vector<1x512xf32>
    %52 = math.rsqrt %51 : vector<1x512xf32>
    %53 = arith.mulf %48, %52 : vector<1x512xf32>
    %54 = arith.mulf %40, %53 : vector<1x512xf32>
    %55 = arith.subf %49, %54 : vector<1x512xf32>
    %56 = vector.broadcast %53 : vector<1x512xf32> to vector<8x512xf32>
    %57 = arith.mulf %36, %56 : vector<8x512xf32>
    %58 = vector.broadcast %55 : vector<1x512xf32> to vector<8x512xf32>
    %59 = arith.addf %57, %58 : vector<8x512xf32>
    %cst_19 = arith.constant 0.000000e+00 : f32
    %60 = vector.broadcast %cst_19 : f32 to vector<8x512xf32>
    %61 = arith.maximumf %59, %60 : vector<8x512xf32>
    %62 = arith.truncf %61 : vector<8x512xf32> to vector<8x512xbf16>
    %c0_20 = arith.constant 0 : index
    %c0_21 = arith.constant 0 : index
    %63 = vector.load %arg3[%c0_20, %c0_21] : memref<512x512xi8, #tpu.memory_space<vmem>>, vector<512x512xi8>
    %64 = arith.sitofp %63 : vector<512x512xi8> to vector<512x512xbf16>
    %cst_22 = arith.constant dense<0.000000e+00> : vector<8x512xf32>
    %65 = tpu.matmul %62, %64, %cst_22 {dimension_numbers = #tpu.dot_dimension_numbers<[1], [0], [0], [1], [0, 0, 1, 1], [], []>} : vector<8x512xbf16>, vector<512x512xbf16>, vector<8x512xf32> -> vector<8x512xf32>
    %cst_23 = arith.constant dense<0.000000e+00> : vector<512xf32>
    %66 = vector.multi_reduction <add>, %65, %cst_23 [0] : vector<8x512xf32> to vector<512xf32>
    %67 = vector.shape_cast %66 : vector<512xf32> to vector<1x512xf32>
    %cst_24 = arith.constant 8.000000e+00 : f32
    %68 = vector.broadcast %cst_24 : f32 to vector<1x512xf32>
    %69 = arith.divf %67, %68 : vector<1x512xf32>
    %70 = vector.broadcast %69 : vector<1x512xf32> to vector<8x512xf32>
    %71 = arith.subf %65, %70 : vector<8x512xf32>
    %72 = arith.mulf %71, %71 : vector<8x512xf32>
    %cst_25 = arith.constant dense<0.000000e+00> : vector<512xf32>
    %73 = vector.multi_reduction <add>, %72, %cst_25 [0] : vector<8x512xf32> to vector<512xf32>
    %74 = vector.shape_cast %73 : vector<512xf32> to vector<1x512xf32>
    %cst_26 = arith.constant 8.000000e+00 : f32
    %75 = vector.broadcast %cst_26 : f32 to vector<1x512xf32>
    %76 = arith.divf %74, %75 : vector<1x512xf32>
    %77 = vector.extract_strided_slice %1 {offsets = [0, 2560], sizes = [1, 512], strides = [1, 1]} : vector<1x3968xf32> to vector<1x512xf32>
    %78 = vector.extract_strided_slice %2 {offsets = [0, 2560], sizes = [1, 512], strides = [1, 1]} : vector<1x3968xf32> to vector<1x512xf32>
    %cst_27 = arith.constant 9.99999974E-6 : f32
    %79 = vector.broadcast %cst_27 : f32 to vector<1x512xf32>
    %80 = arith.addf %76, %79 : vector<1x512xf32>
    %81 = math.rsqrt %80 : vector<1x512xf32>
    %82 = arith.mulf %77, %81 : vector<1x512xf32>
    %83 = arith.mulf %69, %82 : vector<1x512xf32>
    %84 = arith.subf %78, %83 : vector<1x512xf32>
    %85 = vector.broadcast %82 : vector<1x512xf32> to vector<8x512xf32>
    %86 = arith.mulf %65, %85 : vector<8x512xf32>
    %87 = vector.broadcast %84 : vector<1x512xf32> to vector<8x512xf32>
    %88 = arith.addf %86, %87 : vector<8x512xf32>
    %cst_28 = arith.constant 0.000000e+00 : f32
    %89 = vector.broadcast %cst_28 : f32 to vector<8x512xf32>
    %90 = arith.maximumf %88, %89 : vector<8x512xf32>
    %91 = arith.truncf %90 : vector<8x512xf32> to vector<8x512xbf16>
    %c0_29 = arith.constant 0 : index
    %c0_30 = arith.constant 0 : index
    %92 = vector.load %arg4[%c0_29, %c0_30] : memref<512x896xi8, #tpu.memory_space<vmem>>, vector<512x896xi8>
    %93 = arith.sitofp %92 : vector<512x896xi8> to vector<512x896xbf16>
    %cst_31 = arith.constant dense<0.000000e+00> : vector<8x896xf32>
    %94 = tpu.matmul %91, %93, %cst_31 {dimension_numbers = #tpu.dot_dimension_numbers<[1], [0], [0], [1], [0, 0, 1, 1], [], []>} : vector<8x512xbf16>, vector<512x896xbf16>, vector<8x896xf32> -> vector<8x896xf32>
    %95 = vector.extract_strided_slice %1 {offsets = [0, 3072], sizes = [1, 896], strides = [1, 1]} : vector<1x3968xf32> to vector<1x896xf32>
    %96 = vector.extract_strided_slice %2 {offsets = [0, 3072], sizes = [1, 896], strides = [1, 1]} : vector<1x3968xf32> to vector<1x896xf32>
    %97 = vector.broadcast %95 : vector<1x896xf32> to vector<8x896xf32>
    %98 = arith.mulf %94, %97 : vector<8x896xf32>
    %99 = vector.broadcast %96 : vector<1x896xf32> to vector<8x896xf32>
    %100 = arith.addf %98, %99 : vector<8x896xf32>
    %101 = vector.extract_strided_slice %100 {offsets = [0, 0], sizes = [8, 784], strides = [1, 1]} : vector<8x896xf32> to vector<8x784xf32>
    %102 = arith.negf %101 : vector<8x784xf32>
    %103 = math.exp %102 : vector<8x784xf32>
    %cst_32 = arith.constant 1.000000e+00 : f32
    %104 = vector.broadcast %cst_32 : f32 to vector<8x784xf32>
    %105 = arith.addf %104, %103 : vector<8x784xf32>
    %106 = arith.divf %104, %105 : vector<8x784xf32>
    %c0_33 = arith.constant 0 : index
    %c0_34 = arith.constant 0 : index
    %107 = vector.load %arg6[%c0_33, %c0_34] : memref<8x784xf32, #tpu.memory_space<vmem>>, vector<8x784xf32>
    tpu.vector_store %arg6[%c0_33, %c0_34], %106 {strides = array<i32>} : memref<8x784xf32, #tpu.memory_space<vmem>>, vector<8x784xf32>,
    return
  }
}

</mosaic_0001>

<llo_original>
// kernel: generator_forward.1
$region0: #{generator_forward.1}
  #allocation0 [shape = 'u32[]', space=smem, size = 0x4, offset = 0x4, fixed_abs, tag = 'smem constant byte address 0x4 - core index']
  #allocation1 [shape = 'u32[144,128]{1,0:T(1,128)}', space=vmem, size = 0x12000, scoped, tag = 'internal scratch']
  %s0 = inlined_call_operand.vmem [shape: f32[8,64], index: 0, kind: input, shape index: {}]
  %s1 = inlined_call_operand.hbm [shape: s8[64,2048], index: 1, kind: input, shape index: {}]
  %s2 = inlined_call_operand.hbm [shape: s8[2048,512], index: 2, kind: input, shape index: {}]
  %s3 = inlined_call_operand.hbm [shape: s8[512,512], index: 3, kind: input, shape index: {}]
  %s4 = inlined_call_operand.hbm [shape: s8[512,896], index: 4, kind: input, shape index: {}]
  %s5 = inlined_call_operand.hbm [shape: f32[2,3968], index: 5, kind: input, shape index: {}]
  %s6 = inlined_call_operand.hbm [shape: f32[8,784], index: 6, kind: output, shape index: {}]
  %s7 = sld [smem:[#allocation0]]
  $region54: #{generator_forward.1} parent=0
    _
  %s9 = ssub.s32 1, %s7
  %s10 = scalar_select 0, %s9, %s7
  $region1: #{generator_forward.1} parent=0
    #allocation2 [shape = 'u8[131072]{0}', space=vmem, size = 0x20000, scoped, tag = 'input window, operand 1, single buffered']
    #allocation3 [shape = 's32[1]{0}', space=sflag, size = 0x4, scoped, tag = 'scoped memory for generator_forward.1']
    #allocation4 [shape = 's32[1]{0}', space=sflag, size = 0x4, scoped, tag = 'scoped memory for generator_forward.1']
    #allocation5 [shape = 'u8[1048576]{0}', space=vmem, size = 0x100000, scoped, tag = 'input window, operand 2, single buffered']
    #allocation6 [shape = 's32[1]{0}', space=sflag, size = 0x4, scoped, tag = 'scoped memory for generator_forward.1']
    #allocation7 [shape = 'u8[262144]{0}', space=vmem, size = 0x40000, scoped, tag = 'input window, operand 3, single buffered']
    #allocation8 [shape = 'u8[458752]{0}', space=vmem, size = 0x70000, scoped, tag = 'input window, operand 4, single buffered']
    #allocation9 [shape = 's32[1]{0}', space=sflag, size = 0x4, scoped, tag = 'scoped memory for generator_forward.1']
    #allocation10 [shape = 'u8[31744]{0}', space=vmem, size = 0x7c00, scoped, tag = 'input window, operand 5, single buffered']
    #allocation11 [shape = 'u8[28672]{0}', space=vmem, size = 0x7000, scoped, tag = 'output window, operand 0, single buffered']
    %11 = vsyncpa [#allocation3], 0
    %12 = vsyncpa [#allocation6], 0
    %13 = vsyncpa [#allocation9], 0
    %14 = vsyncpa [#allocation4], 0
    // Predicated region
    $region2: #{generator_forward.1} parent=1 // pred_check
      _
    $region3: #{generator_forward.1} parent=1 // pred_check_branch
      %16 = sbr.rel (0) target = $region5
    $region4: #{generator_forward.1} parent=1 // pred_region
      _
    $region5: #{generator_forward.1} parent=1 // pred_fallthru
      _
    // Predicated region
    $region6: #{generator_forward.1} parent=1 // pred_check
      _
    $region7: #{generator_forward.1} parent=1 // pred_check_branch
      %18 = sbr.rel (0) target = $region9
    $region8: #{generator_forward.1} parent=1 // pred_region
      %s20 = ssub.s32 4096, 4096
      %21 = vsyncadd [#allocation3], %s20
      %s22 = sshll.u32 [#allocation2], 4
      %s23 = int_to_ptr.vmem [resolvable:$true] %s22
      %28 = dma.hbm_to_vmem [thread:$0]  %s1, 4096, %s23, [#allocation3], 2048, 2048, 128
    $region9: #{generator_forward.1} parent=1 // pred_fallthru
      _
    // Predicated region
    $region10: #{generator_forward.1} parent=1 // pred_check
      _
    $region11: #{generator_forward.1} parent=1 // pred_check_branch
      %30 = sbr.rel (0) target = $region13
    $region12: #{generator_forward.1} parent=1 // pred_region
      %s32 = ssub.s32 32768, 32768
      %33 = vsyncadd [#allocation6], %s32
      %s34 = sshll.u32 [#allocation5], 4
      %s35 = int_to_ptr.vmem [resolvable:$true] %s34
      %40 = dma.hbm_to_vmem [thread:$0]  %s2, 32768, %s35, [#allocation6], 512, 512, 32
    $region13: #{generator_forward.1} parent=1 // pred_fallthru
      _
    // Predicated region
    $region14: #{generator_forward.1} parent=1 // pred_check
      _
    $region15: #{generator_forward.1} parent=1 // pred_check_branch
      %42 = sbr.rel (0) target = $region17
    $region16: #{generator_forward.1} parent=1 // pred_region
      %s44 = ssub.s32 8192, 8192
      %45 = vsyncadd [#allocation6], %s44
      %s46 = sshll.u32 [#allocation7], 4
      %s47 = int_to_ptr.vmem [resolvable:$true] %s46
      %52 = dma.hbm_to_vmem [thread:$0]  %s3, 8192, %s47, [#allocation6], 512, 512, 32
    $region17: #{generator_forward.1} parent=1 // pred_fallthru
      _
    // Predicated region
    $region18: #{generator_forward.1} parent=1 // pred_check
      _
    $region19: #{generator_forward.1} parent=1 // pred_check_branch
      %54 = sbr.rel (0) target = $region21
    $region20: #{generator_forward.1} parent=1 // pred_region
      %s56 = ssub.s32 14336, 14336
      %57 = vsyncadd [#allocation9], %s56
      %s58 = sshll.u32 [#allocation8], 4
      %s59 = int_to_ptr.vmem [resolvable:$true] %s58
      %64 = dma.hbm_to_vmem [thread:$0]  %s4, 14336, %s59, [#allocation9], 896, 896, 56
    $region21: #{generator_forward.1} parent=1 // pred_fallthru
      _
    // Predicated region
    $region22: #{generator_forward.1} parent=1 // pred_check
      _
    $region23: #{generator_forward.1} parent=1 // pred_check_branch
      %66 = sbr.rel (0) target = $region25
    $region24: #{generator_forward.1} parent=1 // pred_region
      %s68 = ssub.s32 992, 992
      %69 = vsyncadd [#allocation9], %s68
      %s71 = sshll.u32 [#allocation10], 4
      %s72 = int_to_ptr.vmem [resolvable:$true] %s71
      %74 = dma.hbm_to_vmem [thread:$0]  %s5, 992, %s72, [#allocation9]
    $region25: #{generator_forward.1} parent=1 // pred_fallthru
      _
    // Predicated region
    $region26: #{generator_forward.1} parent=1 // pred_check
      _
    $region27: #{generator_forward.1} parent=1 // pred_check_branch
      %76 = sbr.rel (0) target = $region29
    $region28: #{generator_forward.1} parent=1 // pred_region
      %77 = dma.done [#allocation3], 4096
    $region29: #{generator_forward.1} parent=1 // pred_fallthru
      _
    // Predicated region
    $region30: #{generator_forward.1} parent=1 // pred_check
      _
    $region31: #{generator_forward.1} parent=1 // pred_check_branch
      %79 = sbr.rel (0) target = $region33
    $region32: #{generator_forward.1} parent=1 // pred_region
      %80 = dma.done [#allocation6], 32768
    $region33: #{generator_forward.1} parent=1 // pred_fallthru
      _
    // Predicated region
    $region34: #{generator_forward.1} parent=1 // pred_check
      _
    $region35: #{generator_forward.1} parent=1 // pred_check_branch
      %82 = sbr.rel (0) target = $region37
    $region36: #{generator_forward.1} parent=1 // pred_region
      %83 = dma.done [#allocation6], 8192
    $region37: #{generator_forward.1} parent=1 // pred_fallthru
      _
    // Predicated region
    $region38: #{generator_forward.1} parent=1 // pred_check
      _
    $region39: #{generator_forward.1} parent=1 // pred_check_branch
      %85 = sbr.rel (0) target = $region41
    $region40: #{generator_forward.1} parent=1 // pred_region
      %86 = dma.done [#allocation9], 14336
    $region41: #{generator_forward.1} parent=1 // pred_fallthru
      _
    // Predicated region
    $region42: #{generator_forward.1} parent=1 // pred_check
      _
    $region43: #{generator_forward.1} parent=1 // pred_check_branch
      %88 = sbr.rel (0) target = $region45
    $region44: #{generator_forward.1} parent=1 // pred_region
      %89 = dma.done [#allocation9], 992
    $region45: #{generator_forward.1} parent=1 // pred_fallthru
      _
    %v91 = vld [vmem:[#allocation10] sm:$0xff]
    %v92 = vld [vmem:[#allocation10 + $0x8] sm:$0xff]
    %v93 = vld [vmem:[#allocation10 + $0x10] sm:$0xff]
    %v94 = vld [vmem:[#allocation10 + $0x18] sm:$0xff]
    %v95 = vld [vmem:[#allocation10 + $0x20] sm:$0xff]
    %v96 = vld [vmem:[#allocation10 + $0x28] sm:$0xff]
    %v97 = vld [vmem:[#allocation10 + $0x30] sm:$0xff]
    %v98 = vld [vmem:[#allocation10 + $0x38] sm:$0x3f]
    %v99 = vld [vmem:[%s0] sm:$0xff]
    %v100 = vpack.c.bf16 %v99, %v99
    %v101 = vld [vmem:[#allocation2] sm:$0xff]
    %v102 = vld [vmem:[#allocation2 + $0x8] sm:$0xff]
    %v103 = vld [vmem:[#allocation2 + $0x10] sm:$0xff]
    %v104 = vld [vmem:[#allocation2 + $0x18] sm:$0xff]
    %v105 = vld [vmem:[#allocation2 + $0x20] sm:$0xff]
    %v106 = vld [vmem:[#allocation2 + $0x28] sm:$0xff]
    %v107 = vld [vmem:[#allocation2 + $0x30] sm:$0xff]
    %v108 = vld [vmem:[#allocation2 + $0x38] sm:$0xff]
    %v109 = vld [vmem:[#allocation2 + $0x40] sm:$0xff]
    %v110 = vld [vmem:[#allocation2 + $0x48] sm:$0xff]
    %v111 = vld [vmem:[#allocation2 + $0x50] sm:$0xff]
    %v112 = vld [vmem:[#allocation2 + $0x58] sm:$0xff]
    %v113 = vld [vmem:[#allocation2 + $0x60] sm:$0xff]
    %v114 = vld [vmem:[#allocation2 + $0x68] sm:$0xff]
    %v115 = vld [vmem:[#allocation2 + $0x70] sm:$0xff]
    %v116 = vld [vmem:[#allocation2 + $0x78] sm:$0xff]
    %v117 = vld [vmem:[#allocation2 + $0x80] sm:$0xff]
    %v118 = vld [vmem:[#allocation2 + $0x88] sm:$0xff]
    %v119 = vld [vmem:[#allocation2 + $0x90] sm:$0xff]
    %v120 = vld [vmem:[#allocation2 + $0x98] sm:$0xff]
    %v121 = vld [vmem:[#allocation2 + $0xa0] sm:$0xff]
    %v122 = vld [vmem:[#allocation2 + $0xa8] sm:$0xff]
    %v123 = vld [vmem:[#allocation2 + $0xb0] sm:$0xff]
    %v124 = vld [vmem:[#allocation2 + $0xb8] sm:$0xff]
    %v125 = vld [vmem:[#allocation2 + $0xc0] sm:$0xff]
    %v126 = vld [vmem:[#allocation2 + $0xc8] sm:$0xff]
    %v127 = vld [vmem:[#allocation2 + $0xd0] sm:$0xff]
    %v128 = vld [vmem:[#allocation2 + $0xd8] sm:$0xff]
    %v129 = vld [vmem:[#allocation2 + $0xe0] sm:$0xff]
    %v130 = vld [vmem:[#allocation2 + $0xe8] sm:$0xff]
    %v131 = vld [vmem:[#allocation2 + $0xf0] sm:$0xff]
    %v132 = vld [vmem:[#allocation2 + $0xf8] sm:$0xff]
    %v133 = vunpack.c.l.s8.bf16 %v101
    %v134 = vunpack.c.l.s8.bf16 %v102
    %v135 = vunpack.c.l.s8.bf16 %v103
    %v136 = vunpack.c.l.s8.bf16 %v104
    %v137 = vunpack.c.l.s8.bf16 %v105
    %v138 = vunpack.c.l.s8.bf16 %v106
    %v139 = vunpack.c.l.s8.bf16 %v107
    %v140 = vunpack.c.l.s8.bf16 %v108
    %v141 = vunpack.c.l.s8.bf16 %v109
    %v142 = vunpack.c.l.s8.bf16 %v110
    %v143 = vunpack.c.l.s8.bf16 %v111
    %v144 = vunpack.c.l.s8.bf16 %v112
    %v145 = vunpack.c.l.s8.bf16 %v113
    %v146 = vunpack.c.l.s8.bf16 %v114
    %v147 = vunpack.c.l.s8.bf16 %v115
    %v148 = vunpack.c.l.s8.bf16 %v116
    %v149 = vunpack.c.h.s8.bf16 %v101
    %v150 = vunpack.c.h.s8.bf16 %v102
    %v151 = vunpack.c.h.s8.bf16 %v103
    %v152 = vunpack.c.h.s8.bf16 %v104
    %v153 = vunpack.c.h.s8.bf16 %v105
    %v154 = vunpack.c.h.s8.bf16 %v106
    %v155 = vunpack.c.h.s8.bf16 %v107
    %v156 = vunpack.c.h.s8.bf16 %v108
    %v157 = vunpack.c.h.s8.bf16 %v109
    %v158 = vunpack.c.h.s8.bf16 %v110
    %v159 = vunpack.c.h.s8.bf16 %v111
    %v160 = vunpack.c.h.s8.bf16 %v112
    %v161 = vunpack.c.h.s8.bf16 %v113
    %v162 = vunpack.c.h.s8.bf16 %v114
    %v163 = vunpack.c.h.s8.bf16 %v115
    %v164 = vunpack.c.h.s8.bf16 %v116
    %v165 = vunpack.c.l.s8.bf16 %v117
    %v166 = vunpack.c.l.s8.bf16 %v118
    %v167 = vunpack.c.l.s8.bf16 %v119
    %v168 = vunpack.c.l.s8.bf16 %v120
    %v169 = vunpack.c.l.s8.bf16 %v121
    %v170 = vunpack.c.l.s8.bf16 %v122
    %v171 = vunpack.c.l.s8.bf16 %v123
    %v172 = vunpack.c.l.s8.bf16 %v124
    %v173 = vunpack.c.l.s8.bf16 %v125
    %v174 = vunpack.c.l.s8.bf16 %v126
    %v175 = vunpack.c.l.s8.bf16 %v127
    %v176 = vunpack.c.l.s8.bf16 %v128
    %v177 = vunpack.c.l.s8.bf16 %v129
    %v178 = vunpack.c.l.s8.bf16 %v130
    %v179 = vunpack.c.l.s8.bf16 %v131
    %v180 = vunpack.c.l.s8.bf16 %v132
    %v181 = vunpack.c.h.s8.bf16 %v117
    %v182 = vunpack.c.h.s8.bf16 %v118
    %v183 = vunpack.c.h.s8.bf16 %v119
    %v184 = vunpack.c.h.s8.bf16 %v120
    %v185 = vunpack.c.h.s8.bf16 %v121
    %v186 = vunpack.c.h.s8.bf16 %v122
    %v187 = vunpack.c.h.s8.bf16 %v123
    %v188 = vunpack.c.h.s8.bf16 %v124
    %v189 = vunpack.c.h.s8.bf16 %v125
    %v190 = vunpack.c.h.s8.bf16 %v126
    %v191 = vunpack.c.h.s8.bf16 %v127
    %v192 = vunpack.c.h.s8.bf16 %v128
    %v193 = vunpack.c.h.s8.bf16 %v129
    %v194 = vunpack.c.h.s8.bf16 %v130
    %v195 = vunpack.c.h.s8.bf16 %v131
    %v196 = vunpack.c.h.s8.bf16 %v132
    %vm197 = vcmask 523264
    %v199 = vsel %vm197, %v100, 0
    %201 = vmatprep.subr.bf16.mxu0 0
    %202 = vmatpush1.bf16.msra.mxu0 0
    %203 = vmatprep.subr.bf16.mxu0 0
    %204 = vmatpush1.bf16.msra.mxu0 0
    %205 = vmatprep.subr.bf16.mxu0 0
    %206 = vmatpush1.bf16.msra.mxu0 0
    %207 = vmatprep.subr.bf16.mxu0 0
    %208 = vmatpush1.bf16.msra.mxu0 0
    %209 = vmatprep.subr.bf16.mxu0 %v182
    %210 = vmatpush1.bf16.msra.mxu0 %v181
    %211 = vmatprep.subr.bf16.mxu0 %v166
    %212 = vmatpush1.bf16.msra.mxu0 %v165
    %213 = vmatprep.subr.bf16.mxu0 %v150
    %214 = vmatpush1.bf16.msra.mxu0 %v149
    %215 = vmatprep.subr.bf16.mxu0 %v134
    %216 = vmatpush1.bf16.msra.mxu0 %v133
    %217 = vmatprep.subr.bf16.mxu0 0
    %218 = vmatpush2.bf16.msra.mxu0 0
    %219 = vmatprep.subr.bf16.mxu0 0
    %220 = vmatpush2.bf16.msra.mxu0 0
    %221 = vmatprep.subr.bf16.mxu0 0
    %222 = vmatpush2.bf16.msra.mxu0 0
    %223 = vmatprep.subr.bf16.mxu0 0
    %224 = vmatpush2.bf16.msra.mxu0 0
    %225 = vmatprep.subr.bf16.mxu0 0
    %226 = vmatpush2.bf16.msra.mxu0 0
    %227 = vmatprep.subr.bf16.mxu0 0
    %228 = vmatpush2.bf16.msra.mxu0 0
    %229 = vmatprep.subr.bf16.mxu0 0
    %230 = vmatpush2.bf16.msra.mxu0 0
    %231 = vmatprep.subr.bf16.mxu0 0
    %232 = vmatpush2.bf16.msra.mxu0 0
    %233 = vmatprep.mubr.bf16.mxu0 0
    %234 = vmatmul.mubr.bf16.gmra.mxu0 %v199
    %v235 = vpop.f32.mrf.mxu0
    %v236 = vadd.f32 0.0, %v235
    %v237 = vpop.f32.mrf.mxu0
    %v238 = vadd.f32 0.0, %v237
    %v239 = vpop.f32.mrf.mxu0
    %v240 = vpop.f32.mrf.mxu0
    %241 = vdwg.mxu0
    %242 = vmatprep.subr.bf16.mxu0 0
    %243 = vmatpush1.bf16.msra.mxu0 0
    %244 = vmatprep.subr.bf16.mxu0 0
    %245 = vmatpush1.bf16.msra.mxu0 0
    %246 = vmatprep.subr.bf16.mxu0 0
    %247 = vmatpush1.bf16.msra.mxu0 0
    %248 = vmatprep.subr.bf16.mxu0 0
    %249 = vmatpush1.bf16.msra.mxu0 0
    %250 = vmatprep.subr.bf16.mxu0 %v184
    %251 = vmatpush1.bf16.msra.mxu0 %v183
    %252 = vmatprep.subr.bf16.mxu0 %v168
    %253 = vmatpush1.bf16.msra.mxu0 %v167
    %254 = vmatprep.subr.bf16.mxu0 %v152
    %255 = vmatpush1.bf16.msra.mxu0 %v151
    %256 = vmatprep.subr.bf16.mxu0 %v136
    %257 = vmatpush1.bf16.msra.mxu0 %v135
    %258 = vmatprep.subr.bf16.mxu0 0
    %259 = vmatpush2.bf16.msra.mxu0 0
    %260 = vmatprep.subr.bf16.mxu0 0
    %261 = vmatpush2.bf16.msra.mxu0 0
    %262 = vmatprep.subr.bf16.mxu0 0
    %263 = vmatpush2.bf16.msra.mxu0 0
    %264 = vmatprep.subr.bf16.mxu0 0
    %265 = vmatpush2.bf16.msra.mxu0 0
    %266 = vmatprep.subr.bf16.mxu0 0
    %267 = vmatpush2.bf16.msra.mxu0 0
    %268 = vmatprep.subr.bf16.mxu0 0
    %269 = vmatpush2.bf16.msra.mxu0 0
    %270 = vmatprep.subr.bf16.mxu0 0
    %271 = vmatpush2.bf16.msra.mxu0 0
    %272 = vmatprep.subr.bf16.mxu0 0
    %273 = vmatpush2.bf16.msra.mxu0 0
    %274 = vmatprep.mubr.bf16.mxu0 0
    %275 = vmatmul.mubr.bf16.gmra.mxu0 %v199
    %v276 = vpop.f32.mrf.mxu0
    %v277 = vadd.f32 0.0, %v276
    %v278 = vpop.f32.mrf.mxu0
    %v279 = vadd.f32 0.0, %v278
    %v280 = vpop.f32.mrf.mxu0
    %v281 = vpop.f32.mrf.mxu0
    %282 = vdwg.mxu0
    %283 = vmatprep.subr.bf16.mxu0 0
    %284 = vmatpush1.bf16.msra.mxu0 0
    %285 = vmatprep.subr.bf16.mxu0 0
    %286 = vmatpush1.bf16.msra.mxu0 0
    %287 = vmatprep.subr.bf16.mxu0 0
    %288 = vmatpush1.bf16.msra.mxu0 0
    %289 = vmatprep.subr.bf16.mxu0 0
    %290 = vmatpush1.bf16.msra.mxu0 0
    %291 = vmatprep.subr.bf16.mxu0 %v186
    %292 = vmatpush1.bf16.msra.mxu0 %v185
    %293 = vmatprep.subr.bf16.mxu0 %v170
    %294 = vmatpush1.bf16.msra.mxu0 %v169
    %295 = vmatprep.subr.bf16.mxu0 %v154
    %296 = vmatpush1.bf16.msra.mxu0 %v153
    %297 = vmatprep.subr.bf16.mxu0 %v138
    %298 = vmatpush1.bf16.msra.mxu0 %v137
    %299 = vmatprep.subr.bf16.mxu0 0
    %300 = vmatpush2.bf16.msra.mxu0 0
    %301 = vmatprep.subr.bf16.mxu0 0
    %302 = vmatpush2.bf16.msra.mxu0 0
    %303 = vmatprep.subr.bf16.mxu0 0
    %304 = vmatpush2.bf16.msra.mxu0 0
    %305 = vmatprep.subr.bf16.mxu0 0
    %306 = vmatpush2.bf16.msra.mxu0 0
    %307 = vmatprep.subr.bf16.mxu0 0
    %308 = vmatpush2.bf16.msra.mxu0 0
    %309 = vmatprep.subr.bf16.mxu0 0
    %310 = vmatpush2.bf16.msra.mxu0 0
    %311 = vmatprep.subr.bf16.mxu0 0
    %312 = vmatpush2.bf16.msra.mxu0 0
    %313 = vmatprep.subr.bf16.mxu0 0
    %314 = vmatpush2.bf16.msra.mxu0 0
    %315 = vmatprep.mubr.bf16.mxu0 0
    %316 = vmatmul.mubr.bf16.gmra.mxu0 %v199
    %v317 = vpop.f32.mrf.mxu0
    %v318 = vadd.f32 0.0, %v317
    %v319 = vpop.f32.mrf.mxu0
    %v320 = vadd.f32 0.0, %v319
    %v321 = vpop.f32.mrf.mxu0
    %v322 = vpop.f32.mrf.mxu0
    %323 = vdwg.mxu0
    %324 = vmatprep.subr.bf16.mxu0 0
    %325 = vmatpush1.bf16.msra.mxu0 0
    %326 = vmatprep.subr.bf16.mxu0 0
    %327 = vmatpush1.bf16.msra.mxu0 0
    %328 = vmatprep.subr.bf16.mxu0 0
    %329 = vmatpush1.bf16.msra.mxu0 0
    %330 = vmatprep.subr.bf16.mxu0 0
    %331 = vmatpush1.bf16.msra.mxu0 0
    %332 = vmatprep.subr.bf16.mxu0 %v188
    %333 = vmatpush1.bf16.msra.mxu0 %v187
    %334 = vmatprep.subr.bf16.mxu0 %v172
    %335 = vmatpush1.bf16.msra.mxu0 %v171
    %336 = vmatprep.subr.bf16.mxu0 %v156
    %337 = vmatpush1.bf16.msra.mxu0 %v155
    %338 = vmatprep.subr.bf16.mxu0 %v140
    %339 = vmatpush1.bf16.msra.mxu0 %v139
    %340 = vmatprep.subr.bf16.mxu0 0
    %341 = vmatpush2.bf16.msra.mxu0 0
    %342 = vmatprep.subr.bf16.mxu0 0
    %343 = vmatpush2.bf16.msra.mxu0 0
    %344 = vmatprep.subr.bf16.mxu0 0
    %345 = vmatpush2.bf16.msra.mxu0 0
    %346 = vmatprep.subr.bf16.mxu0 0
    %347 = vmatpush2.bf16.msra.mxu0 0
    %348 = vmatprep.subr.bf16.mxu0 0
    %349 = vmatpush2.bf16.msra.mxu0 0
    %350 = vmatprep.subr.bf16.mxu0 0
    %351 = vmatpush2.bf16.msra.mxu0 0
    %352 = vmatprep.subr.bf16.mxu0 0
    %353 = vmatpush2.bf16.msra.mxu0 0
    %354 = vmatprep.subr.bf16.mxu0 0
    %355 = vmatpush2.bf16.msra.mxu0 0
    %356 = vmatprep.mubr.bf16.mxu0 0
    %357 = vmatmul.mubr.bf16.gmra.mxu0 %v199
    %v358 = vpop.f32.mrf.mxu0
    %v359 = vadd.f32 0.0, %v358
    %v360 = vpop.f32.mrf.mxu0
    %v361 = vadd.f32 0.0, %v360
    %v362 = vpop.f32.mrf.mxu0
    %v363 = vpop.f32.mrf.mxu0
    %364 = vdwg.mxu0
    %365 = vmatprep.subr.bf16.mxu0 0
    %366 = vmatpush1.bf16.msra.mxu0 0
    %367 = vmatprep.subr.bf16.mxu0 0
    %368 = vmatpush1.bf16.msra.mxu0 0
    %369 = vmatprep.subr.bf16.mxu0 0
    %370 = vmatpush1.bf16.msra.mxu0 0
    %371 = vmatprep.subr.bf16.mxu0 0
    %372 = vmatpush1.bf16.msra.mxu0 0
    %373 = vmatprep.subr.bf16.mxu0 %v190
    %374 = vmatpush1.bf16.msra.mxu0 %v189
    %375 = vmatprep.subr.bf16.mxu0 %v174
    %376 = vmatpush1.bf16.msra.mxu0 %v173
    %377 = vmatprep.subr.bf16.mxu0 %v158
    %378 = vmatpush1.bf16.msra.mxu0 %v157
    %379 = vmatprep.subr.bf16.mxu0 %v142
    %380 = vmatpush1.bf16.msra.mxu0 %v141
    %381 = vmatprep.subr.bf16.mxu0 0
    %382 = vmatpush2.bf16.msra.mxu0 0
    %383 = vmatprep.subr.bf16.mxu0 0
    %384 = vmatpush2.bf16.msra.mxu0 0
    %385 = vmatprep.subr.bf16.mxu0 0
    %386 = vmatpush2.bf16.msra.mxu0 0
    %387 = vmatprep.subr.bf16.mxu0 0
    %388 = vmatpush2.bf16.msra.mxu0 0
    %389 = vmatprep.subr.bf16.mxu0 0
    %390 = vmatpush2.bf16.msra.mxu0 0
    %391 = vmatprep.subr.bf16.mxu0 0
    %392 = vmatpush2.bf16.msra.mxu0 0
    %393 = vmatprep.subr.bf16.mxu0 0
    %394 = vmatpush2.bf16.msra.mxu0 0
    %395 = vmatprep.subr.bf16.mxu0 0
    %396 = vmatpush2.bf16.msra.mxu0 0
    %397 = vmatprep.mubr.bf16.mxu0 0
    %398 = vmatmul.mubr.bf16.gmra.mxu0 %v199
    %v399 = vpop.f32.mrf.mxu0
    %v400 = vadd.f32 0.0, %v399
    %v401 = vpop.f32.mrf.mxu0
    %v402 = vadd.f32 0.0, %v401
    %v403 = vpop.f32.mrf.mxu0
    %v404 = vpop.f32.mrf.mxu0
    %405 = vdwg.mxu0
    %406 = vmatprep.subr.bf16.mxu0 0
    %407 = vmatpush1.bf16.msra.mxu0 0
    %408 = vmatprep.subr.bf16.mxu0 0
    %409 = vmatpush1.bf16.msra.mxu0 0
    %410 = vmatprep.subr.bf16.mxu0 0
    %411 = vmatpush1.bf16.msra.mxu0 0
    %412 = vmatprep.subr.bf16.mxu0 0
    %413 = vmatpush1.bf16.msra.mxu0 0
    %414 = vmatprep.subr.bf16.mxu0 %v192
    %415 = vmatpush1.bf16.msra.mxu0 %v191
    %416 = vmatprep.subr.bf16.mxu0 %v176
    %417 = vmatpush1.bf16.msra.mxu0 %v175
    %418 = vmatprep.subr.bf16.mxu0 %v160
    %419 = vmatpush1.bf16.msra.mxu0 %v159
    %420 = vmatprep.subr.bf16.mxu0 %v144
    %421 = vmatpush1.bf16.msra.mxu0 %v143
    %422 = vmatprep.subr.bf16.mxu0 0
    %423 = vmatpush2.bf16.msra.mxu0 0
    %424 = vmatprep.subr.bf16.mxu0 0
    %425 = vmatpush2.bf16.msra.mxu0 0
    %426 = vmatprep.subr.bf16.mxu0 0
    %427 = vmatpush2.bf16.msra.mxu0 0
    %428 = vmatprep.subr.bf16.mxu0 0
    %429 = vmatpush2.bf16.msra.mxu0 0
    %430 = vmatprep.subr.bf16.mxu0 0
    %431 = vmatpush2.bf16.msra.mxu0 0
    %432 = vmatprep.subr.bf16.mxu0 0
    %433 = vmatpush2.bf16.msra.mxu0 0
    %434 = vmatprep.subr.bf16.mxu0 0
    %435 = vmatpush2.bf16.msra.mxu0 0
    %436 = vmatprep.subr.bf16.mxu0 0
    %437 = vmatpush2.bf16.msra.mxu0 0
    %438 = vmatprep.mubr.bf16.mxu0 0
    %439 = vmatmul.mubr.bf16.gmra.mxu0 %v199
    %v440 = vpop.f32.mrf.mxu0
    %v441 = vadd.f32 0.0, %v440
    %v442 = vpop.f32.mrf.mxu0
    %v443 = vadd.f32 0.0, %v442
    %v444 = vpop.f32.mrf.mxu0
    %v445 = vpop.f32.mrf.mxu0
    %446 = vdwg.mxu0
    %447 = vmatprep.subr.bf16.mxu0 0
    %448 = vmatpush1.bf16.msra.mxu0 0
    %449 = vmatprep.subr.bf16.mxu0 0
    %450 = vmatpush1.bf16.msra.mxu0 0
    %451 = vmatprep.subr.bf16.mxu0 0
    %452 = vmatpush1.bf16.msra.mxu0 0
    %453 = vmatprep.subr.bf16.mxu0 0
    %454 = vmatpush1.bf16.msra.mxu0 0
    %455 = vmatprep.subr.bf16.mxu0 %v194
    %456 = vmatpush1.bf16.msra.mxu0 %v193
    %457 = vmatprep.subr.bf16.mxu0 %v178
    %458 = vmatpush1.bf16.msra.mxu0 %v177
    %459 = vmatprep.subr.bf16.mxu0 %v162
    %460 = vmatpush1.bf16.msra.mxu0 %v161
    %461 = vmatprep.subr.bf16.mxu0 %v146
    %462 = vmatpush1.bf16.msra.mxu0 %v145
    %463 = vmatprep.subr.bf16.mxu0 0
    %464 = vmatpush2.bf16.msra.mxu0 0
    %465 = vmatprep.subr.bf16.mxu0 0
    %466 = vmatpush2.bf16.msra.mxu0 0
    %467 = vmatprep.subr.bf16.mxu0 0
    %468 = vmatpush2.bf16.msra.mxu0 0
    %469 = vmatprep.subr.bf16.mxu0 0
    %470 = vmatpush2.bf16.msra.mxu0 0
    %471 = vmatprep.subr.bf16.mxu0 0
    %472 = vmatpush2.bf16.msra.mxu0 0
    %473 = vmatprep.subr.bf16.mxu0 0
    %474 = vmatpush2.bf16.msra.mxu0 0
    %475 = vmatprep.subr.bf16.mxu0 0
    %476 = vmatpush2.bf16.msra.mxu0 0
    %477 = vmatprep.subr.bf16.mxu0 0
    %478 = vmatpush2.bf16.msra.mxu0 0
    %479 = vmatprep.mubr.bf16.mxu0 0
    %480 = vmatmul.mubr.bf16.gmra.mxu0 %v199
    %v481 = vpop.f32.mrf.mxu0
    %v482 = vadd.f32 0.0, %v481
    %v483 = vpop.f32.mrf.mxu0
    %v484 = vadd.f32 0.0, %v483
    %v485 = vpop.f32.mrf.mxu0
    %v486 = vpop.f32.mrf.mxu0
    %487 = vdwg.mxu0
    %488 = vmatprep.subr.bf16.mxu0 0
    %489 = vmatpush1.bf16.msra.mxu0 0
    %490 = vmatprep.subr.bf16.mxu0 0
    %491 = vmatpush1.bf16.msra.mxu0 0
    %492 = vmatprep.subr.bf16.mxu0 0
    %493 = vmatpush1.bf16.msra.mxu0 0
    %494 = vmatprep.subr.bf16.mxu0 0
    %495 = vmatpush1.bf16.msra.mxu0 0
    %496 = vmatprep.subr.bf16.mxu0 %v196
    %497 = vmatpush1.bf16.msra.mxu0 %v195
    %498 = vmatprep.subr.bf16.mxu0 %v180
    %499 = vmatpush1.bf16.msra.mxu0 %v179
    %500 = vmatprep.subr.bf16.mxu0 %v164
    %501 = vmatpush1.bf16.msra.mxu0 %v163
    %502 = vmatprep.subr.bf16.mxu0 %v148
    %503 = vmatpush1.bf16.msra.mxu0 %v147
    %504 = vmatprep.subr.bf16.mxu0 0
    %505 = vmatpush2.bf16.msra.mxu0 0
    %506 = vmatprep.subr.bf16.mxu0 0
    %507 = vmatpush2.bf16.msra.mxu0 0
    %508 = vmatprep.subr.bf16.mxu0 0
    %509 = vmatpush2.bf16.msra.mxu0 0
    %510 = vmatprep.subr.bf16.mxu0 0
    %511 = vmatpush2.bf16.msra.mxu0 0
    %512 = vmatprep.subr.bf16.mxu0 0
    %513 = vmatpush2.bf16.msra.mxu0 0
    %514 = vmatprep.subr.bf16.mxu0 0
    %515 = vmatpush2.bf16.msra.mxu0 0
    %516 = vmatprep.subr.bf16.mxu0 0
    %517 = vmatpush2.bf16.msra.mxu0 0
    %518 = vmatprep.subr.bf16.mxu0 0
    %519 = vmatpush2.bf16.msra.mxu0 0
    %520 = vmatprep.mubr.bf16.mxu0 0
    %521 = vmatmul.mubr.bf16.gmra.mxu0 %v199
    %v522 = vpop.f32.mrf.mxu0
    %v523 = vadd.f32 0.0, %v522
    %v524 = vpop.f32.mrf.mxu0
    %v525 = vadd.f32 0.0, %v524
    %v526 = vpop.f32.mrf.mxu0
    %v527 = vpop.f32.mrf.mxu0
    %528 = vdwg.mxu0
    %v529 = vrot.slane %v236, 4
    %v530 = vadd.f32 %v236, %v529
    %v531 = vrot.slane %v530, 2
    %v532 = vadd.f32 %v530, %v531
    %v533 = vrot.slane %v532, 1
    %v534 = vadd.f32 %v532, %v533
    %v535 = vrot.slane %v238, 4
    %v536 = vadd.f32 %v238, %v535
    %v537 = vrot.slane %v536, 2
    %v538 = vadd.f32 %v536, %v537
    %v539 = vrot.slane %v538, 1
    %v540 = vadd.f32 %v538, %v539
    %v541 = vrot.slane %v277, 4
    %v542 = vadd.f32 %v277, %v541
    %v543 = vrot.slane %v542, 2
    %v544 = vadd.f32 %v542, %v543
    %v545 = vrot.slane %v544, 1
    %v546 = vadd.f32 %v544, %v545
    %v547 = vrot.slane %v279, 4
    %v548 = vadd.f32 %v279, %v547
    %v549 = vrot.slane %v548, 2
    %v550 = vadd.f32 %v548, %v549
    %v551 = vrot.slane %v550, 1
    %v552 = vadd.f32 %v550, %v551
    %v553 = vrot.slane %v318, 4
    %v554 = vadd.f32 %v318, %v553
    %v555 = vrot.slane %v554, 2
    %v556 = vadd.f32 %v554, %v555
    %v557 = vrot.slane %v556, 1
    %v558 = vadd.f32 %v556, %v557
    %v559 = vrot.slane %v320, 4
    %v560 = vadd.f32 %v320, %v559
    %v561 = vrot.slane %v560, 2
    %v562 = vadd.f32 %v560, %v561
    %v563 = vrot.slane %v562, 1
    %v564 = vadd.f32 %v562, %v563
    %v565 = vrot.slane %v359, 4
    %v566 = vadd.f32 %v359, %v565
    %v567 = vrot.slane %v566, 2
    %v568 = vadd.f32 %v566, %v567
    %v569 = vrot.slane %v568, 1
    %v570 = vadd.f32 %v568, %v569
    %v571 = vrot.slane %v361, 4
    %v572 = vadd.f32 %v361, %v571
    %v573 = vrot.slane %v572, 2
    %v574 = vadd.f32 %v572, %v573
    %v575 = vrot.slane %v574, 1
    %v576 = vadd.f32 %v574, %v575
    %v577 = vrot.slane %v400, 4
    %v578 = vadd.f32 %v400, %v577
    %v579 = vrot.slane %v578, 2
    %v580 = vadd.f32 %v578, %v579
    %v581 = vrot.slane %v580, 1
    %v582 = vadd.f32 %v580, %v581
    %v583 = vrot.slane %v402, 4
    %v584 = vadd.f32 %v402, %v583
    %v585 = vrot.slane %v584, 2
    %v586 = vadd.f32 %v584, %v585
    %v587 = vrot.slane %v586, 1
    %v588 = vadd.f32 %v586, %v587
    %v589 = vrot.slane %v441, 4
    %v590 = vadd.f32 %v441, %v589
    %v591 = vrot.slane %v590, 2
    %v592 = vadd.f32 %v590, %v591
    %v593 = vrot.slane %v592, 1
    %v594 = vadd.f32 %v592, %v593
    %v595 = vrot.slane %v443, 4
    %v596 = vadd.f32 %v443, %v595
    %v597 = vrot.slane %v596, 2
    %v598 = vadd.f32 %v596, %v597
    %v599 = vrot.slane %v598, 1
    %v600 = vadd.f32 %v598, %v599
    %v601 = vrot.slane %v482, 4
    %v602 = vadd.f32 %v482, %v601
    %v603 = vrot.slane %v602, 2
    %v604 = vadd.f32 %v602, %v603
    %v605 = vrot.slane %v604, 1
    %v606 = vadd.f32 %v604, %v605
    %v607 = vrot.slane %v484, 4
    %v608 = vadd.f32 %v484, %v607
    %v609 = vrot.slane %v608, 2
    %v610 = vadd.f32 %v608, %v609
    %v611 = vrot.slane %v610, 1
    %v612 = vadd.f32 %v610, %v611
    %v613 = vrot.slane %v523, 4
    %v614 = vadd.f32 %v523, %v613
    %v615 = vrot.slane %v614, 2
    %v616 = vadd.f32 %v614, %v615
    %v617 = vrot.slane %v616, 1
    %v618 = vadd.f32 %v616, %v617
    %v619 = vrot.slane %v525, 4
    %v620 = vadd.f32 %v525, %v619
    %v621 = vrot.slane %v620, 2
    %v622 = vadd.f32 %v620, %v621
    %v623 = vrot.slane %v622, 1
    %v624 = vadd.f32 %v622, %v623
    %v625 = vrcp.pop 8.0
    %v626 = vmul.f32 %v534, %v625
    %v627 = vmul.f32 %v540, %v625
    %v628 = vmul.f32 %v546, %v625
    %v629 = vmul.f32 %v552, %v625
    %v630 = vmul.f32 %v558, %v625
    %v631 = vmul.f32 %v564, %v625
    %v632 = vmul.f32 %v570, %v625
    %v633 = vmul.f32 %v576, %v625
    %v634 = vmul.f32 %v582, %v625
    %v635 = vmul.f32 %v588, %v625
    %v636 = vmul.f32 %v594, %v625
    %v637 = vmul.f32 %v600, %v625
    %v638 = vmul.f32 %v606, %v625
    %v639 = vmul.f32 %v612, %v625
    %v640 = vmul.f32 %v618, %v625
    %v641 = vmul.f32 %v624, %v625
    %v642 = vsub.f32 %v236, %v626
    %v643 = vsub.f32 %v238, %v627
    %v644 = vsub.f32 %v277, %v628
    %v645 = vsub.f32 %v279, %v629
    %v646 = vsub.f32 %v318, %v630
    %v647 = vsub.f32 %v320, %v631
    %v648 = vsub.f32 %v359, %v632
    %v649 = vsub.f32 %v361, %v633
    %v650 = vsub.f32 %v400, %v634
    %v651 = vsub.f32 %v402, %v635
    %v652 = vsub.f32 %v441, %v636
    %v653 = vsub.f32 %v443, %v637
    %v654 = vsub.f32 %v482, %v638
    %v655 = vsub.f32 %v484, %v639
    %v656 = vsub.f32 %v523, %v640
    %v657 = vsub.f32 %v525, %v641
    %v658 = vmul.f32 %v642, %v642
    %v659 = vmul.f32 %v643, %v643
    %v660 = vmul.f32 %v644, %v644
    %v661 = vmul.f32 %v645, %v645
    %v662 = vmul.f32 %v646, %v646
    %v663 = vmul.f32 %v647, %v647
    %v664 = vmul.f32 %v648, %v648
    %v665 = vmul.f32 %v649, %v649
    %v666 = vmul.f32 %v650, %v650
    %v667 = vmul.f32 %v651, %v651
    %v668 = vmul.f32 %v652, %v652
    %v669 = vmul.f32 %v653, %v653
    %v670 = vmul.f32 %v654, %v654
    %v671 = vmul.f32 %v655, %v655
    %v672 = vmul.f32 %v656, %v656
    %v673 = vmul.f32 %v657, %v657
    %v674 = vrot.slane %v658, 4
    %v675 = vadd.f32 %v658, %v674
    %v676 = vrot.slane %v675, 2
    %v677 = vadd.f32 %v675, %v676
    %v678 = vrot.slane %v677, 1
    %v679 = vadd.f32 %v677, %v678
    %v680 = vrot.slane %v659, 4
    %v681 = vadd.f32 %v659, %v680
    %v682 = vrot.slane %v681, 2
    %v683 = vadd.f32 %v681, %v682
    %v684 = vrot.slane %v683, 1
    %v685 = vadd.f32 %v683, %v684
    %v686 = vrot.slane %v660, 4
    %v687 = vadd.f32 %v660, %v686
    %v688 = vrot.slane %v687, 2
    %v689 = vadd.f32 %v687, %v688
    %v690 = vrot.slane %v689, 1
    %v691 = vadd.f32 %v689, %v690
    %v692 = vrot.slane %v661, 4
    %v693 = vadd.f32 %v661, %v692
    %v694 = vrot.slane %v693, 2
    %v695 = vadd.f32 %v693, %v694
    %v696 = vrot.slane %v695, 1
    %v697 = vadd.f32 %v695, %v696
    %v698 = vrot.slane %v662, 4
    %v699 = vadd.f32 %v662, %v698
    %v700 = vrot.slane %v699, 2
    %v701 = vadd.f32 %v699, %v700
    %v702 = vrot.slane %v701, 1
    %v703 = vadd.f32 %v701, %v702
    %v704 = vrot.slane %v663, 4
    %v705 = vadd.f32 %v663, %v704
    %v706 = vrot.slane %v705, 2
    %v707 = vadd.f32 %v705, %v706
    %v708 = vrot.slane %v707, 1
    %v709 = vadd.f32 %v707, %v708
    %v710 = vrot.slane %v664, 4
    %v711 = vadd.f32 %v664, %v710
    %v712 = vrot.slane %v711, 2
    %v713 = vadd.f32 %v711, %v712
    %v714 = vrot.slane %v713, 1
    %v715 = vadd.f32 %v713, %v714
    %v716 = vrot.slane %v665, 4
    %v717 = vadd.f32 %v665, %v716
    %v718 = vrot.slane %v717, 2
    %v719 = vadd.f32 %v717, %v718
    %v720 = vrot.slane %v719, 1
    %v721 = vadd.f32 %v719, %v720
    %v722 = vrot.slane %v666, 4
    %v723 = vadd.f32 %v666, %v722
    %v724 = vrot.slane %v723, 2
    %v725 = vadd.f32 %v723, %v724
    %v726 = vrot.slane %v725, 1
    %v727 = vadd.f32 %v725, %v726
    %v728 = vrot.slane %v667, 4
    %v729 = vadd.f32 %v667, %v728
    %v730 = vrot.slane %v729, 2
    %v731 = vadd.f32 %v729, %v730
    %v732 = vrot.slane %v731, 1
    %v733 = vadd.f32 %v731, %v732
    %v734 = vrot.slane %v668, 4
    %v735 = vadd.f32 %v668, %v734
    %v736 = vrot.slane %v735, 2
    %v737 = vadd.f32 %v735, %v736
    %v738 = vrot.slane %v737, 1
    %v739 = vadd.f32 %v737, %v738
    %v740 = vrot.slane %v669, 4
    %v741 = vadd.f32 %v669, %v740
    %v742 = vrot.slane %v741, 2
    %v743 = vadd.f32 %v741, %v742
    %v744 = vrot.slane %v743, 1
    %v745 = vadd.f32 %v743, %v744
    %v746 = vrot.slane %v670, 4
    %v747 = vadd.f32 %v670, %v746
    %v748 = vrot.slane %v747, 2
    %v749 = vadd.f32 %v747, %v748
    %v750 = vrot.slane %v749, 1
    %v751 = vadd.f32 %v749, %v750
    %v752 = vrot.slane %v671, 4
    %v753 = vadd.f32 %v671, %v752
    %v754 = vrot.slane %v753, 2
    %v755 = vadd.f32 %v753, %v754
    %v756 = vrot.slane %v755, 1
    %v757 = vadd.f32 %v755, %v756
    %v758 = vrot.slane %v672, 4
    %v759 = vadd.f32 %v672, %v758
    %v760 = vrot.slane %v759, 2
    %v761 = vadd.f32 %v759, %v760
    %v762 = vrot.slane %v761, 1
    %v763 = vadd.f32 %v761, %v762
    %v764 = vrot.slane %v673, 4
    %v765 = vadd.f32 %v673, %v764
    %v766 = vrot.slane %v765, 2
    %v767 = vadd.f32 %v765, %v766
    %v768 = vrot.slane %v767, 1
    %v769 = vadd.f32 %v767, %v768
    %v770 = vmul.f32 %v679, %v625
    %v771 = vmul.f32 %v685, %v625
    %v772 = vmul.f32 %v691, %v625
    %v773 = vmul.f32 %v697, %v625
    %v774 = vmul.f32 %v703, %v625
    %v775 = vmul.f32 %v709, %v625
    %v776 = vmul.f32 %v715, %v625
    %v777 = vmul.f32 %v721, %v625
    %v778 = vmul.f32 %v727, %v625
    %v779 = vmul.f32 %v733, %v625
    %v780 = vmul.f32 %v739, %v625
    %v781 = vmul.f32 %v745, %v625
    %v782 = vmul.f32 %v751, %v625
    %v783 = vmul.f32 %v757, %v625
    %v784 = vmul.f32 %v763, %v625
    %v785 = vmul.f32 %v769, %v625
    %v786 = vadd.f32 %v770, 1e-05
    %v787 = vadd.f32 %v771, 1e-05
    %v788 = vadd.f32 %v772, 1e-05
    %v789 = vadd.f32 %v773, 1e-05
    %v790 = vadd.f32 %v774, 1e-05
    %v791 = vadd.f32 %v775, 1e-05
    %v792 = vadd.f32 %v776, 1e-05
    %v793 = vadd.f32 %v777, 1e-05
    %v794 = vadd.f32 %v778, 1e-05
    %v795 = vadd.f32 %v779, 1e-05
    %v796 = vadd.f32 %v780, 1e-05
    %v797 = vadd.f32 %v781, 1e-05
    %v798 = vadd.f32 %v782, 1e-05
    %v799 = vadd.f32 %v783, 1e-05
    %v800 = vadd.f32 %v784, 1e-05
    %v801 = vadd.f32 %v785, 1e-05
    %v802 = vrsqrt.pop %v786
    %v803 = vrsqrt.pop %v787
    %v804 = vrsqrt.pop %v788
    %v805 = vrsqrt.pop %v789
    %v806 = vrsqrt.pop %v790
    %v807 = vrsqrt.pop %v791
    %v808 = vrsqrt.pop %v792
    %v809 = vrsqrt.pop %v793
    %v810 = vrsqrt.pop %v794
    %v811 = vrsqrt.pop %v795
    %v812 = vrsqrt.pop %v796
    %v813 = vrsqrt.pop %v797
    %v814 = vrsqrt.pop %v798
    %v815 = vrsqrt.pop %v799
    %v816 = vrsqrt.pop %v800
    %v817 = vrsqrt.pop %v801
    %v834 = vcombine.low %v802, %v803
    %v835 = vcombine.low %v804, %v805
    %v837 = vunpack.c.l.s4 1983009808
    %v838 = vunpack.c.0.s8 %v837
    %v839 = vlaneseq
    %v840 = vshrl.u32 %v839, 7
    %v841 = vsub.s32 %v838, %v840
    %v842 = vrot.slane %v834, %v841
    %v844 = vunpack.c.l.s4 1983009808
    %v845 = vunpack.c.0.s8 %v844
    %v846 = vlaneseq
    %v847 = vshrl.u32 %v846, 7
    %v848 = vsub.s32 %v845, %v847
    %v849 = vrot.slane %v835, %v848
    %v850 = vcombine.low %v842, %v849
    %v851 = vcombine.low %v806, %v807
    %v852 = vcombine.low %v808, %v809
    %v854 = vunpack.c.l.s4 1983009808
    %v855 = vunpack.c.0.s8 %v854
    %v856 = vlaneseq
    %v857 = vshrl.u32 %v856, 7
    %v858 = vsub.s32 %v855, %v857
    %v859 = vrot.slane %v851, %v858
    %v861 = vunpack.c.l.s4 1983009808
    %v862 = vunpack.c.0.s8 %v861
    %v863 = vlaneseq
    %v864 = vshrl.u32 %v863, 7
    %v865 = vsub.s32 %v862, %v864
    %v866 = vrot.slane %v852, %v865
    %v867 = vcombine.low %v859, %v866
    %v868 = vcombine.low %v810, %v811
    %v869 = vcombine.low %v812, %v813
    %v871 = vunpack.c.l.s4 1983009808
    %v872 = vunpack.c.0.s8 %v871
    %v873 = vlaneseq
    %v874 = vshrl.u32 %v873, 7
    %v875 = vsub.s32 %v872, %v874
    %v876 = vrot.slane %v868, %v875
    %v878 = vunpack.c.l.s4 1983009808
    %v879 = vunpack.c.0.s8 %v878
    %v880 = vlaneseq
    %v881 = vshrl.u32 %v880, 7
    %v882 = vsub.s32 %v879, %v881
    %v883 = vrot.slane %v869, %v882
    %v884 = vcombine.low %v876, %v883
    %v885 = vcombine.low %v814, %v815
    %v886 = vcombine.low %v816, %v817
    %v888 = vunpack.c.l.s4 1983009808
    %v889 = vunpack.c.0.s8 %v888
    %v890 = vlaneseq
    %v891 = vshrl.u32 %v890, 7
    %v892 = vsub.s32 %v889, %v891
    %v893 = vrot.slane %v885, %v892
    %v895 = vunpack.c.l.s4 1983009808
    %v896 = vunpack.c.0.s8 %v895
    %v897 = vlaneseq
    %v898 = vshrl.u32 %v897, 7
    %v899 = vsub.s32 %v896, %v898
    %v900 = vrot.slane %v886, %v899
    %v901 = vcombine.low %v893, %v900
    %v906 = vmul.f32 %v91, %v850
    %v907 = vmul.f32 %v92, %v867
    %v908 = vmul.f32 %v93, %v884
    %v909 = vmul.f32 %v94, %v901
    %v914 = vlaneseq
    %v915 = vshrl.u32 %v914, 7
    %v916 = vsub.s32 0, %v915
    %v917 = vrot.slane %v906, %v916
    %v918 = vlaneseq
    %v919 = vshrl.u32 %v918, 7
    %v920 = vsub.s32 2, %v919
    %v921 = vrot.slane %v906, %v920
    %v922 = vlaneseq
    %v923 = vshrl.u32 %v922, 7
    %v924 = vsub.s32 4, %v923
    %v925 = vrot.slane %v906, %v924
    %v926 = vlaneseq
    %v927 = vshrl.u32 %v926, 7
    %v928 = vsub.s32 6, %v927
    %v929 = vrot.slane %v906, %v928
    %v930 = vlaneseq
    %v931 = vshrl.u32 %v930, 7
    %v932 = vsub.s32 0, %v931
    %v933 = vrot.slane %v907, %v932
    %v934 = vlaneseq
    %v935 = vshrl.u32 %v934, 7
    %v936 = vsub.s32 2, %v935
    %v937 = vrot.slane %v907, %v936
    %v938 = vlaneseq
    %v939 = vshrl.u32 %v938, 7
    %v940 = vsub.s32 4, %v939
    %v941 = vrot.slane %v907, %v940
    %v942 = vlaneseq
    %v943 = vshrl.u32 %v942, 7
    %v944 = vsub.s32 6, %v943
    %v945 = vrot.slane %v907, %v944
    %v946 = vlaneseq
    %v947 = vshrl.u32 %v946, 7
    %v948 = vsub.s32 0, %v947
    %v949 = vrot.slane %v908, %v948
    %v950 = vlaneseq
    %v951 = vshrl.u32 %v950, 7
    %v952 = vsub.s32 2, %v951
    %v953 = vrot.slane %v908, %v952
    %v954 = vlaneseq
    %v955 = vshrl.u32 %v954, 7
    %v956 = vsub.s32 4, %v955
    %v957 = vrot.slane %v908, %v956
    %v958 = vlaneseq
    %v959 = vshrl.u32 %v958, 7
    %v960 = vsub.s32 6, %v959
    %v961 = vrot.slane %v908, %v960
    %v962 = vlaneseq
    %v963 = vshrl.u32 %v962, 7
    %v964 = vsub.s32 0, %v963
    %v965 = vrot.slane %v909, %v964
    %v966 = vlaneseq
    %v967 = vshrl.u32 %v966, 7
    %v968 = vsub.s32 2, %v967
    %v969 = vrot.slane %v909, %v968
    %v970 = vlaneseq
    %v971 = vshrl.u32 %v970, 7
    %v972 = vsub.s32 4, %v971
    %v973 = vrot.slane %v909, %v972
    %v974 = vlaneseq
    %v975 = vshrl.u32 %v974, 7
    %v976 = vsub.s32 6, %v975
    %v977 = vrot.slane %v909, %v976
    %v994 = vmul.f32 %v626, %v917
    %v995 = vmul.f32 %v627, %v921
    %v996 = vmul.f32 %v628, %v925
    %v997 = vmul.f32 %v629, %v929
    %v998 = vmul.f32 %v630, %v933
    %v999 = vmul.f32 %v631, %v937
    %v1000 = vmul.f32 %v632, %v941
    %v1001 = vmul.f32 %v633, %v945
    %v1002 = vmul.f32 %v634, %v949
    %v1003 = vmul.f32 %v635, %v953
    %v1004 = vmul.f32 %v636, %v957
    %v1005 = vmul.f32 %v637, %v961
    %v1006 = vmul.f32 %v638, %v965
    %v1007 = vmul.f32 %v639, %v969
    %v1008 = vmul.f32 %v640, %v973
    %v1009 = vmul.f32 %v641, %v977
    %v1026 = vcombine.low %v994, %v995
    %v1027 = vcombine.low %v996, %v997
    %v1029 = vunpack.c.l.s4 1983009808
    %v1030 = vunpack.c.0.s8 %v1029
    %v1031 = vlaneseq
    %v1032 = vshrl.u32 %v1031, 7
    %v1033 = vsub.s32 %v1030, %v1032
    %v1034 = vrot.slane %v1026, %v1033
    %v1036 = vunpack.c.l.s4 1983009808
    %v1037 = vunpack.c.0.s8 %v1036
    %v1038 = vlaneseq
    %v1039 = vshrl.u32 %v1038, 7
    %v1040 = vsub.s32 %v1037, %v1039
    %v1041 = vrot.slane %v1027, %v1040
    %v1042 = vcombine.low %v1034, %v1041
    %v1043 = vcombine.low %v998, %v999
    %v1044 = vcombine.low %v1000, %v1001
    %v1046 = vunpack.c.l.s4 1983009808
    %v1047 = vunpack.c.0.s8 %v1046
    %v1048 = vlaneseq
    %v1049 = vshrl.u32 %v1048, 7
    %v1050 = vsub.s32 %v1047, %v1049
    %v1051 = vrot.slane %v1043, %v1050
    %v1053 = vunpack.c.l.s4 1983009808
    %v1054 = vunpack.c.0.s8 %v1053
    %v1055 = vlaneseq
    %v1056 = vshrl.u32 %v1055, 7
    %v1057 = vsub.s32 %v1054, %v1056
    %v1058 = vrot.slane %v1044, %v1057
    %v1059 = vcombine.low %v1051, %v1058
    %v1060 = vcombine.low %v1002, %v1003
    %v1061 = vcombine.low %v1004, %v1005
    %v1063 = vunpack.c.l.s4 1983009808
    %v1064 = vunpack.c.0.s8 %v1063
    %v1065 = vlaneseq
    %v1066 = vshrl.u32 %v1065, 7
    %v1067 = vsub.s32 %v1064, %v1066
    %v1068 = vrot.slane %v1060, %v1067
    %v1070 = vunpack.c.l.s4 1983009808
    %v1071 = vunpack.c.0.s8 %v1070
    %v1072 = vlaneseq
    %v1073 = vshrl.u32 %v1072, 7
    %v1074 = vsub.s32 %v1071, %v1073
    %v1075 = vrot.slane %v1061, %v1074
    %v1076 = vcombine.low %v1068, %v1075
    %v1077 = vcombine.low %v1006, %v1007
    %v1078 = vcombine.low %v1008, %v1009
    %v1080 = vunpack.c.l.s4 1983009808
    %v1081 = vunpack.c.0.s8 %v1080
    %v1082 = vlaneseq
    %v1083 = vshrl.u32 %v1082, 7
    %v1084 = vsub.s32 %v1081, %v1083
    %v1085 = vrot.slane %v1077, %v1084
    %v1087 = vunpack.c.l.s4 1983009808
    %v1088 = vunpack.c.0.s8 %v1087
    %v1089 = vlaneseq
    %v1090 = vshrl.u32 %v1089, 7
    %v1091 = vsub.s32 %v1088, %v1090
    %v1092 = vrot.slane %v1078, %v1091
    %v1093 = vcombine.low %v1085, %v1092
    %v1094 = vrot.slane %v1042, 7
    %v1095 = vrot.slane %v1059, 7
    %v1096 = vrot.slane %v1076, 7
    %v1097 = vrot.slane %v1093, 7
    %v1102 = vsub.f32 %v91, %v1094
    %v1103 = vsub.f32 %v92, %v1095
    %v1104 = vsub.f32 %v93, %v1096
    %v1105 = vsub.f32 %v94, %v1097
    %v1106 = vlaneseq
    %v1107 = vshrl.u32 %v1106, 7
    %v1108 = vsub.s32 0, %v1107
    %v1109 = vrot.slane %v917, %v1108
    %v1110 = vlaneseq
    %v1111 = vshrl.u32 %v1110, 7
    %v1112 = vsub.s32 0, %v1111
    %v1113 = vrot.slane %v921, %v1112
    %v1114 = vlaneseq
    %v1115 = vshrl.u32 %v1114, 7
    %v1116 = vsub.s32 0, %v1115
    %v1117 = vrot.slane %v925, %v1116
    %v1118 = vlaneseq
    %v1119 = vshrl.u32 %v1118, 7
    %v1120 = vsub.s32 0, %v1119
    %v1121 = vrot.slane %v929, %v1120
    %v1122 = vlaneseq
    %v1123 = vshrl.u32 %v1122, 7
    %v1124 = vsub.s32 0, %v1123
    %v1125 = vrot.slane %v933, %v1124
    %v1126 = vlaneseq
    %v1127 = vshrl.u32 %v1126, 7
    %v1128 = vsub.s32 0, %v1127
    %v1129 = vrot.slane %v937, %v1128
    %v1130 = vlaneseq
    %v1131 = vshrl.u32 %v1130, 7
    %v1132 = vsub.s32 0, %v1131
    %v1133 = vrot.slane %v941, %v1132
    %v1134 = vlaneseq
    %v1135 = vshrl.u32 %v1134, 7
    %v1136 = vsub.s32 0, %v1135
    %v1137 = vrot.slane %v945, %v1136
    %v1138 = vlaneseq
    %v1139 = vshrl.u32 %v1138, 7
    %v1140 = vsub.s32 0, %v1139
    %v1141 = vrot.slane %v949, %v1140
    %v1142 = vlaneseq
    %v1143 = vshrl.u32 %v1142, 7
    %v1144 = vsub.s32 0, %v1143
    %v1145 = vrot.slane %v953, %v1144
    %v1146 = vlaneseq
    %v1147 = vshrl.u32 %v1146, 7
    %v1148 = vsub.s32 0, %v1147
    %v1149 = vrot.slane %v957, %v1148
    %v1150 = vlaneseq
    %v1151 = vshrl.u32 %v1150, 7
    %v1152 = vsub.s32 0, %v1151
    %v1153 = vrot.slane %v961, %v1152
    %v1154 = vlaneseq
    %v1155 = vshrl.u32 %v1154, 7
    %v1156 = vsub.s32 0, %v1155
    %v1157 = vrot.slane %v965, %v1156
    %v1158 = vlaneseq
    %v1159 = vshrl.u32 %v1158, 7
    %v1160 = vsub.s32 0, %v1159
    %v1161 = vrot.slane %v969, %v1160
    %v1162 = vlaneseq
    %v1163 = vshrl.u32 %v1162, 7
    %v1164 = vsub.s32 0, %v1163
    %v1165 = vrot.slane %v973, %v1164
    %v1166 = vlaneseq
    %v1167 = vshrl.u32 %v1166, 7
    %v1168 = vsub.s32 0, %v1167
    %v1169 = vrot.slane %v977, %v1168
    %v1170 = vmul.f32 %v236, %v1109
    %v1171 = vmul.f32 %v238, %v1113
    %v1172 = vmul.f32 %v277, %v1117
    %v1173 = vmul.f32 %v279, %v1121
    %v1174 = vmul.f32 %v318, %v1125
    %v1175 = vmul.f32 %v320, %v1129
    %v1176 = vmul.f32 %v359, %v1133
    %v1177 = vmul.f32 %v361, %v1137
    %v1178 = vmul.f32 %v400, %v1141
    %v1179 = vmul.f32 %v402, %v1145
    %v1180 = vmul.f32 %v441, %v1149
    %v1181 = vmul.f32 %v443, %v1153
    %v1182 = vmul.f32 %v482, %v1157
    %v1183 = vmul.f32 %v484, %v1161
    %v1184 = vmul.f32 %v523, %v1165
    %v1185 = vmul.f32 %v525, %v1169
    %v1190 = vlaneseq
    %v1191 = vshrl.u32 %v1190, 7
    %v1192 = vsub.s32 1, %v1191
    %v1193 = vrot.slane %v1102, %v1192
    %v1194 = vlaneseq
    %v1195 = vshrl.u32 %v1194, 7
    %v1196 = vsub.s32 3, %v1195
    %v1197 = vrot.slane %v1102, %v1196
    %v1198 = vlaneseq
    %v1199 = vshrl.u32 %v1198, 7
    %v1200 = vsub.s32 5, %v1199
    %v1201 = vrot.slane %v1102, %v1200
    %v1202 = vlaneseq
    %v1203 = vshrl.u32 %v1202, 7
    %v1204 = vsub.s32 7, %v1203
    %v1205 = vrot.slane %v1102, %v1204
    %v1206 = vlaneseq
    %v1207 = vshrl.u32 %v1206, 7
    %v1208 = vsub.s32 1, %v1207
    %v1209 = vrot.slane %v1103, %v1208
    %v1210 = vlaneseq
    %v1211 = vshrl.u32 %v1210, 7
    %v1212 = vsub.s32 3, %v1211
    %v1213 = vrot.slane %v1103, %v1212
    %v1214 = vlaneseq
    %v1215 = vshrl.u32 %v1214, 7
    %v1216 = vsub.s32 5, %v1215
    %v1217 = vrot.slane %v1103, %v1216
    %v1218 = vlaneseq
    %v1219 = vshrl.u32 %v1218, 7
    %v1220 = vsub.s32 7, %v1219
    %v1221 = vrot.slane %v1103, %v1220
    %v1222 = vlaneseq
    %v1223 = vshrl.u32 %v1222, 7
    %v1224 = vsub.s32 1, %v1223
    %v1225 = vrot.slane %v1104, %v1224
    %v1226 = vlaneseq
    %v1227 = vshrl.u32 %v1226, 7
    %v1228 = vsub.s32 3, %v1227
    %v1229 = vrot.slane %v1104, %v1228
    %v1230 = vlaneseq
    %v1231 = vshrl.u32 %v1230, 7
    %v1232 = vsub.s32 5, %v1231
    %v1233 = vrot.slane %v1104, %v1232
    %v1234 = vlaneseq
    %v1235 = vshrl.u32 %v1234, 7
    %v1236 = vsub.s32 7, %v1235
    %v1237 = vrot.slane %v1104, %v1236
    %v1238 = vlaneseq
    %v1239 = vshrl.u32 %v1238, 7
    %v1240 = vsub.s32 1, %v1239
    %v1241 = vrot.slane %v1105, %v1240
    %v1242 = vlaneseq
    %v1243 = vshrl.u32 %v1242, 7
    %v1244 = vsub.s32 3, %v1243
    %v1245 = vrot.slane %v1105, %v1244
    %v1246 = vlaneseq
    %v1247 = vshrl.u32 %v1246, 7
    %v1248 = vsub.s32 5, %v1247
    %v1249 = vrot.slane %v1105, %v1248
    %v1250 = vlaneseq
    %v1251 = vshrl.u32 %v1250, 7
    %v1252 = vsub.s32 7, %v1251
    %v1253 = vrot.slane %v1105, %v1252
    %v1270 = vlaneseq
    %v1271 = vshrl.u32 %v1270, 7
    %v1272 = vsub.s32 1, %v1271
    %v1273 = vrot.slane %v1193, %v1272
    %v1274 = vlaneseq
    %v1275 = vshrl.u32 %v1274, 7
    %v1276 = vsub.s32 1, %v1275
    %v1277 = vrot.slane %v1197, %v1276
    %v1278 = vlaneseq
    %v1279 = vshrl.u32 %v1278, 7
    %v1280 = vsub.s32 1, %v1279
    %v1281 = vrot.slane %v1201, %v1280
    %v1282 = vlaneseq
    %v1283 = vshrl.u32 %v1282, 7
    %v1284 = vsub.s32 1, %v1283
    %v1285 = vrot.slane %v1205, %v1284
    %v1286 = vlaneseq
    %v1287 = vshrl.u32 %v1286, 7
    %v1288 = vsub.s32 1, %v1287
    %v1289 = vrot.slane %v1209, %v1288
    %v1290 = vlaneseq
    %v1291 = vshrl.u32 %v1290, 7
    %v1292 = vsub.s32 1, %v1291
    %v1293 = vrot.slane %v1213, %v1292
    %v1294 = vlaneseq
    %v1295 = vshrl.u32 %v1294, 7
    %v1296 = vsub.s32 1, %v1295
    %v1297 = vrot.slane %v1217, %v1296
    %v1298 = vlaneseq
    %v1299 = vshrl.u32 %v1298, 7
    %v1300 = vsub.s32 1, %v1299
    %v1301 = vrot.slane %v1221, %v1300
    %v1302 = vlaneseq
    %v1303 = vshrl.u32 %v1302, 7
    %v1304 = vsub.s32 1, %v1303
    %v1305 = vrot.slane %v1225, %v1304
    %v1306 = vlaneseq
    %v1307 = vshrl.u32 %v1306, 7
    %v1308 = vsub.s32 1, %v1307
    %v1309 = vrot.slane %v1229, %v1308
    %v1310 = vlaneseq
    %v1311 = vshrl.u32 %v1310, 7
    %v1312 = vsub.s32 1, %v1311
    %v1313 = vrot.slane %v1233, %v1312
    %v1314 = vlaneseq
    %v1315 = vshrl.u32 %v1314, 7
    %v1316 = vsub.s32 1, %v1315
    %v1317 = vrot.slane %v1237, %v1316
    %v1318 = vlaneseq
    %v1319 = vshrl.u32 %v1318, 7
    %v1320 = vsub.s32 1, %v1319
    %v1321 = vrot.slane %v1241, %v1320
    %v1322 = vlaneseq
    %v1323 = vshrl.u32 %v1322, 7
    %v1324 = vsub.s32 1, %v1323
    %v1325 = vrot.slane %v1245, %v1324
    %v1326 = vlaneseq
    %v1327 = vshrl.u32 %v1326, 7
    %v1328 = vsub.s32 1, %v1327
    %v1329 = vrot.slane %v1249, %v1328
    %v1330 = vlaneseq
    %v1331 = vshrl.u32 %v1330, 7
    %v1332 = vsub.s32 1, %v1331
    %v1333 = vrot.slane %v1253, %v1332
    %v1334 = vadd.f32 %v1170, %v1273
    %v1335 = vadd.f32 %v1171, %v1277
    %v1336 = vadd.f32 %v1172, %v1281
    %v1337 = vadd.f32 %v1173, %v1285
    %v1338 = vadd.f32 %v1174, %v1289
    %v1339 = vadd.f32 %v1175, %v1293
    %v1340 = vadd.f32 %v1176, %v1297
    %v1341 = vadd.f32 %v1177, %v1301
    %v1342 = vadd.f32 %v1178, %v1305
    %v1343 = vadd.f32 %v1179, %v1309
    %v1344 = vadd.f32 %v1180, %v1313
    %v1345 = vadd.f32 %v1181, %v1317
    %v1346 = vadd.f32 %v1182, %v1321
    %v1347 = vadd.f32 %v1183, %v1325
    %v1348 = vadd.f32 %v1184, %v1329
    %v1349 = vadd.f32 %v1185, %v1333
    %v1350 = vmax.f32 %v1334, 0.0
    %v1351 = vmax.f32 %v1335, 0.0
    %v1352 = vmax.f32 %v1336, 0.0
    %v1353 = vmax.f32 %v1337, 0.0
    %v1354 = vmax.f32 %v1338, 0.0
    %v1355 = vmax.f32 %v1339, 0.0
    %v1356 = vmax.f32 %v1340, 0.0
    %v1357 = vmax.f32 %v1341, 0.0
    %v1358 = vmax.f32 %v1342, 0.0
    %v1359 = vmax.f32 %v1343, 0.0
    %v1360 = vmax.f32 %v1344, 0.0
    %v1361 = vmax.f32 %v1345, 0.0
    %v1362 = vmax.f32 %v1346, 0.0
    %v1363 = vmax.f32 %v1347, 0.0
    %v1364 = vmax.f32 %v1348, 0.0
    %v1365 = vmax.f32 %v1349, 0.0
    %v1366 = vpack.c.bf16 %v1350, %v1350
    %v1367 = vpack.c.bf16 %v1351, %v1351
    %v1368 = vpack.c.bf16 %v1352, %v1352
    %v1369 = vpack.c.bf16 %v1353, %v1353
    %v1370 = vpack.c.bf16 %v1354, %v1354
    %v1371 = vpack.c.bf16 %v1355, %v1355
    %v1372 = vpack.c.bf16 %v1356, %v1356
    %v1373 = vpack.c.bf16 %v1357, %v1357
    %v1374 = vpack.c.bf16 %v1358, %v1358
    %v1375 = vpack.c.bf16 %v1359, %v1359
    %v1376 = vpack.c.bf16 %v1360, %v1360
    %v1377 = vpack.c.bf16 %v1361, %v1361
    %v1378 = vpack.c.bf16 %v1362, %v1362
    %v1379 = vpack.c.bf16 %v1363, %v1363
    %v1380 = vpack.c.bf16 %v1364, %v1364
    %v1381 = vpack.c.bf16 %v1365, %v1365
    %v1382 = vld [vmem:[#allocation5] sm:$0xff]
    %v1383 = vld [vmem:[#allocation5 + $0x8] sm:$0xff]
    %v1384 = vld [vmem:[#allocation5 + $0x10] sm:$0xff]
    %v1385 = vld [vmem:[#allocation5 + $0x18] sm:$0xff]
    %v1386 = vld [vmem:[#allocation5 + $0x20] sm:$0xff]
    %v1387 = vld [vmem:[#allocation5 + $0x28] sm:$0xff]
    %v1388 = vld [vmem:[#allocation5 + $0x30] sm:$0xff]
    %v1389 = vld [vmem:[#allocation5 + $0x38] sm:$0xff]
    %v1390 = vld [vmem:[#allocation5 + $0x40] sm:$0xff]
    %v1391 = vld [vmem:[#allocation5 + $0x48] sm:$0xff]
    %v1392 = vld [vmem:[#allocation5 + $0x50] sm:$0xff]
    %v1393 = vld [vmem:[#allocation5 + $0x58] sm:$0xff]
    %v1394 = vld [vmem:[#allocation5 + $0x60] sm:$0xff]
    %v1395 = vld [vmem:[#allocation5 + $0x68] sm:$0xff]
    %v1396 = vld [vmem:[#allocation5 + $0x70] sm:$0xff]
    %v1397 = vld [vmem:[#allocation5 + $0x78] sm:$0xff]
    %v1398 = vld [vmem:[#allocation5 + $0x80] sm:$0xff]
    %v1399 = vld [vmem:[#allocation5 + $0x88] sm:$0xff]
    %v1400 = vld [vmem:[#allocation5 + $0x90] sm:$0xff]
    %v1401 = vld [vmem:[#allocation5 + $0x98] sm:$0xff]
    %v1402 = vld [vmem:[#allocation5 + $0xa0] sm:$0xff]
    %v1403 = vld [vmem:[#allocation5 + $0xa8] sm:$0xff]
    %v1404 = vld [vmem:[#allocation5 + $0xb0] sm:$0xff]
    %v1405 = vld [vmem:[#allocation5 + $0xb8] sm:$0xff]
    %v1406 = vld [vmem:[#allocation5 + $0xc0] sm:$0xff]
    %v1407 = vld [vmem:[#allocation5 + $0xc8] sm:$0xff]
    %v1408 = vld [vmem:[#allocation5 + $0xd0] sm:$0xff]
    %v1409 = vld [vmem:[#allocation5 + $0xd8] sm:$0xff]
    %v1410 = vld [vmem:[#allocation5 + $0xe0] sm:$0xff]
    %v1411 = vld [vmem:[#allocation5 + $0xe8] sm:$0xff]
    %v1412 = vld [vmem:[#allocation5 + $0xf0] sm:$0xff]
    %v1413 = vld [vmem:[#allocation5 + $0xf8] sm:$0xff]
    %v1414 = vld [vmem:[#allocation5 + $0x100] sm:$0xff]
    %v1415 = vld [vmem:[#allocation5 + $0x108] sm:$0xff]
    %v1416 = vld [vmem:[#allocation5 + $0x110] sm:$0xff]
    %v1417 = vld [vmem:[#allocation5 + $0x118] sm:$0xff]
    %v1418 = vld [vmem:[#allocation5 + $0x120] sm:$0xff]
    %v1419 = vld [vmem:[#allocation5 + $0x128] sm:$0xff]
    %v1420 = vld [vmem:[#allocation5 + $0x130] sm:$0xff]
    %v1421 = vld [vmem:[#allocation5 + $0x138] sm:$0xff]
    %v1422 = vld [vmem:[#allocation5 + $0x140] sm:$0xff]
    %v1423 = vld [vmem:[#allocation5 + $0x148] sm:$0xff]
    %v1424 = vld [vmem:[#allocation5 + $0x150] sm:$0xff]
    %v1425 = vld [vmem:[#allocation5 + $0x158] sm:$0xff]
    %v1426 = vld [vmem:[#allocation5 + $0x160] sm:$0xff]
    %v1427 = vld [vmem:[#allocation5 + $0x168] sm:$0xff]
    %v1428 = vld [vmem:[#allocation5 + $0x170] sm:$0xff]
    %v1429 = vld [vmem:[#allocation5 + $0x178] sm:$0xff]
    %v1430 = vld [vmem:[#allocation5 + $0x180] sm:$0xff]
    %v1431 = vld [vmem:[#allocation5 + $0x188] sm:$0xff]
    %v1432 = vld [vmem:[#allocation5 + $0x190] sm:$0xff]
    %v1433 = vld [vmem:[#allocation5 + $0x198] sm:$0xff]
    %v1434 = vld [vmem:[#allocation5 + $0x1a0] sm:$0xff]
    %v1435 = vld [vmem:[#allocation5 + $0x1a8] sm:$0xff]
    %v1436 = vld [vmem:[#allocation5 + $0x1b0] sm:$0xff]
    %v1437 = vld [vmem:[#allocation5 + $0x1b8] sm:$0xff]
    %v1438 = vld [vmem:[#allocation5 + $0x1c0] sm:$0xff]
    %v1439 = vld [vmem:[#allocation5 + $0x1c8] sm:$0xff]
    %v1440 = vld [vmem:[#allocation5 + $0x1d0] sm:$0xff]
    %v1441 = vld [vmem:[#allocation5 + $0x1d8] sm:$0xff]
    %v1442 = vld [vmem:[#allocation5 + $0x1e0] sm:$0xff]
    %v1443 = vld [vmem:[#allocation5 + $0x1e8] sm:$0xff]
    %v1444 = vld [vmem:[#allocation5 + $0x1f0] sm:$0xff]
    %v1445 = vld [vmem:[#allocation5 + $0x1f8] sm:$0xff]
    %v1446 = vld [vmem:[#allocation5 + $0x200] sm:$0xff]
    %v1447 = vld [vmem:[#allocation5 + $0x208] sm:$0xff]
    %v1448 = vld [vmem:[#allocation5 + $0x210] sm:$0xff]
    %v1449 = vld [vmem:[#allocation5 + $0x218] sm:$0xff]
    %v1450 = vld [vmem:[#allocation5 + $0x220] sm:$0xff]
    %v1451 = vld [vmem:[#allocation5 + $0x228] sm:$0xff]
    %v1452 = vld [vmem:[#allocation5 + $0x230] sm:$0xff]
    %v1453 = vld [vmem:[#allocation5 + $0x238] sm:$0xff]
    %v1454 = vld [vmem:[#allocation5 + $0x240] sm:$0xff]
    %v1455 = vld [vmem:[#allocation5 + $0x248] sm:$0xff]
    %v1456 = vld [vmem:[#allocation5 + $0x250] sm:$0xff]
    %v1457 = vld [vmem:[#allocation5 + $0x258] sm:$0xff]
    %v1458 = vld [vmem:[#allocation5 + $0x260] sm:$0xff]
    %v1459 = vld [vmem:[#allocation5 + $0x268] sm:$0xff]
    %v1460 = vld [vmem:[#allocation5 + $0x270] sm:$0xff]
    %v1461 = vld [vmem:[#allocation5 + $0x278] sm:$0xff]
    %v1462 = vld [vmem:[#allocation5 + $0x280] sm:$0xff]
    %v1463 = vld [vmem:[#allocation5 + $0x288] sm:$0xff]
    %v1464 = vld [vmem:[#allocation5 + $0x290] sm:$0xff]
    %v1465 = vld [vmem:[#allocation5 + $0x298] sm:$0xff]
    %v1466 = vld [vmem:[#allocation5 + $0x2a0] sm:$0xff]
    %v1467 = vld [vmem:[#allocation5 + $0x2a8] sm:$0xff]
    %v1468 = vld [vmem:[#allocation5 + $0x2b0] sm:$0xff]
    %v1469 = vld [vmem:[#allocation5 + $0x2b8] sm:$0xff]
    %v1470 = vld [vmem:[#allocation5 + $0x2c0] sm:$0xff]
    %v1471 = vld [vmem:[#allocation5 + $0x2c8] sm:$0xff]
    %v1472 = vld [vmem:[#allocation5 + $0x2d0] sm:$0xff]
    %v1473 = vld [vmem:[#allocation5 + $0x2d8] sm:$0xff]
    %v1474 = vld [vmem:[#allocation5 + $0x2e0] sm:$0xff]
    %v1475 = vld [vmem:[#allocation5 + $0x2e8] sm:$0xff]
    %v1476 = vld [vmem:[#allocation5 + $0x2f0] sm:$0xff]
    %v1477 = vld [vmem:[#allocation5 + $0x2f8] sm:$0xff]
    %v1478 = vld [vmem:[#allocation5 + $0x300] sm:$0xff]
    %v1479 = vld [vmem:[#allocation5 + $0x308] sm:$0xff]
    %v1480 = vld [vmem:[#allocation5 + $0x310] sm:$0xff]
    %v1481 = vld [vmem:[#allocation5 + $0x318] sm:$0xff]
    %v1482 = vld [vmem:[#allocation5 + $0x320] sm:$0xff]
    %v1483 = vld [vmem:[#allocation5 + $0x328] sm:$0xff]
    %v1484 = vld [vmem:[#allocation5 + $0x330] sm:$0xff]
    %v1485 = vld [vmem:[#allocation5 + $0x338] sm:$0xff]
    %v1486 = vld [vmem:[#allocation5 + $0x340] sm:$0xff]
    %v1487 = vld [vmem:[#allocation5 + $0x348] sm:$0xff]
    %v1488 = vld [vmem:[#allocation5 + $0x350] sm:$0xff]
    %v1489 = vld [vmem:[#allocation5 + $0x358] sm:$0xff]
    %v1490 = vld [vmem:[#allocation5 + $0x360] sm:$0xff]
    %v1491 = vld [vmem:[#allocation5 + $0x368] sm:$0xff]
    %v1492 = vld [vmem:[#allocation5 + $0x370] sm:$0xff]
    %v1493 = vld [vmem:[#allocation5 + $0x378] sm:$0xff]
    %v1494 = vld [vmem:[#allocation5 + $0x380] sm:$0xff]
    %v1495 = vld [vmem:[#allocation5 + $0x388] sm:$0xff]
    %v1496 = vld [vmem:[#allocation5 + $0x390] sm:$0xff]
    %v1497 = vld [vmem:[#allocation5 + $0x398] sm:$0xff]
    %v1498 = vld [vmem:[#allocation5 + $0x3a0] sm:$0xff]
    %v1499 = vld [vmem:[#allocation5 + $0x3a8] sm:$0xff]
    %v1500 = vld [vmem:[#allocation5 + $0x3b0] sm:$0xff]
    %v1501 = vld [vmem:[#allocation5 + $0x3b8] sm:$0xff]
    %v1502 = vld [vmem:[#allocation5 + $0x3c0] sm:$0xff]
    %v1503 = vld [vmem:[#allocation5 + $0x3c8] sm:$0xff]
    %v1504 = vld [vmem:[#allocation5 + $0x3d0] sm:$0xff]
    %v1505 = vld [vmem:[#allocation5 + $0x3d8] sm:$0xff]
    %v1506 = vld [vmem:[#allocation5 + $0x3e0] sm:$0xff]
    %v1507 = vld [vmem:[#allocation5 + $0x3e8] sm:$0xff]
    %v1508 = vld [vmem:[#allocation5 + $0x3f0] sm:$0xff]
    %v1509 = vld [vmem:[#allocation5 + $0x3f8] sm:$0xff]
    %v1510 = vld [vmem:[#allocation5 + $0x400] sm:$0xff]
    %v1511 = vld [vmem:[#allocation5 + $0x408] sm:$0xff]
    %v1512 = vld [vmem:[#allocation5 + $0x410] sm:$0xff]
    %v1513 = vld [vmem:[#allocation5 + $0x418] sm:$0xff]
    %v1514 = vld [vmem:[#allocation5 + $0x420] sm:$0xff]
    %v1515 = vld [vmem:[#allocation5 + $0x428] sm:$0xff]
    %v1516 = vld [vmem:[#allocation5 + $0x430] sm:$0xff]
    %v1517 = vld [vmem:[#allocation5 + $0x438] sm:$0xff]
    %v1518 = vld [vmem:[#allocation5 + $0x440] sm:$0xff]
    %v1519 = vld [vmem:[#allocation5 + $0x448] sm:$0xff]
    %v1520 = vld [vmem:[#allocation5 + $0x450] sm:$0xff]
    %v1521 = vld [vmem:[#allocation5 + $0x458] sm:$0xff]
    %v1522 = vld [vmem:[#allocation5 + $0x460] sm:$0xff]
    %v1523 = vld [vmem:[#allocation5 + $0x468] sm:$0xff]
    %v1524 = vld [vmem:[#allocation5 + $0x470] sm:$0xff]
    %v1525 = vld [vmem:[#allocation5 + $0x478] sm:$0xff]
    %v1526 = vld [vmem:[#allocation5 + $0x480] sm:$0xff]
    %v1527 = vld [vmem:[#allocation5 + $0x488] sm:$0xff]
    %v1528 = vld [vmem:[#allocation5 + $0x490] sm:$0xff]
    %v1529 = vld [vmem:[#allocation5 + $0x498] sm:$0xff]
    %v1530 = vld [vmem:[#allocation5 + $0x4a0] sm:$0xff]
    %v1531 = vld [vmem:[#allocation5 + $0x4a8] sm:$0xff]
    %v1532 = vld [vmem:[#allocation5 + $0x4b0] sm:$0xff]
    %v1533 = vld [vmem:[#allocation5 + $0x4b8] sm:$0xff]
    %v1534 = vld [vmem:[#allocation5 + $0x4c0] sm:$0xff]
    %v1535 = vld [vmem:[#allocation5 + $0x4c8] sm:$0xff]
    %v1536 = vld [vmem:[#allocation5 + $0x4d0] sm:$0xff]
    %v1537 = vld [vmem:[#allocation5 + $0x4d8] sm:$0xff]
    %v1538 = vld [vmem:[#allocation5 + $0x4e0] sm:$0xff]
    %v1539 = vld [vmem:[#allocation5 + $0x4e8] sm:$0xff]
    %v1540 = vld [vmem:[#allocation5 + $0x4f0] sm:$0xff]
    %v1541 = vld [vmem:[#allocation5 + $0x4f8] sm:$0xff]
    %v1542 = vld [vmem:[#allocation5 + $0x500] sm:$0xff]
    %v1543 = vld [vmem:[#allocation5 + $0x508] sm:$0xff]
    %v1544 = vld [vmem:[#allocation5 + $0x510] sm:$0xff]
    %v1545 = vld [vmem:[#allocation5 + $0x518] sm:$0xff]
    %v1546 = vld [vmem:[#allocation5 + $0x520] sm:$0xff]
    %v1547 = vld [vmem:[#allocation5 + $0x528] sm:$0xff]
    %v1548 = vld [vmem:[#allocation5 + $0x530] sm:$0xff]
    %v1549 = vld [vmem:[#allocation5 + $0x538] sm:$0xff]
    %v1550 = vld [vmem:[#allocation5 + $0x540] sm:$0xff]
    %v1551 = vld [vmem:[#allocation5 + $0x548] sm:$0xff]
    %v1552 = vld [vmem:[#allocation5 + $0x550] sm:$0xff]
    %v1553 = vld [vmem:[#allocation5 + $0x558] sm:$0xff]
    %v1554 = vld [vmem:[#allocation5 + $0x560] sm:$0xff]
    %v1555 = vld [vmem:[#allocation5 + $0x568] sm:$0xff]
    %v1556 = vld [vmem:[#allocation5 + $0x570] sm:$0xff]
    %v1557 = vld [vmem:[#allocation5 + $0x578] sm:$0xff]
    %v1558 = vld [vmem:[#allocation5 + $0x580] sm:$0xff]
    %v1559 = vld [vmem:[#allocation5 + $0x588] sm:$0xff]
    %v1560 = vld [vmem:[#allocation5 + $0x590] sm:$0xff]
    %v1561 = vld [vmem:[#allocation5 + $0x598] sm:$0xff]
    %v1562 = vld [vmem:[#allocation5 + $0x5a0] sm:$0xff]
    %v1563 = vld [vmem:[#allocation5 + $0x5a8] sm:$0xff]
    %v1564 = vld [vmem:[#allocation5 + $0x5b0] sm:$0xff]
    %v1565 = vld [vmem:[#allocation5 + $0x5b8] sm:$0xff]
    %v1566 = vld [vmem:[#allocation5 + $0x5c0] sm:$0xff]
    %v1567 = vld [vmem:[#allocation5 + $0x5c8] sm:$0xff]
    %v1568 = vld [vmem:[#allocation5 + $0x5d0] sm:$0xff]
    %v1569 = vld [vmem:[#allocation5 + $0x5d8] sm:$0xff]
    %v1570 = vld [vmem:[#allocation5 + $0x5e0] sm:$0xff]
    %v1571 = vld [vmem:[#allocation5 + $0x5e8] sm:$0xff]
    %v1572 = vld [vmem:[#allocation5 + $0x5f0] sm:$0xff]
    %v1573 = vld [vmem:[#allocation5 + $0x5f8] sm:$0xff]
    %v1574 = vld [vmem:[#allocation5 + $0x600] sm:$0xff]
    %v1575 = vld [vmem:[#allocation5 + $0x608] sm:$0xff]
    %v1576 = vld [vmem:[#allocation5 + $0x610] sm:$0xff]
    %v1577 = vld [vmem:[#allocation5 + $0x618] sm:$0xff]
    %v1578 = vld [vmem:[#allocation5 + $0x620] sm:$0xff]
    %v1579 = vld [vmem:[#allocation5 + $0x628] sm:$0xff]
    %v1580 = vld [vmem:[#allocation5 + $0x630] sm:$0xff]
    %v1581 = vld [vmem:[#allocation5 + $0x638] sm:$0xff]
    %v1582 = vld [vmem:[#allocation5 + $0x640] sm:$0xff]
    %v1583 = vld [vmem:[#allocation5 + $0x648] sm:$0xff]
    %v1584 = vld [vmem:[#allocation5 + $0x650] sm:$0xff]
    %v1585 = vld [vmem:[#allocation5 + $0x658] sm:$0xff]
    %v1586 = vld [vmem:[#allocation5 + $0x660] sm:$0xff]
    %v1587 = vld [vmem:[#allocation5 + $0x668] sm:$0xff]
    %v1588 = vld [vmem:[#allocation5 + $0x670] sm:$0xff]
    %v1589 = vld [vmem:[#allocation5 + $0x678] sm:$0xff]
    %v1590 = vld [vmem:[#allocation5 + $0x680] sm:$0xff]
    %v1591 = vld [vmem:[#allocation5 + $0x688] sm:$0xff]
    %v1592 = vld [vmem:[#allocation5 + $0x690] sm:$0xff]
    %v1593 = vld [vmem:[#allocation5 + $0x698] sm:$0xff]
    %v1594 = vld [vmem:[#allocation5 + $0x6a0] sm:$0xff]
    %v1595 = vld [vmem:[#allocation5 + $0x6a8] sm:$0xff]
    %v1596 = vld [vmem:[#allocation5 + $0x6b0] sm:$0xff]
    %v1597 = vld [vmem:[#allocation5 + $0x6b8] sm:$0xff]
    %v1598 = vld [vmem:[#allocation5 + $0x6c0] sm:$0xff]
    %v1599 = vld [vmem:[#allocation5 + $0x6c8] sm:$0xff]
    %v1600 = vld [vmem:[#allocation5 + $0x6d0] sm:$0xff]
    %v1601 = vld [vmem:[#allocation5 + $0x6d8] sm:$0xff]
    %v1602 = vld [vmem:[#allocation5 + $0x6e0] sm:$0xff]
    %v1603 = vld [vmem:[#allocation5 + $0x6e8] sm:$0xff]
    %v1604 = vld [vmem:[#allocation5 + $0x6f0] sm:$0xff]
    %v1605 = vld [vmem:[#allocation5 + $0x6f8] sm:$0xff]
    %v1606 = vld [vmem:[#allocation5 + $0x700] sm:$0xff]
    %v1607 = vld [vmem:[#allocation5 + $0x708] sm:$0xff]
    %v1608 = vld [vmem:[#allocation5 + $0x710] sm:$0xff]
    %v1609 = vld [vmem:[#allocation5 + $0x718] sm:$0xff]
    %v1610 = vld [vmem:[#allocation5 + $0x720] sm:$0xff]
    %v1611 = vld [vmem:[#allocation5 + $0x728] sm:$0xff]
    %v1612 = vld [vmem:[#allocation5 + $0x730] sm:$0xff]
    %v1613 = vld [vmem:[#allocation5 + $0x738] sm:$0xff]
    %v1614 = vld [vmem:[#allocation5 + $0x740] sm:$0xff]
    %v1615 = vld [vmem:[#allocation5 + $0x748] sm:$0xff]
    %v1616 = vld [vmem:[#allocation5 + $0x750] sm:$0xff]
    %v1617 = vld [vmem:[#allocation5 + $0x758] sm:$0xff]
    %v1618 = vld [vmem:[#allocation5 + $0x760] sm:$0xff]
    %v1619 = vld [vmem:[#allocation5 + $0x768] sm:$0xff]
    %v1620 = vld [vmem:[#allocation5 + $0x770] sm:$0xff]
    %v1621 = vld [vmem:[#allocation5 + $0x778] sm:$0xff]
    %v1622 = vld [vmem:[#allocation5 + $0x780] sm:$0xff]
    %v1623 = vld [vmem:[#allocation5 + $0x788] sm:$0xff]
    %v1624 = vld [vmem:[#allocation5 + $0x790] sm:$0xff]
    %v1625 = vld [vmem:[#allocation5 + $0x798] sm:$0xff]
    %v1626 = vld [vmem:[#allocation5 + $0x7a0] sm:$0xff]
    %v1627 = vld [vmem:[#allocation5 + $0x7a8] sm:$0xff]
    %v1628 = vld [vmem:[#allocation5 + $0x7b0] sm:$0xff]
    %v1629 = vld [vmem:[#allocation5 + $0x7b8] sm:$0xff]
    %v1630 = vld [vmem:[#allocation5 + $0x7c0] sm:$0xff]
    %v1631 = vld [vmem:[#allocation5 + $0x7c8] sm:$0xff]
    %v1632 = vld [vmem:[#allocation5 + $0x7d0] sm:$0xff]
    %v1633 = vld [vmem:[#allocation5 + $0x7d8] sm:$0xff]
    %v1634 = vld [vmem:[#allocation5 + $0x7e0] sm:$0xff]
    %v1635 = vld [vmem:[#allocation5 + $0x7e8] sm:$0xff]
    %v1636 = vld [vmem:[#allocation5 + $0x7f0] sm:$0xff]
    %v1637 = vld [vmem:[#allocation5 + $0x7f8] sm:$0xff]
    %v1638 = vunpack.c.l.s8.bf16 %v1382
    %v1639 = vunpack.c.l.s8.bf16 %v1383
    %v1640 = vunpack.c.l.s8.bf16 %v1384
    %v1641 = vunpack.c.l.s8.bf16 %v1385
    %v1642 = vunpack.c.h.s8.bf16 %v1382
    %v1643 = vunpack.c.h.s8.bf16 %v1383
    %v1644 = vunpack.c.h.s8.bf16 %v1384
    %v1645 = vunpack.c.h.s8.bf16 %v1385
    %v1646 = vunpack.c.l.s8.bf16 %v1386
    %v1647 = vunpack.c.l.s8.bf16 %v1387
    %v1648 = vunpack.c.l.s8.bf16 %v1388
    %v1649 = vunpack.c.l.s8.bf16 %v1389
    %v1650 = vunpack.c.h.s8.bf16 %v1386
    %v1651 = vunpack.c.h.s8.bf16 %v1387
    %v1652 = vunpack.c.h.s8.bf16 %v1388
    %v1653 = vunpack.c.h.s8.bf16 %v1389
    %v1654 = vunpack.c.l.s8.bf16 %v1390
    %v1655 = vunpack.c.l.s8.bf16 %v1391
    %v1656 = vunpack.c.l.s8.bf16 %v1392
    %v1657 = vunpack.c.l.s8.bf16 %v1393
    %v1658 = vunpack.c.h.s8.bf16 %v1390
    %v1659 = vunpack.c.h.s8.bf16 %v1391
    %v1660 = vunpack.c.h.s8.bf16 %v1392
    %v1661 = vunpack.c.h.s8.bf16 %v1393
    %v1662 = vunpack.c.l.s8.bf16 %v1394
    %v1663 = vunpack.c.l.s8.bf16 %v1395
    %v1664 = vunpack.c.l.s8.bf16 %v1396
    %v1665 = vunpack.c.l.s8.bf16 %v1397
    %v1666 = vunpack.c.h.s8.bf16 %v1394
    %v1667 = vunpack.c.h.s8.bf16 %v1395
    %v1668 = vunpack.c.h.s8.bf16 %v1396
    %v1669 = vunpack.c.h.s8.bf16 %v1397
    %v1670 = vunpack.c.l.s8.bf16 %v1398
    %v1671 = vunpack.c.l.s8.bf16 %v1399
    %v1672 = vunpack.c.l.s8.bf16 %v1400
    %v1673 = vunpack.c.l.s8.bf16 %v1401
    %v1674 = vunpack.c.h.s8.bf16 %v1398
    %v1675 = vunpack.c.h.s8.bf16 %v1399
    %v1676 = vunpack.c.h.s8.bf16 %v1400
    %v1677 = vunpack.c.h.s8.bf16 %v1401
    %v1678 = vunpack.c.l.s8.bf16 %v1402
    %v1679 = vunpack.c.l.s8.bf16 %v1403
    %v1680 = vunpack.c.l.s8.bf16 %v1404
    %v1681 = vunpack.c.l.s8.bf16 %v1405
    %v1682 = vunpack.c.h.s8.bf16 %v1402
    %v1683 = vunpack.c.h.s8.bf16 %v1403
    %v1684 = vunpack.c.h.s8.bf16 %v1404
    %v1685 = vunpack.c.h.s8.bf16 %v1405
    %v1686 = vunpack.c.l.s8.bf16 %v1406
    %v1687 = vunpack.c.l.s8.bf16 %v1407
    %v1688 = vunpack.c.l.s8.bf16 %v1408
    %v1689 = vunpack.c.l.s8.bf16 %v1409
    %v1690 = vunpack.c.h.s8.bf16 %v1406
    %v1691 = vunpack.c.h.s8.bf16 %v1407
    %v1692 = vunpack.c.h.s8.bf16 %v1408
    %v1693 = vunpack.c.h.s8.bf16 %v1409
    %v1694 = vunpack.c.l.s8.bf16 %v1410
    %v1695 = vunpack.c.l.s8.bf16 %v1411
    %v1696 = vunpack.c.l.s8.bf16 %v1412
    %v1697 = vunpack.c.l.s8.bf16 %v1413
    %v1698 = vunpack.c.h.s8.bf16 %v1410
    %v1699 = vunpack.c.h.s8.bf16 %v1411
    %v1700 = vunpack.c.h.s8.bf16 %v1412
    %v1701 = vunpack.c.h.s8.bf16 %v1413
    %v1702 = vunpack.c.l.s8.bf16 %v1414
    %v1703 = vunpack.c.l.s8.bf16 %v1415
    %v1704 = vunpack.c.l.s8.bf16 %v1416
    %v1705 = vunpack.c.l.s8.bf16 %v1417
    %v1706 = vunpack.c.h.s8.bf16 %v1414
    %v1707 = vunpack.c.h.s8.bf16 %v1415
    %v1708 = vunpack.c.h.s8.bf16 %v1416
    %v1709 = vunpack.c.h.s8.bf16 %v1417
    %v1710 = vunpack.c.l.s8.bf16 %v1418
    %v1711 = vunpack.c.l.s8.bf16 %v1419
    %v1712 = vunpack.c.l.s8.bf16 %v1420
    %v1713 = vunpack.c.l.s8.bf16 %v1421
    %v1714 = vunpack.c.h.s8.bf16 %v1418
    %v1715 = vunpack.c.h.s8.bf16 %v1419
    %v1716 = vunpack.c.h.s8.bf16 %v1420
    %v1717 = vunpack.c.h.s8.bf16 %v1421
    %v1718 = vunpack.c.l.s8.bf16 %v1422
    %v1719 = vunpack.c.l.s8.bf16 %v1423
    %v1720 = vunpack.c.l.s8.bf16 %v1424
    %v1721 = vunpack.c.l.s8.bf16 %v1425
    %v1722 = vunpack.c.h.s8.bf16 %v1422
    %v1723 = vunpack.c.h.s8.bf16 %v1423
    %v1724 = vunpack.c.h.s8.bf16 %v1424
    %v1725 = vunpack.c.h.s8.bf16 %v1425
    %v1726 = vunpack.c.l.s8.bf16 %v1426
    %v1727 = vunpack.c.l.s8.bf16 %v1427
    %v1728 = vunpack.c.l.s8.bf16 %v1428
    %v1729 = vunpack.c.l.s8.bf16 %v1429
    %v1730 = vunpack.c.h.s8.bf16 %v1426
    %v1731 = vunpack.c.h.s8.bf16 %v1427
    %v1732 = vunpack.c.h.s8.bf16 %v1428
    %v1733 = vunpack.c.h.s8.bf16 %v1429
    %v1734 = vunpack.c.l.s8.bf16 %v1430
    %v1735 = vunpack.c.l.s8.bf16 %v1431
    %v1736 = vunpack.c.l.s8.bf16 %v1432
    %v1737 = vunpack.c.l.s8.bf16 %v1433
    %v1738 = vunpack.c.h.s8.bf16 %v1430
    %v1739 = vunpack.c.h.s8.bf16 %v1431
    %v1740 = vunpack.c.h.s8.bf16 %v1432
    %v1741 = vunpack.c.h.s8.bf16 %v1433
    %v1742 = vunpack.c.l.s8.bf16 %v1434
    %v1743 = vunpack.c.l.s8.bf16 %v1435
    %v1744 = vunpack.c.l.s8.bf16 %v1436
    %v1745 = vunpack.c.l.s8.bf16 %v1437
    %v1746 = vunpack.c.h.s8.bf16 %v1434
    %v1747 = vunpack.c.h.s8.bf16 %v1435
    %v1748 = vunpack.c.h.s8.bf16 %v1436
    %v1749 = vunpack.c.h.s8.bf16 %v1437
    %v1750 = vunpack.c.l.s8.bf16 %v1438
    %v1751 = vunpack.c.l.s8.bf16 %v1439
    %v1752 = vunpack.c.l.s8.bf16 %v1440
    %v1753 = vunpack.c.l.s8.bf16 %v1441
    %v1754 = vunpack.c.h.s8.bf16 %v1438
    %v1755 = vunpack.c.h.s8.bf16 %v1439
    %v1756 = vunpack.c.h.s8.bf16 %v1440
    %v1757 = vunpack.c.h.s8.bf16 %v1441
    %v1758 = vunpack.c.l.s8.bf16 %v1442
    %v1759 = vunpack.c.l.s8.bf16 %v1443
    %v1760 = vunpack.c.l.s8.bf16 %v1444
    %v1761 = vunpack.c.l.s8.bf16 %v1445
    %v1762 = vunpack.c.h.s8.bf16 %v1442
    %v1763 = vunpack.c.h.s8.bf16 %v1443
    %v1764 = vunpack.c.h.s8.bf16 %v1444
    %v1765 = vunpack.c.h.s8.bf16 %v1445
    %v1766 = vunpack.c.l.s8.bf16 %v1446
    %v1767 = vunpack.c.l.s8.bf16 %v1447
    %v1768 = vunpack.c.l.s8.bf16 %v1448
    %v1769 = vunpack.c.l.s8.bf16 %v1449
    %v1770 = vunpack.c.h.s8.bf16 %v1446
    %v1771 = vunpack.c.h.s8.bf16 %v1447
    %v1772 = vunpack.c.h.s8.bf16 %v1448
    %v1773 = vunpack.c.h.s8.bf16 %v1449
    %v1774 = vunpack.c.l.s8.bf16 %v1450
    %v1775 = vunpack.c.l.s8.bf16 %v1451
    %v1776 = vunpack.c.l.s8.bf16 %v1452
    %v1777 = vunpack.c.l.s8.bf16 %v1453
    %v1778 = vunpack.c.h.s8.bf16 %v1450
    %v1779 = vunpack.c.h.s8.bf16 %v1451
    %v1780 = vunpack.c.h.s8.bf16 %v1452
    %v1781 = vunpack.c.h.s8.bf16 %v1453
    %v1782 = vunpack.c.l.s8.bf16 %v1454
    %v1783 = vunpack.c.l.s8.bf16 %v1455
    %v1784 = vunpack.c.l.s8.bf16 %v1456
    %v1785 = vunpack.c.l.s8.bf16 %v1457
    %v1786 = vunpack.c.h.s8.bf16 %v1454
    %v1787 = vunpack.c.h.s8.bf16 %v1455
    %v1788 = vunpack.c.h.s8.bf16 %v1456
    %v1789 = vunpack.c.h.s8.bf16 %v1457
    %v1790 = vunpack.c.l.s8.bf16 %v1458
    %v1791 = vunpack.c.l.s8.bf16 %v1459
    %v1792 = vunpack.c.l.s8.bf16 %v1460
    %v1793 = vunpack.c.l.s8.bf16 %v1461
    %v1794 = vunpack.c.h.s8.bf16 %v1458
    %v1795 = vunpack.c.h.s8.bf16 %v1459
    %v1796 = vunpack.c.h.s8.bf16 %v1460
    %v1797 = vunpack.c.h.s8.bf16 %v1461
    %v1798 = vunpack.c.l.s8.bf16 %v1462
    %v1799 = vunpack.c.l.s8.bf16 %v1463
    %v1800 = vunpack.c.l.s8.bf16 %v1464
    %v1801 = vunpack.c.l.s8.bf16 %v1465
    %v1802 = vunpack.c.h.s8.bf16 %v1462
    %v1803 = vunpack.c.h.s8.bf16 %v1463
    %v1804 = vunpack.c.h.s8.bf16 %v1464
    %v1805 = vunpack.c.h.s8.bf16 %v1465
    %v1806 = vunpack.c.l.s8.bf16 %v1466
    %v1807 = vunpack.c.l.s8.bf16 %v1467
    %v1808 = vunpack.c.l.s8.bf16 %v1468
    %v1809 = vunpack.c.l.s8.bf16 %v1469
    %v1810 = vunpack.c.h.s8.bf16 %v1466
    %v1811 = vunpack.c.h.s8.bf16 %v1467
    %v1812 = vunpack.c.h.s8.bf16 %v1468
    %v1813 = vunpack.c.h.s8.bf16 %v1469
    %v1814 = vunpack.c.l.s8.bf16 %v1470
    %v1815 = vunpack.c.l.s8.bf16 %v1471
    %v1816 = vunpack.c.l.s8.bf16 %v1472
    %v1817 = vunpack.c.l.s8.bf16 %v1473
    %v1818 = vunpack.c.h.s8.bf16 %v1470
    %v1819 = vunpack.c.h.s8.bf16 %v1471
    %v1820 = vunpack.c.h.s8.bf16 %v1472
    %v1821 = vunpack.c.h.s8.bf16 %v1473
    %v1822 = vunpack.c.l.s8.bf16 %v1474
    %v1823 = vunpack.c.l.s8.bf16 %v1475
    %v1824 = vunpack.c.l.s8.bf16 %v1476
    %v1825 = vunpack.c.l.s8.bf16 %v1477
    %v1826 = vunpack.c.h.s8.bf16 %v1474
    %v1827 = vunpack.c.h.s8.bf16 %v1475
    %v1828 = vunpack.c.h.s8.bf16 %v1476
    %v1829 = vunpack.c.h.s8.bf16 %v1477
    %v1830 = vunpack.c.l.s8.bf16 %v1478
    %v1831 = vunpack.c.l.s8.bf16 %v1479
    %v1832 = vunpack.c.l.s8.bf16 %v1480
    %v1833 = vunpack.c.l.s8.bf16 %v1481
    %v1834 = vunpack.c.h.s8.bf16 %v1478
    %v1835 = vunpack.c.h.s8.bf16 %v1479
    %v1836 = vunpack.c.h.s8.bf16 %v1480
    %v1837 = vunpack.c.h.s8.bf16 %v1481
    %v1838 = vunpack.c.l.s8.bf16 %v1482
    %v1839 = vunpack.c.l.s8.bf16 %v1483
    %v1840 = vunpack.c.l.s8.bf16 %v1484
    %v1841 = vunpack.c.l.s8.bf16 %v1485
    %v1842 = vunpack.c.h.s8.bf16 %v1482
    %v1843 = vunpack.c.h.s8.bf16 %v1483
    %v1844 = vunpack.c.h.s8.bf16 %v1484
    %v1845 = vunpack.c.h.s8.bf16 %v1485
    %v1846 = vunpack.c.l.s8.bf16 %v1486
    %v1847 = vunpack.c.l.s8.bf16 %v1487
    %v1848 = vunpack.c.l.s8.bf16 %v1488
    %v1849 = vunpack.c.l.s8.bf16 %v1489
    %v1850 = vunpack.c.h.s8.bf16 %v1486
    %v1851 = vunpack.c.h.s8.bf16 %v1487
    %v1852 = vunpack.c.h.s8.bf16 %v1488
    %v1853 = vunpack.c.h.s8.bf16 %v1489
    %v1854 = vunpack.c.l.s8.bf16 %v1490
    %v1855 = vunpack.c.l.s8.bf16 %v1491
    %v1856 = vunpack.c.l.s8.bf16 %v1492
    %v1857 = vunpack.c.l.s8.bf16 %v1493
    %v1858 = vunpack.c.h.s8.bf16 %v1490
    %v1859 = vunpack.c.h.s8.bf16 %v1491
    %v1860 = vunpack.c.h.s8.bf16 %v1492
    %v1861 = vunpack.c.h.s8.bf16 %v1493
    %v1862 = vunpack.c.l.s8.bf16 %v1494
    %v1863 = vunpack.c.l.s8.bf16 %v1495
    %v1864 = vunpack.c.l.s8.bf16 %v1496
    %v1865 = vunpack.c.l.s8.bf16 %v1497
    %v1866 = vunpack.c.h.s8.bf16 %v1494
    %v1867 = vunpack.c.h.s8.bf16 %v1495
    %v1868 = vunpack.c.h.s8.bf16 %v1496
    %v1869 = vunpack.c.h.s8.bf16 %v1497
    %v1870 = vunpack.c.l.s8.bf16 %v1498
    %v1871 = vunpack.c.l.s8.bf16 %v1499
    %v1872 = vunpack.c.l.s8.bf16 %v1500
    %v1873 = vunpack.c.l.s8.bf16 %v1501
    %v1874 = vunpack.c.h.s8.bf16 %v1498
    %v1875 = vunpack.c.h.s8.bf16 %v1499
    %v1876 = vunpack.c.h.s8.bf16 %v1500
    %v1877 = vunpack.c.h.s8.bf16 %v1501
    %v1878 = vunpack.c.l.s8.bf16 %v1502
    %v1879 = vunpack.c.l.s8.bf16 %v1503
    %v1880 = vunpack.c.l.s8.bf16 %v1504
    %v1881 = vunpack.c.l.s8.bf16 %v1505
    %v1882 = vunpack.c.h.s8.bf16 %v1502
    %v1883 = vunpack.c.h.s8.bf16 %v1503
    %v1884 = vunpack.c.h.s8.bf16 %v1504
    %v1885 = vunpack.c.h.s8.bf16 %v1505
    %v1886 = vunpack.c.l.s8.bf16 %v1506
    %v1887 = vunpack.c.l.s8.bf16 %v1507
    %v1888 = vunpack.c.l.s8.bf16 %v1508
    %v1889 = vunpack.c.l.s8.bf16 %v1509
    %v1890 = vunpack.c.h.s8.bf16 %v1506
    %v1891 = vunpack.c.h.s8.bf16 %v1507
    %v1892 = vunpack.c.h.s8.bf16 %v1508
    %v1893 = vunpack.c.h.s8.bf16 %v1509
    %v1894 = vunpack.c.l.s8.bf16 %v1510
    %v1895 = vunpack.c.l.s8.bf16 %v1511
    %v1896 = vunpack.c.l.s8.bf16 %v1512
    %v1897 = vunpack.c.l.s8.bf16 %v1513
    %v1898 = vunpack.c.h.s8.bf16 %v1510
    %v1899 = vunpack.c.h.s8.bf16 %v1511
    %v1900 = vunpack.c.h.s8.bf16 %v1512
    %v1901 = vunpack.c.h.s8.bf16 %v1513
    %v1902 = vunpack.c.l.s8.bf16 %v1514
    %v1903 = vunpack.c.l.s8.bf16 %v1515
    %v1904 = vunpack.c.l.s8.bf16 %v1516
    %v1905 = vunpack.c.l.s8.bf16 %v1517
    %v1906 = vunpack.c.h.s8.bf16 %v1514
    %v1907 = vunpack.c.h.s8.bf16 %v1515
    %v1908 = vunpack.c.h.s8.bf16 %v1516
    %v1909 = vunpack.c.h.s8.bf16 %v1517
    %v1910 = vunpack.c.l.s8.bf16 %v1518
    %v1911 = vunpack.c.l.s8.bf16 %v1519
    %v1912 = vunpack.c.l.s8.bf16 %v1520
    %v1913 = vunpack.c.l.s8.bf16 %v1521
    %v1914 = vunpack.c.h.s8.bf16 %v1518
    %v1915 = vunpack.c.h.s8.bf16 %v1519
    %v1916 = vunpack.c.h.s8.bf16 %v1520
    %v1917 = vunpack.c.h.s8.bf16 %v1521
    %v1918 = vunpack.c.l.s8.bf16 %v1522
    %v1919 = vunpack.c.l.s8.bf16 %v1523
    %v1920 = vunpack.c.l.s8.bf16 %v1524
    %v1921 = vunpack.c.l.s8.bf16 %v1525
    %v1922 = vunpack.c.h.s8.bf16 %v1522
    %v1923 = vunpack.c.h.s8.bf16 %v1523
    %v1924 = vunpack.c.h.s8.bf16 %v1524
    %v1925 = vunpack.c.h.s8.bf16 %v1525
    %v1926 = vunpack.c.l.s8.bf16 %v1526
    %v1927 = vunpack.c.l.s8.bf16 %v1527
    %v1928 = vunpack.c.l.s8.bf16 %v1528
    %v1929 = vunpack.c.l.s8.bf16 %v1529
    %v1930 = vunpack.c.h.s8.bf16 %v1526
    %v1931 = vunpack.c.h.s8.bf16 %v1527
    %v1932 = vunpack.c.h.s8.bf16 %v1528
    %v1933 = vunpack.c.h.s8.bf16 %v1529
    %v1934 = vunpack.c.l.s8.bf16 %v1530
    %v1935 = vunpack.c.l.s8.bf16 %v1531
    %v1936 = vunpack.c.l.s8.bf16 %v1532
    %v1937 = vunpack.c.l.s8.bf16 %v1533
    %v1938 = vunpack.c.h.s8.bf16 %v1530
    %v1939 = vunpack.c.h.s8.bf16 %v1531
    %v1940 = vunpack.c.h.s8.bf16 %v1532
    %v1941 = vunpack.c.h.s8.bf16 %v1533
    %v1942 = vunpack.c.l.s8.bf16 %v1534
    %v1943 = vunpack.c.l.s8.bf16 %v1535
    %v1944 = vunpack.c.l.s8.bf16 %v1536
    %v1945 = vunpack.c.l.s8.bf16 %v1537
    %v1946 = vunpack.c.h.s8.bf16 %v1534
    %v1947 = vunpack.c.h.s8.bf16 %v1535
    %v1948 = vunpack.c.h.s8.bf16 %v1536
    %v1949 = vunpack.c.h.s8.bf16 %v1537
    %v1950 = vunpack.c.l.s8.bf16 %v1538
    %v1951 = vunpack.c.l.s8.bf16 %v1539
    %v1952 = vunpack.c.l.s8.bf16 %v1540
    %v1953 = vunpack.c.l.s8.bf16 %v1541
    %v1954 = vunpack.c.h.s8.bf16 %v1538
    %v1955 = vunpack.c.h.s8.bf16 %v1539
    %v1956 = vunpack.c.h.s8.bf16 %v1540
    %v1957 = vunpack.c.h.s8.bf16 %v1541
    %v1958 = vunpack.c.l.s8.bf16 %v1542
    %v1959 = vunpack.c.l.s8.bf16 %v1543
    %v1960 = vunpack.c.l.s8.bf16 %v1544
    %v1961 = vunpack.c.l.s8.bf16 %v1545
    %v1962 = vunpack.c.h.s8.bf16 %v1542
    %v1963 = vunpack.c.h.s8.bf16 %v1543
    %v1964 = vunpack.c.h.s8.bf16 %v1544
    %v1965 = vunpack.c.h.s8.bf16 %v1545
    %v1966 = vunpack.c.l.s8.bf16 %v1546
    %v1967 = vunpack.c.l.s8.bf16 %v1547
    %v1968 = vunpack.c.l.s8.bf16 %v1548
    %v1969 = vunpack.c.l.s8.bf16 %v1549
    %v1970 = vunpack.c.h.s8.bf16 %v1546
    %v1971 = vunpack.c.h.s8.bf16 %v1547
    %v1972 = vunpack.c.h.s8.bf16 %v1548
    %v1973 = vunpack.c.h.s8.bf16 %v1549
    %v1974 = vunpack.c.l.s8.bf16 %v1550
    %v1975 = vunpack.c.l.s8.bf16 %v1551
    %v1976 = vunpack.c.l.s8.bf16 %v1552
    %v1977 = vunpack.c.l.s8.bf16 %v1553
    %v1978 = vunpack.c.h.s8.bf16 %v1550
    %v1979 = vunpack.c.h.s8.bf16 %v1551
    %v1980 = vunpack.c.h.s8.bf16 %v1552
    %v1981 = vunpack.c.h.s8.bf16 %v1553
    %v1982 = vunpack.c.l.s8.bf16 %v1554
    %v1983 = vunpack.c.l.s8.bf16 %v1555
    %v1984 = vunpack.c.l.s8.bf16 %v1556
    %v1985 = vunpack.c.l.s8.bf16 %v1557
    %v1986 = vunpack.c.h.s8.bf16 %v1554
    %v1987 = vunpack.c.h.s8.bf16 %v1555
    %v1988 = vunpack.c.h.s8.bf16 %v1556
    %v1989 = vunpack.c.h.s8.bf16 %v1557
    %v1990 = vunpack.c.l.s8.bf16 %v1558
    %v1991 = vunpack.c.l.s8.bf16 %v1559
    %v1992 = vunpack.c.l.s8.bf16 %v1560
    %v1993 = vunpack.c.l.s8.bf16 %v1561
    %v1994 = vunpack.c.h.s8.bf16 %v1558
    %v1995 = vunpack.c.h.s8.bf16 %v1559
    %v1996 = vunpack.c.h.s8.bf16 %v1560
    %v1997 = vunpack.c.h.s8.bf16 %v1561
    %v1998 = vunpack.c.l.s8.bf16 %v1562
    %v1999 = vunpack.c.l.s8.bf16 %v1563
    %v2000 = vunpack.c.l.s8.bf16 %v1564
    %v2001 = vunpack.c.l.s8.bf16 %v1565
    %v2002 = vunpack.c.h.s8.bf16 %v1562
    %v2003 = vunpack.c.h.s8.bf16 %v1563
    %v2004 = vunpack.c.h.s8.bf16 %v1564
    %v2005 = vunpack.c.h.s8.bf16 %v1565
    %v2006 = vunpack.c.l.s8.bf16 %v1566
    %v2007 = vunpack.c.l.s8.bf16 %v1567
    %v2008 = vunpack.c.l.s8.bf16 %v1568
    %v2009 = vunpack.c.l.s8.bf16 %v1569
    %v2010 = vunpack.c.h.s8.bf16 %v1566
    %v2011 = vunpack.c.h.s8.bf16 %v1567
    %v2012 = vunpack.c.h.s8.bf16 %v1568
    %v2013 = vunpack.c.h.s8.bf16 %v1569
    %v2014 = vunpack.c.l.s8.bf16 %v1570
    %v2015 = vunpack.c.l.s8.bf16 %v1571
    %v2016 = vunpack.c.l.s8.bf16 %v1572
    %v2017 = vunpack.c.l.s8.bf16 %v1573
    %v2018 = vunpack.c.h.s8.bf16 %v1570
    %v2019 = vunpack.c.h.s8.bf16 %v1571
    %v2020 = vunpack.c.h.s8.bf16 %v1572
    %v2021 = vunpack.c.h.s8.bf16 %v1573
    %v2022 = vunpack.c.l.s8.bf16 %v1574
    %v2023 = vunpack.c.l.s8.bf16 %v1575
    %v2024 = vunpack.c.l.s8.bf16 %v1576
    %v2025 = vunpack.c.l.s8.bf16 %v1577
    %v2026 = vunpack.c.h.s8.bf16 %v1574
    %v2027 = vunpack.c.h.s8.bf16 %v1575
    %v2028 = vunpack.c.h.s8.bf16 %v1576
    %v2029 = vunpack.c.h.s8.bf16 %v1577
    %v2030 = vunpack.c.l.s8.bf16 %v1578
    %v2031 = vunpack.c.l.s8.bf16 %v1579
    %v2032 = vunpack.c.l.s8.bf16 %v1580
    %v2033 = vunpack.c.l.s8.bf16 %v1581
    %v2034 = vunpack.c.h.s8.bf16 %v1578
    %v2035 = vunpack.c.h.s8.bf16 %v1579
    %v2036 = vunpack.c.h.s8.bf16 %v1580
    %v2037 = vunpack.c.h.s8.bf16 %v1581
    %v2038 = vunpack.c.l.s8.bf16 %v1582
    %v2039 = vunpack.c.l.s8.bf16 %v1583
    %v2040 = vunpack.c.l.s8.bf16 %v1584
    %v2041 = vunpack.c.l.s8.bf16 %v1585
    %v2042 = vunpack.c.h.s8.bf16 %v1582
    %v2043 = vunpack.c.h.s8.bf16 %v1583
    %v2044 = vunpack.c.h.s8.bf16 %v1584
    %v2045 = vunpack.c.h.s8.bf16 %v1585
    %v2046 = vunpack.c.l.s8.bf16 %v1586
    %v2047 = vunpack.c.l.s8.bf16 %v1587
    %v2048 = vunpack.c.l.s8.bf16 %v1588
    %v2049 = vunpack.c.l.s8.bf16 %v1589
    %v2050 = vunpack.c.h.s8.bf16 %v1586
    %v2051 = vunpack.c.h.s8.bf16 %v1587
    %v2052 = vunpack.c.h.s8.bf16 %v1588
    %v2053 = vunpack.c.h.s8.bf16 %v1589
    %v2054 = vunpack.c.l.s8.bf16 %v1590
    %v2055 = vunpack.c.l.s8.bf16 %v1591
    %v2056 = vunpack.c.l.s8.bf16 %v1592
    %v2057 = vunpack.c.l.s8.bf16 %v1593
    %v2058 = vunpack.c.h.s8.bf16 %v1590
    %v2059 = vunpack.c.h.s8.bf16 %v1591
    %v2060 = vunpack.c.h.s8.bf16 %v1592
    %v2061 = vunpack.c.h.s8.bf16 %v1593
    %v2062 = vunpack.c.l.s8.bf16 %v1594
    %v2063 = vunpack.c.l.s8.bf16 %v1595
    %v2064 = vunpack.c.l.s8.bf16 %v1596
    %v2065 = vunpack.c.l.s8.bf16 %v1597
    %v2066 = vunpack.c.h.s8.bf16 %v1594
    %v2067 = vunpack.c.h.s8.bf16 %v1595
    %v2068 = vunpack.c.h.s8.bf16 %v1596
    %v2069 = vunpack.c.h.s8.bf16 %v1597
    %v2070 = vunpack.c.l.s8.bf16 %v1598
    %v2071 = vunpack.c.l.s8.bf16 %v1599
    %v2072 = vunpack.c.l.s8.bf16 %v1600
    %v2073 = vunpack.c.l.s8.bf16 %v1601
    %v2074 = vunpack.c.h.s8.bf16 %v1598
    %v2075 = vunpack.c.h.s8.bf16 %v1599
    %v2076 = vunpack.c.h.s8.bf16 %v1600
    %v2077 = vunpack.c.h.s8.bf16 %v1601
    %v2078 = vunpack.c.l.s8.bf16 %v1602
    %v2079 = vunpack.c.l.s8.bf16 %v1603
    %v2080 = vunpack.c.l.s8.bf16 %v1604
    %v2081 = vunpack.c.l.s8.bf16 %v1605
    %v2082 = vunpack.c.h.s8.bf16 %v1602
    %v2083 = vunpack.c.h.s8.bf16 %v1603
    %v2084 = vunpack.c.h.s8.bf16 %v1604
    %v2085 = vunpack.c.h.s8.bf16 %v1605
    %v2086 = vunpack.c.l.s8.bf16 %v1606
    %v2087 = vunpack.c.l.s8.bf16 %v1607
    %v2088 = vunpack.c.l.s8.bf16 %v1608
    %v2089 = vunpack.c.l.s8.bf16 %v1609
    %v2090 = vunpack.c.h.s8.bf16 %v1606
    %v2091 = vunpack.c.h.s8.bf16 %v1607
    %v2092 = vunpack.c.h.s8.bf16 %v1608
    %v2093 = vunpack.c.h.s8.bf16 %v1609
    %v2094 = vunpack.c.l.s8.bf16 %v1610
    %v2095 = vunpack.c.l.s8.bf16 %v1611
    %v2096 = vunpack.c.l.s8.bf16 %v1612
    %v2097 = vunpack.c.l.s8.bf16 %v1613
    %v2098 = vunpack.c.h.s8.bf16 %v1610
    %v2099 = vunpack.c.h.s8.bf16 %v1611
    %v2100 = vunpack.c.h.s8.bf16 %v1612
    %v2101 = vunpack.c.h.s8.bf16 %v1613
    %v2102 = vunpack.c.l.s8.bf16 %v1614
    %v2103 = vunpack.c.l.s8.bf16 %v1615
    %v2104 = vunpack.c.l.s8.bf16 %v1616
    %v2105 = vunpack.c.l.s8.bf16 %v1617
    %v2106 = vunpack.c.h.s8.bf16 %v1614
    %v2107 = vunpack.c.h.s8.bf16 %v1615
    %v2108 = vunpack.c.h.s8.bf16 %v1616
    %v2109 = vunpack.c.h.s8.bf16 %v1617
    %v2110 = vunpack.c.l.s8.bf16 %v1618
    %v2111 = vunpack.c.l.s8.bf16 %v1619
    %v2112 = vunpack.c.l.s8.bf16 %v1620
    %v2113 = vunpack.c.l.s8.bf16 %v1621
    %v2114 = vunpack.c.h.s8.bf16 %v1618
    %v2115 = vunpack.c.h.s8.bf16 %v1619
    %v2116 = vunpack.c.h.s8.bf16 %v1620
    %v2117 = vunpack.c.h.s8.bf16 %v1621
    %v2118 = vunpack.c.l.s8.bf16 %v1622
    %v2119 = vunpack.c.l.s8.bf16 %v1623
    %v2120 = vunpack.c.l.s8.bf16 %v1624
    %v2121 = vunpack.c.l.s8.bf16 %v1625
    %v2122 = vunpack.c.h.s8.bf16 %v1622
    %v2123 = vunpack.c.h.s8.bf16 %v1623
    %v2124 = vunpack.c.h.s8.bf16 %v1624
    %v2125 = vunpack.c.h.s8.bf16 %v1625
    %v2126 = vunpack.c.l.s8.bf16 %v1626
    %v2127 = vunpack.c.l.s8.bf16 %v1627
    %v2128 = vunpack.c.l.s8.bf16 %v1628
    %v2129 = vunpack.c.l.s8.bf16 %v1629
    %v2130 = vunpack.c.h.s8.bf16 %v1626
    %v2131 = vunpack.c.h.s8.bf16 %v1627
    %v2132 = vunpack.c.h.s8.bf16 %v1628
    %v2133 = vunpack.c.h.s8.bf16 %v1629
    %v2134 = vunpack.c.l.s8.bf16 %v1630
    %v2135 = vunpack.c.l.s8.bf16 %v1631
    %v2136 = vunpack.c.l.s8.bf16 %v1632
    %v2137 = vunpack.c.l.s8.bf16 %v1633
    %v2138 = vunpack.c.h.s8.bf16 %v1630
    %v2139 = vunpack.c.h.s8.bf16 %v1631
    %v2140 = vunpack.c.h.s8.bf16 %v1632
    %v2141 = vunpack.c.h.s8.bf16 %v1633
    %v2142 = vunpack.c.l.s8.bf16 %v1634
    %v2143 = vunpack.c.l.s8.bf16 %v1635
    %v2144 = vunpack.c.l.s8.bf16 %v1636
    %v2145 = vunpack.c.l.s8.bf16 %v1637
    %v2146 = vunpack.c.h.s8.bf16 %v1634
    %v2147 = vunpack.c.h.s8.bf16 %v1635
    %v2148 = vunpack.c.h.s8.bf16 %v1636
    %v2149 = vunpack.c.h.s8.bf16 %v1637
    %2150 = vmatprep.subr.bf16.mxu0 %v1667
    %2151 = vmatpush1.bf16.msra.mxu0 %v1666
    %2152 = vmatprep.subr.bf16.mxu0 %v1663
    %2153 = vmatpush1.bf16.msra.mxu0 %v1662
    %2154 = vmatprep.subr.bf16.mxu0 %v1659
    %2155 = vmatpush1.bf16.msra.mxu0 %v1658
    %2156 = vmatprep.subr.bf16.mxu0 %v1655
    %2157 = vmatpush1.bf16.msra.mxu0 %v1654
    %2158 = vmatprep.subr.bf16.mxu0 %v1651
    %2159 = vmatpush1.bf16.msra.mxu0 %v1650
    %2160 = vmatprep.subr.bf16.mxu0 %v1647
    %2161 = vmatpush1.bf16.msra.mxu0 %v1646
    %2162 = vmatprep.subr.bf16.mxu0 %v1643
    %2163 = vmatpush1.bf16.msra.mxu0 %v1642
    %2164 = vmatprep.subr.bf16.mxu0 %v1639
    %2165 = vmatpush1.bf16.msra.mxu0 %v1638
    %2166 = vmatprep.subr.bf16.mxu0 %v1699
    %2167 = vmatpush2.bf16.msra.mxu0 %v1698
    %2168 = vmatprep.subr.bf16.mxu0 %v1695
    %2169 = vmatpush2.bf16.msra.mxu0 %v1694
    %2170 = vmatprep.subr.bf16.mxu0 %v1691
    %2171 = vmatpush2.bf16.msra.mxu0 %v1690
    %2172 = vmatprep.subr.bf16.mxu0 %v1687
    %2173 = vmatpush2.bf16.msra.mxu0 %v1686
    %2174 = vmatprep.subr.bf16.mxu0 %v1683
    %2175 = vmatpush2.bf16.msra.mxu0 %v1682
    %2176 = vmatprep.subr.bf16.mxu0 %v1679
    %2177 = vmatpush2.bf16.msra.mxu0 %v1678
    %2178 = vmatprep.subr.bf16.mxu0 %v1675
    %2179 = vmatpush2.bf16.msra.mxu0 %v1674
    %2180 = vmatprep.subr.bf16.mxu0 %v1671
    %2181 = vmatpush2.bf16.msra.mxu0 %v1670
    %2182 = vmatprep.mubr.bf16.mxu0 %v1367
    %2183 = vmatmul.mubr.bf16.gmra.mxu0 %v1366
    %v2184 = vpop.f32.mrf.mxu0
    %v2185 = vadd.f32 0.0, %v2184
    %v2186 = vpop.f32.mrf.mxu0
    %v2187 = vadd.f32 0.0, %v2186
    %v2188 = vpop.f32.mrf.mxu0
    %v2189 = vpop.f32.mrf.mxu0
    %2190 = vdwg.mxu0
    %2191 = vmatprep.subr.bf16.mxu0 %v1731
    %2192 = vmatpush1.bf16.msra.mxu0 %v1730
    %2193 = vmatprep.subr.bf16.mxu0 %v1727
    %2194 = vmatpush1.bf16.msra.mxu0 %v1726
    %2195 = vmatprep.subr.bf16.mxu0 %v1723
    %2196 = vmatpush1.bf16.msra.mxu0 %v1722
    %2197 = vmatprep.subr.bf16.mxu0 %v1719
    %2198 = vmatpush1.bf16.msra.mxu0 %v1718
    %2199 = vmatprep.subr.bf16.mxu0 %v1715
    %2200 = vmatpush1.bf16.msra.mxu0 %v1714
    %2201 = vmatprep.subr.bf16.mxu0 %v1711
    %2202 = vmatpush1.bf16.msra.mxu0 %v1710
    %2203 = vmatprep.subr.bf16.mxu0 %v1707
    %2204 = vmatpush1.bf16.msra.mxu0 %v1706
    %2205 = vmatprep.subr.bf16.mxu0 %v1703
    %2206 = vmatpush1.bf16.msra.mxu0 %v1702
    %2207 = vmatprep.subr.bf16.mxu0 %v1763
    %2208 = vmatpush2.bf16.msra.mxu0 %v1762
    %2209 = vmatprep.subr.bf16.mxu0 %v1759
    %2210 = vmatpush2.bf16.msra.mxu0 %v1758
    %2211 = vmatprep.subr.bf16.mxu0 %v1755
    %2212 = vmatpush2.bf16.msra.mxu0 %v1754
    %2213 = vmatprep.subr.bf16.mxu0 %v1751
    %2214 = vmatpush2.bf16.msra.mxu0 %v1750
    %2215 = vmatprep.subr.bf16.mxu0 %v1747
    %2216 = vmatpush2.bf16.msra.mxu0 %v1746
    %2217 = vmatprep.subr.bf16.mxu0 %v1743
    %2218 = vmatpush2.bf16.msra.mxu0 %v1742
    %2219 = vmatprep.subr.bf16.mxu0 %v1739
    %2220 = vmatpush2.bf16.msra.mxu0 %v1738
    %2221 = vmatprep.subr.bf16.mxu0 %v1735
    %2222 = vmatpush2.bf16.msra.mxu0 %v1734
    %2223 = vmatprep.mubr.bf16.mxu0 %v1369
    %2224 = vmatmul.mubr.bf16.gmra.mxu0 %v1368
    %v2225 = vpop.f32.mrf.mxu0
    %v2226 = vadd.f32 %v2185, %v2225
    %v2227 = vpop.f32.mrf.mxu0
    %v2228 = vadd.f32 %v2187, %v2227
    %v2229 = vpop.f32.mrf.mxu0
    %v2230 = vpop.f32.mrf.mxu0
    %2231 = vdwg.mxu0
    %2232 = vmatprep.subr.bf16.mxu0 %v1795
    %2233 = vmatpush1.bf16.msra.mxu0 %v1794
    %2234 = vmatprep.subr.bf16.mxu0 %v1791
    %2235 = vmatpush1.bf16.msra.mxu0 %v1790
    %2236 = vmatprep.subr.bf16.mxu0 %v1787
    %2237 = vmatpush1.bf16.msra.mxu0 %v1786
    %2238 = vmatprep.subr.bf16.mxu0 %v1783
    %2239 = vmatpush1.bf16.msra.mxu0 %v1782
    %2240 = vmatprep.subr.bf16.mxu0 %v1779
    %2241 = vmatpush1.bf16.msra.mxu0 %v1778
    %2242 = vmatprep.subr.bf16.mxu0 %v1775
    %2243 = vmatpush1.bf16.msra.mxu0 %v1774
    %2244 = vmatprep.subr.bf16.mxu0 %v1771
    %2245 = vmatpush1.bf16.msra.mxu0 %v1770
    %2246 = vmatprep.subr.bf16.mxu0 %v1767
    %2247 = vmatpush1.bf16.msra.mxu0 %v1766
    %2248 = vmatprep.subr.bf16.mxu0 %v1827
    %2249 = vmatpush2.bf16.msra.mxu0 %v1826
    %2250 = vmatprep.subr.bf16.mxu0 %v1823
    %2251 = vmatpush2.bf16.msra.mxu0 %v1822
    %2252 = vmatprep.subr.bf16.mxu0 %v1819
    %2253 = vmatpush2.bf16.msra.mxu0 %v1818
    %2254 = vmatprep.subr.bf16.mxu0 %v1815
    %2255 = vmatpush2.bf16.msra.mxu0 %v1814
    %2256 = vmatprep.subr.bf16.mxu0 %v1811
    %2257 = vmatpush2.bf16.msra.mxu0 %v1810
    %2258 = vmatprep.subr.bf16.mxu0 %v1807
    %2259 = vmatpush2.bf16.msra.mxu0 %v1806
    %2260 = vmatprep.subr.bf16.mxu0 %v1803
    %2261 = vmatpush2.bf16.msra.mxu0 %v1802
    %2262 = vmatprep.subr.bf16.mxu0 %v1799
    %2263 = vmatpush2.bf16.msra.mxu0 %v1798
    %2264 = vmatprep.mubr.bf16.mxu0 %v1371
    %2265 = vmatmul.mubr.bf16.gmra.mxu0 %v1370
    %v2266 = vpop.f32.mrf.mxu0
    %v2267 = vadd.f32 %v2226, %v2266
    %v2268 = vpop.f32.mrf.mxu0
    %v2269 = vadd.f32 %v2228, %v2268
    %v2270 = vpop.f32.mrf.mxu0
    %v2271 = vpop.f32.mrf.mxu0
    %2272 = vdwg.mxu0
    %2273 = vmatprep.subr.bf16.mxu0 %v1859
    %2274 = vmatpush1.bf16.msra.mxu0 %v1858
    %2275 = vmatprep.subr.bf16.mxu0 %v1855
    %2276 = vmatpush1.bf16.msra.mxu0 %v1854
    %2277 = vmatprep.subr.bf16.mxu0 %v1851
    %2278 = vmatpush1.bf16.msra.mxu0 %v1850
    %2279 = vmatprep.subr.bf16.mxu0 %v1847
    %2280 = vmatpush1.bf16.msra.mxu0 %v1846
    %2281 = vmatprep.subr.bf16.mxu0 %v1843
    %2282 = vmatpush1.bf16.msra.mxu0 %v1842
    %2283 = vmatprep.subr.bf16.mxu0 %v1839
    %2284 = vmatpush1.bf16.msra.mxu0 %v1838
    %2285 = vmatprep.subr.bf16.mxu0 %v1835
    %2286 = vmatpush1.bf16.msra.mxu0 %v1834
    %2287 = vmatprep.subr.bf16.mxu0 %v1831
    %2288 = vmatpush1.bf16.msra.mxu0 %v1830
    %2289 = vmatprep.subr.bf16.mxu0 %v1891
    %2290 = vmatpush2.bf16.msra.mxu0 %v1890
    %2291 = vmatprep.subr.bf16.mxu0 %v1887
    %2292 = vmatpush2.bf16.msra.mxu0 %v1886
    %2293 = vmatprep.subr.bf16.mxu0 %v1883
    %2294 = vmatpush2.bf16.msra.mxu0 %v1882
    %2295 = vmatprep.subr.bf16.mxu0 %v1879
    %2296 = vmatpush2.bf16.msra.mxu0 %v1878
    %2297 = vmatprep.subr.bf16.mxu0 %v1875
    %2298 = vmatpush2.bf16.msra.mxu0 %v1874
    %2299 = vmatprep.subr.bf16.mxu0 %v1871
    %2300 = vmatpush2.bf16.msra.mxu0 %v1870
    %2301 = vmatprep.subr.bf16.mxu0 %v1867
    %2302 = vmatpush2.bf16.msra.mxu0 %v1866
    %2303 = vmatprep.subr.bf16.mxu0 %v1863
    %2304 = vmatpush2.bf16.msra.mxu0 %v1862
    %2305 = vmatprep.mubr.bf16.mxu0 %v1373
    %2306 = vmatmul.mubr.bf16.gmra.mxu0 %v1372
    %v2307 = vpop.f32.mrf.mxu0
    %v2308 = vadd.f32 %v2267, %v2307
    %v2309 = vpop.f32.mrf.mxu0
    %v2310 = vadd.f32 %v2269, %v2309
    %v2311 = vpop.f32.mrf.mxu0
    %v2312 = vpop.f32.mrf.mxu0
    %2313 = vdwg.mxu0
    %2314 = vmatprep.subr.bf16.mxu0 %v1923
    %2315 = vmatpush1.bf16.msra.mxu0 %v1922
    %2316 = vmatprep.subr.bf16.mxu0 %v1919
    %2317 = vmatpush1.bf16.msra.mxu0 %v1918
    %2318 = vmatprep.subr.bf16.mxu0 %v1915
    %2319 = vmatpush1.bf16.msra.mxu0 %v1914
    %2320 = vmatprep.subr.bf16.mxu0 %v1911
    %2321 = vmatpush1.bf16.msra.mxu0 %v1910
    %2322 = vmatprep.subr.bf16.mxu0 %v1907
    %2323 = vmatpush1.bf16.msra.mxu0 %v1906
    %2324 = vmatprep.subr.bf16.mxu0 %v1903
    %2325 = vmatpush1.bf16.msra.mxu0 %v1902
    %2326 = vmatprep.subr.bf16.mxu0 %v1899
    %2327 = vmatpush1.bf16.msra.mxu0 %v1898
    %2328 = vmatprep.subr.bf16.mxu0 %v1895
    %2329 = vmatpush1.bf16.msra.mxu0 %v1894
    %2330 = vmatprep.subr.bf16.mxu0 %v1955
    %2331 = vmatpush2.bf16.msra.mxu0 %v1954
    %2332 = vmatprep.subr.bf16.mxu0 %v1951
    %2333 = vmatpush2.bf16.msra.mxu0 %v1950
    %2334 = vmatprep.subr.bf16.mxu0 %v1947
    %2335 = vmatpush2.bf16.msra.mxu0 %v1946
    %2336 = vmatprep.subr.bf16.mxu0 %v1943
    %2337 = vmatpush2.bf16.msra.mxu0 %v1942
    %2338 = vmatprep.subr.bf16.mxu0 %v1939
    %2339 = vmatpush2.bf16.msra.mxu0 %v1938
    %2340 = vmatprep.subr.bf16.mxu0 %v1935
    %2341 = vmatpush2.bf16.msra.mxu0 %v1934
    %2342 = vmatprep.subr.bf16.mxu0 %v1931
    %2343 = vmatpush2.bf16.msra.mxu0 %v1930
    %2344 = vmatprep.subr.bf16.mxu0 %v1927
    %2345 = vmatpush2.bf16.msra.mxu0 %v1926
    %2346 = vmatprep.mubr.bf16.mxu0 %v1375
    %2347 = vmatmul.mubr.bf16.gmra.mxu0 %v1374
    %v2348 = vpop.f32.mrf.mxu0
    %v2349 = vadd.f32 %v2308, %v2348
    %v2350 = vpop.f32.mrf.mxu0
    %v2351 = vadd.f32 %v2310, %v2350
    %v2352 = vpop.f32.mrf.mxu0
    %v2353 = vpop.f32.mrf.mxu0
    %2354 = vdwg.mxu0
    %2355 = vmatprep.subr.bf16.mxu0 %v1987
    %2356 = vmatpush1.bf16.msra.mxu0 %v1986
    %2357 = vmatprep.subr.bf16.mxu0 %v1983
    %2358 = vmatpush1.bf16.msra.mxu0 %v1982
    %2359 = vmatprep.subr.bf16.mxu0 %v1979
    %2360 = vmatpush1.bf16.msra.mxu0 %v1978
    %2361 = vmatprep.subr.bf16.mxu0 %v1975
    %2362 = vmatpush1.bf16.msra.mxu0 %v1974
    %2363 = vmatprep.subr.bf16.mxu0 %v1971
    %2364 = vmatpush1.bf16.msra.mxu0 %v1970
    %2365 = vmatprep.subr.bf16.mxu0 %v1967
    %2366 = vmatpush1.bf16.msra.mxu0 %v1966
    %2367 = vmatprep.subr.bf16.mxu0 %v1963
    %2368 = vmatpush1.bf16.msra.mxu0 %v1962
    %2369 = vmatprep.subr.bf16.mxu0 %v1959
    %2370 = vmatpush1.bf16.msra.mxu0 %v1958
    %2371 = vmatprep.subr.bf16.mxu0 %v2019
    %2372 = vmatpush2.bf16.msra.mxu0 %v2018
    %2373 = vmatprep.subr.bf16.mxu0 %v2015
    %2374 = vmatpush2.bf16.msra.mxu0 %v2014
    %2375 = vmatprep.subr.bf16.mxu0 %v2011
    %2376 = vmatpush2.bf16.msra.mxu0 %v2010
    %2377 = vmatprep.subr.bf16.mxu0 %v2007
    %2378 = vmatpush2.bf16.msra.mxu0 %v2006
    %2379 = vmatprep.subr.bf16.mxu0 %v2003
    %2380 = vmatpush2.bf16.msra.mxu0 %v2002
    %2381 = vmatprep.subr.bf16.mxu0 %v1999
    %2382 = vmatpush2.bf16.msra.mxu0 %v1998
    %2383 = vmatprep.subr.bf16.mxu0 %v1995
    %2384 = vmatpush2.bf16.msra.mxu0 %v1994
    %2385 = vmatprep.subr.bf16.mxu0 %v1991
    %2386 = vmatpush2.bf16.msra.mxu0 %v1990
    %2387 = vmatprep.mubr.bf16.mxu0 %v1377
    %2388 = vmatmul.mubr.bf16.gmra.mxu0 %v1376
    %v2389 = vpop.f32.mrf.mxu0
    %v2390 = vadd.f32 %v2349, %v2389
    %v2391 = vpop.f32.mrf.mxu0
    %v2392 = vadd.f32 %v2351, %v2391
    %v2393 = vpop.f32.mrf.mxu0
    %v2394 = vpop.f32.mrf.mxu0
    %2395 = vdwg.mxu0
    %2396 = vmatprep.subr.bf16.mxu0 %v2051
    %2397 = vmatpush1.bf16.msra.mxu0 %v2050
    %2398 = vmatprep.subr.bf16.mxu0 %v2047
    %2399 = vmatpush1.bf16.msra.mxu0 %v2046
    %2400 = vmatprep.subr.bf16.mxu0 %v2043
    %2401 = vmatpush1.bf16.msra.mxu0 %v2042
    %2402 = vmatprep.subr.bf16.mxu0 %v2039
    %2403 = vmatpush1.bf16.msra.mxu0 %v2038
    %2404 = vmatprep.subr.bf16.mxu0 %v2035
    %2405 = vmatpush1.bf16.msra.mxu0 %v2034
    %2406 = vmatprep.subr.bf16.mxu0 %v2031
    %2407 = vmatpush1.bf16.msra.mxu0 %v2030
    %2408 = vmatprep.subr.bf16.mxu0 %v2027
    %2409 = vmatpush1.bf16.msra.mxu0 %v2026
    %2410 = vmatprep.subr.bf16.mxu0 %v2023
    %2411 = vmatpush1.bf16.msra.mxu0 %v2022
    %2412 = vmatprep.subr.bf16.mxu0 %v2083
    %2413 = vmatpush2.bf16.msra.mxu0 %v2082
    %2414 = vmatprep.subr.bf16.mxu0 %v2079
    %2415 = vmatpush2.bf16.msra.mxu0 %v2078
    %2416 = vmatprep.subr.bf16.mxu0 %v2075
    %2417 = vmatpush2.bf16.msra.mxu0 %v2074
    %2418 = vmatprep.subr.bf16.mxu0 %v2071
    %2419 = vmatpush2.bf16.msra.mxu0 %v2070
    %2420 = vmatprep.subr.bf16.mxu0 %v2067
    %2421 = vmatpush2.bf16.msra.mxu0 %v2066
    %2422 = vmatprep.subr.bf16.mxu0 %v2063
    %2423 = vmatpush2.bf16.msra.mxu0 %v2062
    %2424 = vmatprep.subr.bf16.mxu0 %v2059
    %2425 = vmatpush2.bf16.msra.mxu0 %v2058
    %2426 = vmatprep.subr.bf16.mxu0 %v2055
    %2427 = vmatpush2.bf16.msra.mxu0 %v2054
    %2428 = vmatprep.mubr.bf16.mxu0 %v1379
    %2429 = vmatmul.mubr.bf16.gmra.mxu0 %v1378
    %v2430 = vpop.f32.mrf.mxu0
    %v2431 = vadd.f32 %v2390, %v2430
    %v2432 = vpop.f32.mrf.mxu0
    %v2433 = vadd.f32 %v2392, %v2432
    %v2434 = vpop.f32.mrf.mxu0
    %v2435 = vpop.f32.mrf.mxu0
    %2436 = vdwg.mxu0
    %2437 = vmatprep.subr.bf16.mxu0 %v2115
    %2438 = vmatpush1.bf16.msra.mxu0 %v2114
    %2439 = vmatprep.subr.bf16.mxu0 %v2111
    %2440 = vmatpush1.bf16.msra.mxu0 %v2110
    %2441 = vmatprep.subr.bf16.mxu0 %v2107
    %2442 = vmatpush1.bf16.msra.mxu0 %v2106
    %2443 = vmatprep.subr.bf16.mxu0 %v2103
    %2444 = vmatpush1.bf16.msra.mxu0 %v2102
    %2445 = vmatprep.subr.bf16.mxu0 %v2099
    %2446 = vmatpush1.bf16.msra.mxu0 %v2098
    %2447 = vmatprep.subr.bf16.mxu0 %v2095
    %2448 = vmatpush1.bf16.msra.mxu0 %v2094
    %2449 = vmatprep.subr.bf16.mxu0 %v2091
    %2450 = vmatpush1.bf16.msra.mxu0 %v2090
    %2451 = vmatprep.subr.bf16.mxu0 %v2087
    %2452 = vmatpush1.bf16.msra.mxu0 %v2086
    %2453 = vmatprep.subr.bf16.mxu0 %v2147
    %2454 = vmatpush2.bf16.msra.mxu0 %v2146
    %2455 = vmatprep.subr.bf16.mxu0 %v2143
    %2456 = vmatpush2.bf16.msra.mxu0 %v2142
    %2457 = vmatprep.subr.bf16.mxu0 %v2139
    %2458 = vmatpush2.bf16.msra.mxu0 %v2138
    %2459 = vmatprep.subr.bf16.mxu0 %v2135
    %2460 = vmatpush2.bf16.msra.mxu0 %v2134
    %2461 = vmatprep.subr.bf16.mxu0 %v2131
    %2462 = vmatpush2.bf16.msra.mxu0 %v2130
    %2463 = vmatprep.subr.bf16.mxu0 %v2127
    %2464 = vmatpush2.bf16.msra.mxu0 %v2126
    %2465 = vmatprep.subr.bf16.mxu0 %v2123
    %2466 = vmatpush2.bf16.msra.mxu0 %v2122
    %2467 = vmatprep.subr.bf16.mxu0 %v2119
    %2468 = vmatpush2.bf16.msra.mxu0 %v2118
    %2469 = vmatprep.mubr.bf16.mxu0 %v1381
    %2470 = vmatmul.mubr.bf16.gmra.mxu0 %v1380
    %v2471 = vpop.f32.mrf.mxu0
    %v2472 = vadd.f32 %v2431, %v2471
    %v2473 = vpop.f32.mrf.mxu0
    %v2474 = vadd.f32 %v2433, %v2473
    %v2475 = vpop.f32.mrf.mxu0
    %v2476 = vpop.f32.mrf.mxu0
    %2477 = vdwg.mxu0
    %2478 = vmatprep.subr.bf16.mxu0 %v1669
    %2479 = vmatpush1.bf16.msra.mxu0 %v1668
    %2480 = vmatprep.subr.bf16.mxu0 %v1665
    %2481 = vmatpush1.bf16.msra.mxu0 %v1664
    %2482 = vmatprep.subr.bf16.mxu0 %v1661
    %2483 = vmatpush1.bf16.msra.mxu0 %v1660
    %2484 = vmatprep.subr.bf16.mxu0 %v1657
    %2485 = vmatpush1.bf16.msra.mxu0 %v1656
    %2486 = vmatprep.subr.bf16.mxu0 %v1653
    %2487 = vmatpush1.bf16.msra.mxu0 %v1652
    %2488 = vmatprep.subr.bf16.mxu0 %v1649
    %2489 = vmatpush1.bf16.msra.mxu0 %v1648
    %2490 = vmatprep.subr.bf16.mxu0 %v1645
    %2491 = vmatpush1.bf16.msra.mxu0 %v1644
    %2492 = vmatprep.subr.bf16.mxu0 %v1641
    %2493 = vmatpush1.bf16.msra.mxu0 %v1640
    %2494 = vmatprep.subr.bf16.mxu0 %v1701
    %2495 = vmatpush2.bf16.msra.mxu0 %v1700
    %2496 = vmatprep.subr.bf16.mxu0 %v1697
    %2497 = vmatpush2.bf16.msra.mxu0 %v1696
    %2498 = vmatprep.subr.bf16.mxu0 %v1693
    %2499 = vmatpush2.bf16.msra.mxu0 %v1692
    %2500 = vmatprep.subr.bf16.mxu0 %v1689
    %2501 = vmatpush2.bf16.msra.mxu0 %v1688
    %2502 = vmatprep.subr.bf16.mxu0 %v1685
    %2503 = vmatpush2.bf16.msra.mxu0 %v1684
    %2504 = vmatprep.subr.bf16.mxu0 %v1681
    %2505 = vmatpush2.bf16.msra.mxu0 %v1680
    %2506 = vmatprep.subr.bf16.mxu0 %v1677
    %2507 = vmatpush2.bf16.msra.mxu0 %v1676
    %2508 = vmatprep.subr.bf16.mxu0 %v1673
    %2509 = vmatpush2.bf16.msra.mxu0 %v1672
    %2510 = vmatprep.mubr.bf16.mxu0 %v1367
    %2511 = vmatmul.mubr.bf16.gmra.mxu0 %v1366
    %v2512 = vpop.f32.mrf.mxu0
    %v2513 = vadd.f32 0.0, %v2512
    %v2514 = vpop.f32.mrf.mxu0
    %v2515 = vadd.f32 0.0, %v2514
    %v2516 = vpop.f32.mrf.mxu0
    %v2517 = vpop.f32.mrf.mxu0
    %2518 = vdwg.mxu0
    %2519 = vmatprep.subr.bf16.mxu0 %v1733
    %2520 = vmatpush1.bf16.msra.mxu0 %v1732
    %2521 = vmatprep.subr.bf16.mxu0 %v1729
    %2522 = vmatpush1.bf16.msra.mxu0 %v1728
    %2523 = vmatprep.subr.bf16.mxu0 %v1725
    %2524 = vmatpush1.bf16.msra.mxu0 %v1724
    %2525 = vmatprep.subr.bf16.mxu0 %v1721
    %2526 = vmatpush1.bf16.msra.mxu0 %v1720
    %2527 = vmatprep.subr.bf16.mxu0 %v1717
    %2528 = vmatpush1.bf16.msra.mxu0 %v1716
    %2529 = vmatprep.subr.bf16.mxu0 %v1713
    %2530 = vmatpush1.bf16.msra.mxu0 %v1712
    %2531 = vmatprep.subr.bf16.mxu0 %v1709
    %2532 = vmatpush1.bf16.msra.mxu0 %v1708
    %2533 = vmatprep.subr.bf16.mxu0 %v1705
    %2534 = vmatpush1.bf16.msra.mxu0 %v1704
    %2535 = vmatprep.subr.bf16.mxu0 %v1765
    %2536 = vmatpush2.bf16.msra.mxu0 %v1764
    %2537 = vmatprep.subr.bf16.mxu0 %v1761
    %2538 = vmatpush2.bf16.msra.mxu0 %v1760
    %2539 = vmatprep.subr.bf16.mxu0 %v1757
    %2540 = vmatpush2.bf16.msra.mxu0 %v1756
    %2541 = vmatprep.subr.bf16.mxu0 %v1753
    %2542 = vmatpush2.bf16.msra.mxu0 %v1752
    %2543 = vmatprep.subr.bf16.mxu0 %v1749
    %2544 = vmatpush2.bf16.msra.mxu0 %v1748
    %2545 = vmatprep.subr.bf16.mxu0 %v1745
    %2546 = vmatpush2.bf16.msra.mxu0 %v1744
    %2547 = vmatprep.subr.bf16.mxu0 %v1741
    %2548 = vmatpush2.bf16.msra.mxu0 %v1740
    %2549 = vmatprep.subr.bf16.mxu0 %v1737
    %2550 = vmatpush2.bf16.msra.mxu0 %v1736
    %2551 = vmatprep.mubr.bf16.mxu0 %v1369
    %2552 = vmatmul.mubr.bf16.gmra.mxu0 %v1368
    %v2553 = vpop.f32.mrf.mxu0
    %v2554 = vadd.f32 %v2513, %v2553
    %v2555 = vpop.f32.mrf.mxu0
    %v2556 = vadd.f32 %v2515, %v2555
    %v2557 = vpop.f32.mrf.mxu0
    %v2558 = vpop.f32.mrf.mxu0
    %2559 = vdwg.mxu0
    %2560 = vmatprep.subr.bf16.mxu0 %v1797
    %2561 = vmatpush1.bf16.msra.mxu0 %v1796
    %2562 = vmatprep.subr.bf16.mxu0 %v1793
    %2563 = vmatpush1.bf16.msra.mxu0 %v1792
    %2564 = vmatprep.subr.bf16.mxu0 %v1789
    %2565 = vmatpush1.bf16.msra.mxu0 %v1788
    %2566 = vmatprep.subr.bf16.mxu0 %v1785
    %2567 = vmatpush1.bf16.msra.mxu0 %v1784
    %2568 = vmatprep.subr.bf16.mxu0 %v1781
    %2569 = vmatpush1.bf16.msra.mxu0 %v1780
    %2570 = vmatprep.subr.bf16.mxu0 %v1777
    %2571 = vmatpush1.bf16.msra.mxu0 %v1776
    %2572 = vmatprep.subr.bf16.mxu0 %v1773
    %2573 = vmatpush1.bf16.msra.mxu0 %v1772
    %2574 = vmatprep.subr.bf16.mxu0 %v1769
    %2575 = vmatpush1.bf16.msra.mxu0 %v1768
    %2576 = vmatprep.subr.bf16.mxu0 %v1829
    %2577 = vmatpush2.bf16.msra.mxu0 %v1828
    %2578 = vmatprep.subr.bf16.mxu0 %v1825
    %2579 = vmatpush2.bf16.msra.mxu0 %v1824
    %2580 = vmatprep.subr.bf16.mxu0 %v1821
    %2581 = vmatpush2.bf16.msra.mxu0 %v1820
    %2582 = vmatprep.subr.bf16.mxu0 %v1817
    %2583 = vmatpush2.bf16.msra.mxu0 %v1816
    %2584 = vmatprep.subr.bf16.mxu0 %v1813
    %2585 = vmatpush2.bf16.msra.mxu0 %v1812
    %2586 = vmatprep.subr.bf16.mxu0 %v1809
    %2587 = vmatpush2.bf16.msra.mxu0 %v1808
    %2588 = vmatprep.subr.bf16.mxu0 %v1805
    %2589 = vmatpush2.bf16.msra.mxu0 %v1804
    %2590 = vmatprep.subr.bf16.mxu0 %v1801
    %2591 = vmatpush2.bf16.msra.mxu0 %v1800
    %2592 = vmatprep.mubr.bf16.mxu0 %v1371
    %2593 = vmatmul.mubr.bf16.gmra.mxu0 %v1370
    %v2594 = vpop.f32.mrf.mxu0
    %v2595 = vadd.f32 %v2554, %v2594
    %v2596 = vpop.f32.mrf.mxu0
    %v2597 = vadd.f32 %v2556, %v2596
    %v2598 = vpop.f32.mrf.mxu0
    %v2599 = vpop.f32.mrf.mxu0
    %2600 = vdwg.mxu0
    %2601 = vmatprep.subr.bf16.mxu0 %v1861
    %2602 = vmatpush1.bf16.msra.mxu0 %v1860
    %2603 = vmatprep.subr.bf16.mxu0 %v1857
    %2604 = vmatpush1.bf16.msra.mxu0 %v1856
    %2605 = vmatprep.subr.bf16.mxu0 %v1853
    %2606 = vmatpush1.bf16.msra.mxu0 %v1852
    %2607 = vmatprep.subr.bf16.mxu0 %v1849
    %2608 = vmatpush1.bf16.msra.mxu0 %v1848
    %2609 = vmatprep.subr.bf16.mxu0 %v1845
    %2610 = vmatpush1.bf16.msra.mxu0 %v1844
    %2611 = vmatprep.subr.bf16.mxu0 %v1841
    %2612 = vmatpush1.bf16.msra.mxu0 %v1840
    %2613 = vmatprep.subr.bf16.mxu0 %v1837
    %2614 = vmatpush1.bf16.msra.mxu0 %v1836
    %2615 = vmatprep.subr.bf16.mxu0 %v1833
    %2616 = vmatpush1.bf16.msra.mxu0 %v1832
    %2617 = vmatprep.subr.bf16.mxu0 %v1893
    %2618 = vmatpush2.bf16.msra.mxu0 %v1892
    %2619 = vmatprep.subr.bf16.mxu0 %v1889
    %2620 = vmatpush2.bf16.msra.mxu0 %v1888
    %2621 = vmatprep.subr.bf16.mxu0 %v1885
    %2622 = vmatpush2.bf16.msra.mxu0 %v1884
    %2623 = vmatprep.subr.bf16.mxu0 %v1881
    %2624 = vmatpush2.bf16.msra.mxu0 %v1880
    %2625 = vmatprep.subr.bf16.mxu0 %v1877
    %2626 = vmatpush2.bf16.msra.mxu0 %v1876
    %2627 = vmatprep.subr.bf16.mxu0 %v1873
    %2628 = vmatpush2.bf16.msra.mxu0 %v1872
    %2629 = vmatprep.subr.bf16.mxu0 %v1869
    %2630 = vmatpush2.bf16.msra.mxu0 %v1868
    %2631 = vmatprep.subr.bf16.mxu0 %v1865
    %2632 = vmatpush2.bf16.msra.mxu0 %v1864
    %2633 = vmatprep.mubr.bf16.mxu0 %v1373
    %2634 = vmatmul.mubr.bf16.gmra.mxu0 %v1372
    %v2635 = vpop.f32.mrf.mxu0
    %v2636 = vadd.f32 %v2595, %v2635
    %v2637 = vpop.f32.mrf.mxu0
    %v2638 = vadd.f32 %v2597, %v2637
    %v2639 = vpop.f32.mrf.mxu0
    %v2640 = vpop.f32.mrf.mxu0
    %2641 = vdwg.mxu0
    %2642 = vmatprep.subr.bf16.mxu0 %v1925
    %2643 = vmatpush1.bf16.msra.mxu0 %v1924
    %2644 = vmatprep.subr.bf16.mxu0 %v1921
    %2645 = vmatpush1.bf16.msra.mxu0 %v1920
    %2646 = vmatprep.subr.bf16.mxu0 %v1917
    %2647 = vmatpush1.bf16.msra.mxu0 %v1916
    %2648 = vmatprep.subr.bf16.mxu0 %v1913
    %2649 = vmatpush1.bf16.msra.mxu0 %v1912
    %2650 = vmatprep.subr.bf16.mxu0 %v1909
    %2651 = vmatpush1.bf16.msra.mxu0 %v1908
    %2652 = vmatprep.subr.bf16.mxu0 %v1905
    %2653 = vmatpush1.bf16.msra.mxu0 %v1904
    %2654 = vmatprep.subr.bf16.mxu0 %v1901
    %2655 = vmatpush1.bf16.msra.mxu0 %v1900
    %2656 = vmatprep.subr.bf16.mxu0 %v1897
    %2657 = vmatpush1.bf16.msra.mxu0 %v1896
    %2658 = vmatprep.subr.bf16.mxu0 %v1957
    %2659 = vmatpush2.bf16.msra.mxu0 %v1956
    %2660 = vmatprep.subr.bf16.mxu0 %v1953
    %2661 = vmatpush2.bf16.msra.mxu0 %v1952
    %2662 = vmatprep.subr.bf16.mxu0 %v1949
    %2663 = vmatpush2.bf16.msra.mxu0 %v1948
    %2664 = vmatprep.subr.bf16.mxu0 %v1945
    %2665 = vmatpush2.bf16.msra.mxu0 %v1944
    %2666 = vmatprep.subr.bf16.mxu0 %v1941
    %2667 = vmatpush2.bf16.msra.mxu0 %v1940
    %2668 = vmatprep.subr.bf16.mxu0 %v1937
    %2669 = vmatpush2.bf16.msra.mxu0 %v1936
    %2670 = vmatprep.subr.bf16.mxu0 %v1933
    %2671 = vmatpush2.bf16.msra.mxu0 %v1932
    %2672 = vmatprep.subr.bf16.mxu0 %v1929
    %2673 = vmatpush2.bf16.msra.mxu0 %v1928
    %2674 = vmatprep.mubr.bf16.mxu0 %v1375
    %2675 = vmatmul.mubr.bf16.gmra.mxu0 %v1374
    %v2676 = vpop.f32.mrf.mxu0
    %v2677 = vadd.f32 %v2636, %v2676
    %v2678 = vpop.f32.mrf.mxu0
    %v2679 = vadd.f32 %v2638, %v2678
    %v2680 = vpop.f32.mrf.mxu0
    %v2681 = vpop.f32.mrf.mxu0
    %2682 = vdwg.mxu0
    %2683 = vmatprep.subr.bf16.mxu0 %v1989
    %2684 = vmatpush1.bf16.msra.mxu0 %v1988
    %2685 = vmatprep.subr.bf16.mxu0 %v1985
    %2686 = vmatpush1.bf16.msra.mxu0 %v1984
    %2687 = vmatprep.subr.bf16.mxu0 %v1981
    %2688 = vmatpush1.bf16.msra.mxu0 %v1980
    %2689 = vmatprep.subr.bf16.mxu0 %v1977
    %2690 = vmatpush1.bf16.msra.mxu0 %v1976
    %2691 = vmatprep.subr.bf16.mxu0 %v1973
    %2692 = vmatpush1.bf16.msra.mxu0 %v1972
    %2693 = vmatprep.subr.bf16.mxu0 %v1969
    %2694 = vmatpush1.bf16.msra.mxu0 %v1968
    %2695 = vmatprep.subr.bf16.mxu0 %v1965
    %2696 = vmatpush1.bf16.msra.mxu0 %v1964
    %2697 = vmatprep.subr.bf16.mxu0 %v1961
    %2698 = vmatpush1.bf16.msra.mxu0 %v1960
    %2699 = vmatprep.subr.bf16.mxu0 %v2021
    %2700 = vmatpush2.bf16.msra.mxu0 %v2020
    %2701 = vmatprep.subr.bf16.mxu0 %v2017
    %2702 = vmatpush2.bf16.msra.mxu0 %v2016
    %2703 = vmatprep.subr.bf16.mxu0 %v2013
    %2704 = vmatpush2.bf16.msra.mxu0 %v2012
    %2705 = vmatprep.subr.bf16.mxu0 %v2009
    %2706 = vmatpush2.bf16.msra.mxu0 %v2008
    %2707 = vmatprep.subr.bf16.mxu0 %v2005
    %2708 = vmatpush2.bf16.msra.mxu0 %v2004
    %2709 = vmatprep.subr.bf16.mxu0 %v2001
    %2710 = vmatpush2.bf16.msra.mxu0 %v2000
    %2711 = vmatprep.subr.bf16.mxu0 %v1997
    %2712 = vmatpush2.bf16.msra.mxu0 %v1996
    %2713 = vmatprep.subr.bf16.mxu0 %v1993
    %2714 = vmatpush2.bf16.msra.mxu0 %v1992
    %2715 = vmatprep.mubr.bf16.mxu0 %v1377
    %2716 = vmatmul.mubr.bf16.gmra.mxu0 %v1376
    %v2717 = vpop.f32.mrf.mxu0
    %v2718 = vadd.f32 %v2677, %v2717
    %v2719 = vpop.f32.mrf.mxu0
    %v2720 = vadd.f32 %v2679, %v2719
    %v2721 = vpop.f32.mrf.mxu0
    %v2722 = vpop.f32.mrf.mxu0
    %2723 = vdwg.mxu0
    %2724 = vmatprep.subr.bf16.mxu0 %v2053
    %2725 = vmatpush1.bf16.msra.mxu0 %v2052
    %2726 = vmatprep.subr.bf16.mxu0 %v2049
    %2727 = vmatpush1.bf16.msra.mxu0 %v2048
    %2728 = vmatprep.subr.bf16.mxu0 %v2045
    %2729 = vmatpush1.bf16.msra.mxu0 %v2044
    %2730 = vmatprep.subr.bf16.mxu0 %v2041
    %2731 = vmatpush1.bf16.msra.mxu0 %v2040
    %2732 = vmatprep.subr.bf16.mxu0 %v2037
    %2733 = vmatpush1.bf16.msra.mxu0 %v2036
    %2734 = vmatprep.subr.bf16.mxu0 %v2033
    %2735 = vmatpush1.bf16.msra.mxu0 %v2032
    %2736 = vmatprep.subr.bf16.mxu0 %v2029
    %2737 = vmatpush1.bf16.msra.mxu0 %v2028
    %2738 = vmatprep.subr.bf16.mxu0 %v2025
    %2739 = vmatpush1.bf16.msra.mxu0 %v2024
    %2740 = vmatprep.subr.bf16.mxu0 %v2085
    %2741 = vmatpush2.bf16.msra.mxu0 %v2084
    %2742 = vmatprep.subr.bf16.mxu0 %v2081
    %2743 = vmatpush2.bf16.msra.mxu0 %v2080
    %2744 = vmatprep.subr.bf16.mxu0 %v2077
    %2745 = vmatpush2.bf16.msra.mxu0 %v2076
    %2746 = vmatprep.subr.bf16.mxu0 %v2073
    %2747 = vmatpush2.bf16.msra.mxu0 %v2072
    %2748 = vmatprep.subr.bf16.mxu0 %v2069
    %2749 = vmatpush2.bf16.msra.mxu0 %v2068
    %2750 = vmatprep.subr.bf16.mxu0 %v2065
    %2751 = vmatpush2.bf16.msra.mxu0 %v2064
    %2752 = vmatprep.subr.bf16.mxu0 %v2061
    %2753 = vmatpush2.bf16.msra.mxu0 %v2060
    %2754 = vmatprep.subr.bf16.mxu0 %v2057
    %2755 = vmatpush2.bf16.msra.mxu0 %v2056
    %2756 = vmatprep.mubr.bf16.mxu0 %v1379
    %2757 = vmatmul.mubr.bf16.gmra.mxu0 %v1378
    %v2758 = vpop.f32.mrf.mxu0
    %v2759 = vadd.f32 %v2718, %v2758
    %v2760 = vpop.f32.mrf.mxu0
    %v2761 = vadd.f32 %v2720, %v2760
    %v2762 = vpop.f32.mrf.mxu0
    %v2763 = vpop.f32.mrf.mxu0
    %2764 = vdwg.mxu0
    %2765 = vmatprep.subr.bf16.mxu0 %v2117
    %2766 = vmatpush1.bf16.msra.mxu0 %v2116
    %2767 = vmatprep.subr.bf16.mxu0 %v2113
    %2768 = vmatpush1.bf16.msra.mxu0 %v2112
    %2769 = vmatprep.subr.bf16.mxu0 %v2109
    %2770 = vmatpush1.bf16.msra.mxu0 %v2108
    %2771 = vmatprep.subr.bf16.mxu0 %v2105
    %2772 = vmatpush1.bf16.msra.mxu0 %v2104
    %2773 = vmatprep.subr.bf16.mxu0 %v2101
    %2774 = vmatpush1.bf16.msra.mxu0 %v2100
    %2775 = vmatprep.subr.bf16.mxu0 %v2097
    %2776 = vmatpush1.bf16.msra.mxu0 %v2096
    %2777 = vmatprep.subr.bf16.mxu0 %v2093
    %2778 = vmatpush1.bf16.msra.mxu0 %v2092
    %2779 = vmatprep.subr.bf16.mxu0 %v2089
    %2780 = vmatpush1.bf16.msra.mxu0 %v2088
    %2781 = vmatprep.subr.bf16.mxu0 %v2149
    %2782 = vmatpush2.bf16.msra.mxu0 %v2148
    %2783 = vmatprep.subr.bf16.mxu0 %v2145
    %2784 = vmatpush2.bf16.msra.mxu0 %v2144
    %2785 = vmatprep.subr.bf16.mxu0 %v2141
    %2786 = vmatpush2.bf16.msra.mxu0 %v2140
    %2787 = vmatprep.subr.bf16.mxu0 %v2137
    %2788 = vmatpush2.bf16.msra.mxu0 %v2136
    %2789 = vmatprep.subr.bf16.mxu0 %v2133
    %2790 = vmatpush2.bf16.msra.mxu0 %v2132
    %2791 = vmatprep.subr.bf16.mxu0 %v2129
    %2792 = vmatpush2.bf16.msra.mxu0 %v2128
    %2793 = vmatprep.subr.bf16.mxu0 %v2125
    %2794 = vmatpush2.bf16.msra.mxu0 %v2124
    %2795 = vmatprep.subr.bf16.mxu0 %v2121
    %2796 = vmatpush2.bf16.msra.mxu0 %v2120
    %2797 = vmatprep.mubr.bf16.mxu0 %v1381
    %2798 = vmatmul.mubr.bf16.gmra.mxu0 %v1380
    %v2799 = vpop.f32.mrf.mxu0
    %v2800 = vadd.f32 %v2759, %v2799
    %v2801 = vpop.f32.mrf.mxu0
    %v2802 = vadd.f32 %v2761, %v2801
    %v2803 = vpop.f32.mrf.mxu0
    %v2804 = vpop.f32.mrf.mxu0
    %2805 = vdwg.mxu0
    %v2806 = vrot.slane %v2472, 4
    %v2807 = vadd.f32 %v2472, %v2806
    %v2808 = vrot.slane %v2807, 2
    %v2809 = vadd.f32 %v2807, %v2808
    %v2810 = vrot.slane %v2809, 1
    %v2811 = vadd.f32 %v2809, %v2810
    %v2812 = vrot.slane %v2474, 4
    %v2813 = vadd.f32 %v2474, %v2812
    %v2814 = vrot.slane %v2813, 2
    %v2815 = vadd.f32 %v2813, %v2814
    %v2816 = vrot.slane %v2815, 1
    %v2817 = vadd.f32 %v2815, %v2816
    %v2818 = vrot.slane %v2800, 4
    %v2819 = vadd.f32 %v2800, %v2818
    %v2820 = vrot.slane %v2819, 2
    %v2821 = vadd.f32 %v2819, %v2820
    %v2822 = vrot.slane %v2821, 1
    %v2823 = vadd.f32 %v2821, %v2822
    %v2824 = vrot.slane %v2802, 4
    %v2825 = vadd.f32 %v2802, %v2824
    %v2826 = vrot.slane %v2825, 2
    %v2827 = vadd.f32 %v2825, %v2826
    %v2828 = vrot.slane %v2827, 1
    %v2829 = vadd.f32 %v2827, %v2828
    %v2830 = vmul.f32 %v2811, %v625
    %v2831 = vmul.f32 %v2817, %v625
    %v2832 = vmul.f32 %v2823, %v625
    %v2833 = vmul.f32 %v2829, %v625
    %v2834 = vsub.f32 %v2472, %v2830
    %v2835 = vsub.f32 %v2474, %v2831
    %v2836 = vsub.f32 %v2800, %v2832
    %v2837 = vsub.f32 %v2802, %v2833
    %v2838 = vmul.f32 %v2834, %v2834
    %v2839 = vmul.f32 %v2835, %v2835
    %v2840 = vmul.f32 %v2836, %v2836
    %v2841 = vmul.f32 %v2837, %v2837
    %v2842 = vrot.slane %v2838, 4
    %v2843 = vadd.f32 %v2838, %v2842
    %v2844 = vrot.slane %v2843, 2
    %v2845 = vadd.f32 %v2843, %v2844
    %v2846 = vrot.slane %v2845, 1
    %v2847 = vadd.f32 %v2845, %v2846
    %v2848 = vrot.slane %v2839, 4
    %v2849 = vadd.f32 %v2839, %v2848
    %v2850 = vrot.slane %v2849, 2
    %v2851 = vadd.f32 %v2849, %v2850
    %v2852 = vrot.slane %v2851, 1
    %v2853 = vadd.f32 %v2851, %v2852
    %v2854 = vrot.slane %v2840, 4
    %v2855 = vadd.f32 %v2840, %v2854
    %v2856 = vrot.slane %v2855, 2
    %v2857 = vadd.f32 %v2855, %v2856
    %v2858 = vrot.slane %v2857, 1
    %v2859 = vadd.f32 %v2857, %v2858
    %v2860 = vrot.slane %v2841, 4
    %v2861 = vadd.f32 %v2841, %v2860
    %v2862 = vrot.slane %v2861, 2
    %v2863 = vadd.f32 %v2861, %v2862
    %v2864 = vrot.slane %v2863, 1
    %v2865 = vadd.f32 %v2863, %v2864
    %v2866 = vmul.f32 %v2847, %v625
    %v2867 = vmul.f32 %v2853, %v625
    %v2868 = vmul.f32 %v2859, %v625
    %v2869 = vmul.f32 %v2865, %v625
    %v2870 = vadd.f32 %v2866, 1e-05
    %v2871 = vadd.f32 %v2867, 1e-05
    %v2872 = vadd.f32 %v2868, 1e-05
    %v2873 = vadd.f32 %v2869, 1e-05
    %v2874 = vrsqrt.pop %v2870
    %v2875 = vrsqrt.pop %v2871
    %v2876 = vrsqrt.pop %v2872
    %v2877 = vrsqrt.pop %v2873
    %v2882 = vcombine.low %v2874, %v2875
    %v2883 = vcombine.low %v2876, %v2877
    %v2885 = vunpack.c.l.s4 1983009808
    %v2886 = vunpack.c.0.s8 %v2885
    %v2887 = vlaneseq
    %v2888 = vshrl.u32 %v2887, 7
    %v2889 = vsub.s32 %v2886, %v2888
    %v2890 = vrot.slane %v2882, %v2889
    %v2892 = vunpack.c.l.s4 1983009808
    %v2893 = vunpack.c.0.s8 %v2892
    %v2894 = vlaneseq
    %v2895 = vshrl.u32 %v2894, 7
    %v2896 = vsub.s32 %v2893, %v2895
    %v2897 = vrot.slane %v2883, %v2896
    %v2898 = vcombine.low %v2890, %v2897
    %v2900 = vmul.f32 %v95, %v2898
    %v2902 = vlaneseq
    %v2903 = vshrl.u32 %v2902, 7
    %v2904 = vsub.s32 0, %v2903
    %v2905 = vrot.slane %v2900, %v2904
    %v2906 = vlaneseq
    %v2907 = vshrl.u32 %v2906, 7
    %v2908 = vsub.s32 2, %v2907
    %v2909 = vrot.slane %v2900, %v2908
    %v2910 = vlaneseq
    %v2911 = vshrl.u32 %v2910, 7
    %v2912 = vsub.s32 4, %v2911
    %v2913 = vrot.slane %v2900, %v2912
    %v2914 = vlaneseq
    %v2915 = vshrl.u32 %v2914, 7
    %v2916 = vsub.s32 6, %v2915
    %v2917 = vrot.slane %v2900, %v2916
    %v2922 = vmul.f32 %v2830, %v2905
    %v2923 = vmul.f32 %v2831, %v2909
    %v2924 = vmul.f32 %v2832, %v2913
    %v2925 = vmul.f32 %v2833, %v2917
    %v2930 = vcombine.low %v2922, %v2923
    %v2931 = vcombine.low %v2924, %v2925
    %v2933 = vunpack.c.l.s4 1983009808
    %v2934 = vunpack.c.0.s8 %v2933
    %v2935 = vlaneseq
    %v2936 = vshrl.u32 %v2935, 7
    %v2937 = vsub.s32 %v2934, %v2936
    %v2938 = vrot.slane %v2930, %v2937
    %v2940 = vunpack.c.l.s4 1983009808
    %v2941 = vunpack.c.0.s8 %v2940
    %v2942 = vlaneseq
    %v2943 = vshrl.u32 %v2942, 7
    %v2944 = vsub.s32 %v2941, %v2943
    %v2945 = vrot.slane %v2931, %v2944
    %v2946 = vcombine.low %v2938, %v2945
    %v2947 = vrot.slane %v2946, 7
    %v2949 = vsub.f32 %v95, %v2947
    %v2950 = vlaneseq
    %v2951 = vshrl.u32 %v2950, 7
    %v2952 = vsub.s32 0, %v2951
    %v2953 = vrot.slane %v2905, %v2952
    %v2954 = vlaneseq
    %v2955 = vshrl.u32 %v2954, 7
    %v2956 = vsub.s32 0, %v2955
    %v2957 = vrot.slane %v2909, %v2956
    %v2958 = vlaneseq
    %v2959 = vshrl.u32 %v2958, 7
    %v2960 = vsub.s32 0, %v2959
    %v2961 = vrot.slane %v2913, %v2960
    %v2962 = vlaneseq
    %v2963 = vshrl.u32 %v2962, 7
    %v2964 = vsub.s32 0, %v2963
    %v2965 = vrot.slane %v2917, %v2964
    %v2966 = vmul.f32 %v2472, %v2953
    %v2967 = vmul.f32 %v2474, %v2957
    %v2968 = vmul.f32 %v2800, %v2961
    %v2969 = vmul.f32 %v2802, %v2965
    %v2971 = vlaneseq
    %v2972 = vshrl.u32 %v2971, 7
    %v2973 = vsub.s32 1, %v2972
    %v2974 = vrot.slane %v2949, %v2973
    %v2975 = vlaneseq
    %v2976 = vshrl.u32 %v2975, 7
    %v2977 = vsub.s32 3, %v2976
    %v2978 = vrot.slane %v2949, %v2977
    %v2979 = vlaneseq
    %v2980 = vshrl.u32 %v2979, 7
    %v2981 = vsub.s32 5, %v2980
    %v2982 = vrot.slane %v2949, %v2981
    %v2983 = vlaneseq
    %v2984 = vshrl.u32 %v2983, 7
    %v2985 = vsub.s32 7, %v2984
    %v2986 = vrot.slane %v2949, %v2985
    %v2991 = vlaneseq
    %v2992 = vshrl.u32 %v2991, 7
    %v2993 = vsub.s32 1, %v2992
    %v2994 = vrot.slane %v2974, %v2993
    %v2995 = vlaneseq
    %v2996 = vshrl.u32 %v2995, 7
    %v2997 = vsub.s32 1, %v2996
    %v2998 = vrot.slane %v2978, %v2997
    %v2999 = vlaneseq
    %v3000 = vshrl.u32 %v2999, 7
    %v3001 = vsub.s32 1, %v3000
    %v3002 = vrot.slane %v2982, %v3001
    %v3003 = vlaneseq
    %v3004 = vshrl.u32 %v3003, 7
    %v3005 = vsub.s32 1, %v3004
    %v3006 = vrot.slane %v2986, %v3005
    %v3007 = vadd.f32 %v2966, %v2994
    %v3008 = vadd.f32 %v2967, %v2998
    %v3009 = vadd.f32 %v2968, %v3002
    %v3010 = vadd.f32 %v2969, %v3006
    %v3011 = vmax.f32 %v3007, 0.0
    %v3012 = vmax.f32 %v3008, 0.0
    %v3013 = vmax.f32 %v3009, 0.0
    %v3014 = vmax.f32 %v3010, 0.0
    %v3015 = vpack.c.bf16 %v3011, %v3011
    %v3016 = vpack.c.bf16 %v3012, %v3012
    %v3017 = vpack.c.bf16 %v3013, %v3013
    %v3018 = vpack.c.bf16 %v3014, %v3014
    %v3019 = vld [vmem:[#allocation7] sm:$0xff]
    %v3020 = vld [vmem:[#allocation7 + $0x8] sm:$0xff]
    %v3021 = vld [vmem:[#allocation7 + $0x10] sm:$0xff]
    %v3022 = vld [vmem:[#allocation7 + $0x18] sm:$0xff]
    %v3023 = vld [vmem:[#allocation7 + $0x20] sm:$0xff]
    %v3024 = vld [vmem:[#allocation7 + $0x28] sm:$0xff]
    %v3025 = vld [vmem:[#allocation7 + $0x30] sm:$0xff]
    %v3026 = vld [vmem:[#allocation7 + $0x38] sm:$0xff]
    %v3027 = vld [vmem:[#allocation7 + $0x40] sm:$0xff]
    %v3028 = vld [vmem:[#allocation7 + $0x48] sm:$0xff]
    %v3029 = vld [vmem:[#allocation7 + $0x50] sm:$0xff]
    %v3030 = vld [vmem:[#allocation7 + $0x58] sm:$0xff]
    %v3031 = vld [vmem:[#allocation7 + $0x60] sm:$0xff]
    %v3032 = vld [vmem:[#allocation7 + $0x68] sm:$0xff]
    %v3033 = vld [vmem:[#allocation7 + $0x70] sm:$0xff]
    %v3034 = vld [vmem:[#allocation7 + $0x78] sm:$0xff]
    %v3035 = vld [vmem:[#allocation7 + $0x80] sm:$0xff]
    %v3036 = vld [vmem:[#allocation7 + $0x88] sm:$0xff]
    %v3037 = vld [vmem:[#allocation7 + $0x90] sm:$0xff]
    %v3038 = vld [vmem:[#allocation7 + $0x98] sm:$0xff]
    %v3039 = vld [vmem:[#allocation7 + $0xa0] sm:$0xff]
    %v3040 = vld [vmem:[#allocation7 + $0xa8] sm:$0xff]
    %v3041 = vld [vmem:[#allocation7 + $0xb0] sm:$0xff]
    %v3042 = vld [vmem:[#allocation7 + $0xb8] sm:$0xff]
    %v3043 = vld [vmem:[#allocation7 + $0xc0] sm:$0xff]
    %v3044 = vld [vmem:[#allocation7 + $0xc8] sm:$0xff]
    %v3045 = vld [vmem:[#allocation7 + $0xd0] sm:$0xff]
    %v3046 = vld [vmem:[#allocation7 + $0xd8] sm:$0xff]
    %v3047 = vld [vmem:[#allocation7 + $0xe0] sm:$0xff]
    %v3048 = vld [vmem:[#allocation7 + $0xe8] sm:$0xff]
    %v3049 = vld [vmem:[#allocation7 + $0xf0] sm:$0xff]
    %v3050 = vld [vmem:[#allocation7 + $0xf8] sm:$0xff]
    %v3051 = vld [vmem:[#allocation7 + $0x100] sm:$0xff]
    %v3052 = vld [vmem:[#allocation7 + $0x108] sm:$0xff]
    %v3053 = vld [vmem:[#allocation7 + $0x110] sm:$0xff]
    %v3054 = vld [vmem:[#allocation7 + $0x118] sm:$0xff]
    %v3055 = vld [vmem:[#allocation7 + $0x120] sm:$0xff]
    %v3056 = vld [vmem:[#allocation7 + $0x128] sm:$0xff]
    %v3057 = vld [vmem:[#allocation7 + $0x130] sm:$0xff]
    %v3058 = vld [vmem:[#allocation7 + $0x138] sm:$0xff]
    %v3059 = vld [vmem:[#allocation7 + $0x140] sm:$0xff]
    %v3060 = vld [vmem:[#allocation7 + $0x148] sm:$0xff]
    %v3061 = vld [vmem:[#allocation7 + $0x150] sm:$0xff]
    %v3062 = vld [vmem:[#allocation7 + $0x158] sm:$0xff]
    %v3063 = vld [vmem:[#allocation7 + $0x160] sm:$0xff]
    %v3064 = vld [vmem:[#allocation7 + $0x168] sm:$0xff]
    %v3065 = vld [vmem:[#allocation7 + $0x170] sm:$0xff]
    %v3066 = vld [vmem:[#allocation7 + $0x178] sm:$0xff]
    %v3067 = vld [vmem:[#allocation7 + $0x180] sm:$0xff]
    %v3068 = vld [vmem:[#allocation7 + $0x188] sm:$0xff]
    %v3069 = vld [vmem:[#allocation7 + $0x190] sm:$0xff]
    %v3070 = vld [vmem:[#allocation7 + $0x198] sm:$0xff]
    %v3071 = vld [vmem:[#allocation7 + $0x1a0] sm:$0xff]
    %v3072 = vld [vmem:[#allocation7 + $0x1a8] sm:$0xff]
    %v3073 = vld [vmem:[#allocation7 + $0x1b0] sm:$0xff]
    %v3074 = vld [vmem:[#allocation7 + $0x1b8] sm:$0xff]
    %v3075 = vld [vmem:[#allocation7 + $0x1c0] sm:$0xff]
    %v3076 = vld [vmem:[#allocation7 + $0x1c8] sm:$0xff]
    %v3077 = vld [vmem:[#allocation7 + $0x1d0] sm:$0xff]
    %v3078 = vld [vmem:[#allocation7 + $0x1d8] sm:$0xff]
    %v3079 = vld [vmem:[#allocation7 + $0x1e0] sm:$0xff]
    %v3080 = vld [vmem:[#allocation7 + $0x1e8] sm:$0xff]
    %v3081 = vld [vmem:[#allocation7 + $0x1f0] sm:$0xff]
    %v3082 = vld [vmem:[#allocation7 + $0x1f8] sm:$0xff]
    %v3083 = vunpack.c.l.s8.bf16 %v3019
    %v3084 = vunpack.c.l.s8.bf16 %v3020
    %v3085 = vunpack.c.l.s8.bf16 %v3021
    %v3086 = vunpack.c.l.s8.bf16 %v3022
    %v3087 = vunpack.c.h.s8.bf16 %v3019
    %v3088 = vunpack.c.h.s8.bf16 %v3020
    %v3089 = vunpack.c.h.s8.bf16 %v3021
    %v3090 = vunpack.c.h.s8.bf16 %v3022
    %v3091 = vunpack.c.l.s8.bf16 %v3023
    %v3092 = vunpack.c.l.s8.bf16 %v3024
    %v3093 = vunpack.c.l.s8.bf16 %v3025
    %v3094 = vunpack.c.l.s8.bf16 %v3026
    %v3095 = vunpack.c.h.s8.bf16 %v3023
    %v3096 = vunpack.c.h.s8.bf16 %v3024
    %v3097 = vunpack.c.h.s8.bf16 %v3025
    %v3098 = vunpack.c.h.s8.bf16 %v3026
    %v3099 = vunpack.c.l.s8.bf16 %v3027
    %v3100 = vunpack.c.l.s8.bf16 %v3028
    %v3101 = vunpack.c.l.s8.bf16 %v3029
    %v3102 = vunpack.c.l.s8.bf16 %v3030
    %v3103 = vunpack.c.h.s8.bf16 %v3027
    %v3104 = vunpack.c.h.s8.bf16 %v3028
    %v3105 = vunpack.c.h.s8.bf16 %v3029
    %v3106 = vunpack.c.h.s8.bf16 %v3030
    %v3107 = vunpack.c.l.s8.bf16 %v3031
    %v3108 = vunpack.c.l.s8.bf16 %v3032
    %v3109 = vunpack.c.l.s8.bf16 %v3033
    %v3110 = vunpack.c.l.s8.bf16 %v3034
    %v3111 = vunpack.c.h.s8.bf16 %v3031
    %v3112 = vunpack.c.h.s8.bf16 %v3032
    %v3113 = vunpack.c.h.s8.bf16 %v3033
    %v3114 = vunpack.c.h.s8.bf16 %v3034
    %v3115 = vunpack.c.l.s8.bf16 %v3035
    %v3116 = vunpack.c.l.s8.bf16 %v3036
    %v3117 = vunpack.c.l.s8.bf16 %v3037
    %v3118 = vunpack.c.l.s8.bf16 %v3038
    %v3119 = vunpack.c.h.s8.bf16 %v3035
    %v3120 = vunpack.c.h.s8.bf16 %v3036
    %v3121 = vunpack.c.h.s8.bf16 %v3037
    %v3122 = vunpack.c.h.s8.bf16 %v3038
    %v3123 = vunpack.c.l.s8.bf16 %v3039
    %v3124 = vunpack.c.l.s8.bf16 %v3040
    %v3125 = vunpack.c.l.s8.bf16 %v3041
    %v3126 = vunpack.c.l.s8.bf16 %v3042
    %v3127 = vunpack.c.h.s8.bf16 %v3039
    %v3128 = vunpack.c.h.s8.bf16 %v3040
    %v3129 = vunpack.c.h.s8.bf16 %v3041
    %v3130 = vunpack.c.h.s8.bf16 %v3042
    %v3131 = vunpack.c.l.s8.bf16 %v3043
    %v3132 = vunpack.c.l.s8.bf16 %v3044
    %v3133 = vunpack.c.l.s8.bf16 %v3045
    %v3134 = vunpack.c.l.s8.bf16 %v3046
    %v3135 = vunpack.c.h.s8.bf16 %v3043
    %v3136 = vunpack.c.h.s8.bf16 %v3044
    %v3137 = vunpack.c.h.s8.bf16 %v3045
    %v3138 = vunpack.c.h.s8.bf16 %v3046
    %v3139 = vunpack.c.l.s8.bf16 %v3047
    %v3140 = vunpack.c.l.s8.bf16 %v3048
    %v3141 = vunpack.c.l.s8.bf16 %v3049
    %v3142 = vunpack.c.l.s8.bf16 %v3050
    %v3143 = vunpack.c.h.s8.bf16 %v3047
    %v3144 = vunpack.c.h.s8.bf16 %v3048
    %v3145 = vunpack.c.h.s8.bf16 %v3049
    %v3146 = vunpack.c.h.s8.bf16 %v3050
    %v3147 = vunpack.c.l.s8.bf16 %v3051
    %v3148 = vunpack.c.l.s8.bf16 %v3052
    %v3149 = vunpack.c.l.s8.bf16 %v3053
    %v3150 = vunpack.c.l.s8.bf16 %v3054
    %v3151 = vunpack.c.h.s8.bf16 %v3051
    %v3152 = vunpack.c.h.s8.bf16 %v3052
    %v3153 = vunpack.c.h.s8.bf16 %v3053
    %v3154 = vunpack.c.h.s8.bf16 %v3054
    %v3155 = vunpack.c.l.s8.bf16 %v3055
    %v3156 = vunpack.c.l.s8.bf16 %v3056
    %v3157 = vunpack.c.l.s8.bf16 %v3057
    %v3158 = vunpack.c.l.s8.bf16 %v3058
    %v3159 = vunpack.c.h.s8.bf16 %v3055
    %v3160 = vunpack.c.h.s8.bf16 %v3056
    %v3161 = vunpack.c.h.s8.bf16 %v3057
    %v3162 = vunpack.c.h.s8.bf16 %v3058
    %v3163 = vunpack.c.l.s8.bf16 %v3059
    %v3164 = vunpack.c.l.s8.bf16 %v3060
    %v3165 = vunpack.c.l.s8.bf16 %v3061
    %v3166 = vunpack.c.l.s8.bf16 %v3062
    %v3167 = vunpack.c.h.s8.bf16 %v3059
    %v3168 = vunpack.c.h.s8.bf16 %v3060
    %v3169 = vunpack.c.h.s8.bf16 %v3061
    %v3170 = vunpack.c.h.s8.bf16 %v3062
    %v3171 = vunpack.c.l.s8.bf16 %v3063
    %v3172 = vunpack.c.l.s8.bf16 %v3064
    %v3173 = vunpack.c.l.s8.bf16 %v3065
    %v3174 = vunpack.c.l.s8.bf16 %v3066
    %v3175 = vunpack.c.h.s8.bf16 %v3063
    %v3176 = vunpack.c.h.s8.bf16 %v3064
    %v3177 = vunpack.c.h.s8.bf16 %v3065
    %v3178 = vunpack.c.h.s8.bf16 %v3066
    %v3179 = vunpack.c.l.s8.bf16 %v3067
    %v3180 = vunpack.c.l.s8.bf16 %v3068
    %v3181 = vunpack.c.l.s8.bf16 %v3069
    %v3182 = vunpack.c.l.s8.bf16 %v3070
    %v3183 = vunpack.c.h.s8.bf16 %v3067
    %v3184 = vunpack.c.h.s8.bf16 %v3068
    %v3185 = vunpack.c.h.s8.bf16 %v3069
    %v3186 = vunpack.c.h.s8.bf16 %v3070
    %v3187 = vunpack.c.l.s8.bf16 %v3071
    %v3188 = vunpack.c.l.s8.bf16 %v3072
    %v3189 = vunpack.c.l.s8.bf16 %v3073
    %v3190 = vunpack.c.l.s8.bf16 %v3074
    %v3191 = vunpack.c.h.s8.bf16 %v3071
    %v3192 = vunpack.c.h.s8.bf16 %v3072
    %v3193 = vunpack.c.h.s8.bf16 %v3073
    %v3194 = vunpack.c.h.s8.bf16 %v3074
    %v3195 = vunpack.c.l.s8.bf16 %v3075
    %v3196 = vunpack.c.l.s8.bf16 %v3076
    %v3197 = vunpack.c.l.s8.bf16 %v3077
    %v3198 = vunpack.c.l.s8.bf16 %v3078
    %v3199 = vunpack.c.h.s8.bf16 %v3075
    %v3200 = vunpack.c.h.s8.bf16 %v3076
    %v3201 = vunpack.c.h.s8.bf16 %v3077
    %v3202 = vunpack.c.h.s8.bf16 %v3078
    %v3203 = vunpack.c.l.s8.bf16 %v3079
    %v3204 = vunpack.c.l.s8.bf16 %v3080
    %v3205 = vunpack.c.l.s8.bf16 %v3081
    %v3206 = vunpack.c.l.s8.bf16 %v3082
    %v3207 = vunpack.c.h.s8.bf16 %v3079
    %v3208 = vunpack.c.h.s8.bf16 %v3080
    %v3209 = vunpack.c.h.s8.bf16 %v3081
    %v3210 = vunpack.c.h.s8.bf16 %v3082
    %3211 = vmatprep.subr.bf16.mxu0 %v3112
    %3212 = vmatpush1.bf16.msra.mxu0 %v3111
    %3213 = vmatprep.subr.bf16.mxu0 %v3108
    %3214 = vmatpush1.bf16.msra.mxu0 %v3107
    %3215 = vmatprep.subr.bf16.mxu0 %v3104
    %3216 = vmatpush1.bf16.msra.mxu0 %v3103
    %3217 = vmatprep.subr.bf16.mxu0 %v3100
    %3218 = vmatpush1.bf16.msra.mxu0 %v3099
    %3219 = vmatprep.subr.bf16.mxu0 %v3096
    %3220 = vmatpush1.bf16.msra.mxu0 %v3095
    %3221 = vmatprep.subr.bf16.mxu0 %v3092
    %3222 = vmatpush1.bf16.msra.mxu0 %v3091
    %3223 = vmatprep.subr.bf16.mxu0 %v3088
    %3224 = vmatpush1.bf16.msra.mxu0 %v3087
    %3225 = vmatprep.subr.bf16.mxu0 %v3084
    %3226 = vmatpush1.bf16.msra.mxu0 %v3083
    %3227 = vmatprep.subr.bf16.mxu0 %v3144
    %3228 = vmatpush2.bf16.msra.mxu0 %v3143
    %3229 = vmatprep.subr.bf16.mxu0 %v3140
    %3230 = vmatpush2.bf16.msra.mxu0 %v3139
    %3231 = vmatprep.subr.bf16.mxu0 %v3136
    %3232 = vmatpush2.bf16.msra.mxu0 %v3135
    %3233 = vmatprep.subr.bf16.mxu0 %v3132
    %3234 = vmatpush2.bf16.msra.mxu0 %v3131
    %3235 = vmatprep.subr.bf16.mxu0 %v3128
    %3236 = vmatpush2.bf16.msra.mxu0 %v3127
    %3237 = vmatprep.subr.bf16.mxu0 %v3124
    %3238 = vmatpush2.bf16.msra.mxu0 %v3123
    %3239 = vmatprep.subr.bf16.mxu0 %v3120
    %3240 = vmatpush2.bf16.msra.mxu0 %v3119
    %3241 = vmatprep.subr.bf16.mxu0 %v3116
    %3242 = vmatpush2.bf16.msra.mxu0 %v3115
    %3243 = vmatprep.mubr.bf16.mxu0 %v3016
    %3244 = vmatmul.mubr.bf16.gmra.mxu0 %v3015
    %v3245 = vpop.f32.mrf.mxu0
    %v3246 = vadd.f32 0.0, %v3245
    %v3247 = vpop.f32.mrf.mxu0
    %v3248 = vadd.f32 0.0, %v3247
    %v3249 = vpop.f32.mrf.mxu0
    %v3250 = vpop.f32.mrf.mxu0
    %3251 = vdwg.mxu0
    %3252 = vmatprep.subr.bf16.mxu0 %v3176
    %3253 = vmatpush1.bf16.msra.mxu0 %v3175
    %3254 = vmatprep.subr.bf16.mxu0 %v3172
    %3255 = vmatpush1.bf16.msra.mxu0 %v3171
    %3256 = vmatprep.subr.bf16.mxu0 %v3168
    %3257 = vmatpush1.bf16.msra.mxu0 %v3167
    %3258 = vmatprep.subr.bf16.mxu0 %v3164
    %3259 = vmatpush1.bf16.msra.mxu0 %v3163
    %3260 = vmatprep.subr.bf16.mxu0 %v3160
    %3261 = vmatpush1.bf16.msra.mxu0 %v3159
    %3262 = vmatprep.subr.bf16.mxu0 %v3156
    %3263 = vmatpush1.bf16.msra.mxu0 %v3155
    %3264 = vmatprep.subr.bf16.mxu0 %v3152
    %3265 = vmatpush1.bf16.msra.mxu0 %v3151
    %3266 = vmatprep.subr.bf16.mxu0 %v3148
    %3267 = vmatpush1.bf16.msra.mxu0 %v3147
    %3268 = vmatprep.subr.bf16.mxu0 %v3208
    %3269 = vmatpush2.bf16.msra.mxu0 %v3207
    %3270 = vmatprep.subr.bf16.mxu0 %v3204
    %3271 = vmatpush2.bf16.msra.mxu0 %v3203
    %3272 = vmatprep.subr.bf16.mxu0 %v3200
    %3273 = vmatpush2.bf16.msra.mxu0 %v3199
    %3274 = vmatprep.subr.bf16.mxu0 %v3196
    %3275 = vmatpush2.bf16.msra.mxu0 %v3195
    %3276 = vmatprep.subr.bf16.mxu0 %v3192
    %3277 = vmatpush2.bf16.msra.mxu0 %v3191
    %3278 = vmatprep.subr.bf16.mxu0 %v3188
    %3279 = vmatpush2.bf16.msra.mxu0 %v3187
    %3280 = vmatprep.subr.bf16.mxu0 %v3184
    %3281 = vmatpush2.bf16.msra.mxu0 %v3183
    %3282 = vmatprep.subr.bf16.mxu0 %v3180
    %3283 = vmatpush2.bf16.msra.mxu0 %v3179
    %3284 = vmatprep.mubr.bf16.mxu0 %v3018
    %3285 = vmatmul.mubr.bf16.gmra.mxu0 %v3017
    %v3286 = vpop.f32.mrf.mxu0
    %v3287 = vadd.f32 %v3246, %v3286
    %v3288 = vpop.f32.mrf.mxu0
    %v3289 = vadd.f32 %v3248, %v3288
    %v3290 = vpop.f32.mrf.mxu0
    %v3291 = vpop.f32.mrf.mxu0
    %3292 = vdwg.mxu0
    %3293 = vmatprep.subr.bf16.mxu0 %v3114
    %3294 = vmatpush1.bf16.msra.mxu0 %v3113
    %3295 = vmatprep.subr.bf16.mxu0 %v3110
    %3296 = vmatpush1.bf16.msra.mxu0 %v3109
    %3297 = vmatprep.subr.bf16.mxu0 %v3106
    %3298 = vmatpush1.bf16.msra.mxu0 %v3105
    %3299 = vmatprep.subr.bf16.mxu0 %v3102
    %3300 = vmatpush1.bf16.msra.mxu0 %v3101
    %3301 = vmatprep.subr.bf16.mxu0 %v3098
    %3302 = vmatpush1.bf16.msra.mxu0 %v3097
    %3303 = vmatprep.subr.bf16.mxu0 %v3094
    %3304 = vmatpush1.bf16.msra.mxu0 %v3093
    %3305 = vmatprep.subr.bf16.mxu0 %v3090
    %3306 = vmatpush1.bf16.msra.mxu0 %v3089
    %3307 = vmatprep.subr.bf16.mxu0 %v3086
    %3308 = vmatpush1.bf16.msra.mxu0 %v3085
    %3309 = vmatprep.subr.bf16.mxu0 %v3146
    %3310 = vmatpush2.bf16.msra.mxu0 %v3145
    %3311 = vmatprep.subr.bf16.mxu0 %v3142
    %3312 = vmatpush2.bf16.msra.mxu0 %v3141
    %3313 = vmatprep.subr.bf16.mxu0 %v3138
    %3314 = vmatpush2.bf16.msra.mxu0 %v3137
    %3315 = vmatprep.subr.bf16.mxu0 %v3134
    %3316 = vmatpush2.bf16.msra.mxu0 %v3133
    %3317 = vmatprep.subr.bf16.mxu0 %v3130
    %3318 = vmatpush2.bf16.msra.mxu0 %v3129
    %3319 = vmatprep.subr.bf16.mxu0 %v3126
    %3320 = vmatpush2.bf16.msra.mxu0 %v3125
    %3321 = vmatprep.subr.bf16.mxu0 %v3122
    %3322 = vmatpush2.bf16.msra.mxu0 %v3121
    %3323 = vmatprep.subr.bf16.mxu0 %v3118
    %3324 = vmatpush2.bf16.msra.mxu0 %v3117
    %3325 = vmatprep.mubr.bf16.mxu0 %v3016
    %3326 = vmatmul.mubr.bf16.gmra.mxu0 %v3015
    %v3327 = vpop.f32.mrf.mxu0
    %v3328 = vadd.f32 0.0, %v3327
    %v3329 = vpop.f32.mrf.mxu0
    %v3330 = vadd.f32 0.0, %v3329
    %v3331 = vpop.f32.mrf.mxu0
    %v3332 = vpop.f32.mrf.mxu0
    %3333 = vdwg.mxu0
    %3334 = vmatprep.subr.bf16.mxu0 %v3178
    %3335 = vmatpush1.bf16.msra.mxu0 %v3177
    %3336 = vmatprep.subr.bf16.mxu0 %v3174
    %3337 = vmatpush1.bf16.msra.mxu0 %v3173
    %3338 = vmatprep.subr.bf16.mxu0 %v3170
    %3339 = vmatpush1.bf16.msra.mxu0 %v3169
    %3340 = vmatprep.subr.bf16.mxu0 %v3166
    %3341 = vmatpush1.bf16.msra.mxu0 %v3165
    %3342 = vmatprep.subr.bf16.mxu0 %v3162
    %3343 = vmatpush1.bf16.msra.mxu0 %v3161
    %3344 = vmatprep.subr.bf16.mxu0 %v3158
    %3345 = vmatpush1.bf16.msra.mxu0 %v3157
    %3346 = vmatprep.subr.bf16.mxu0 %v3154
    %3347 = vmatpush1.bf16.msra.mxu0 %v3153
    %3348 = vmatprep.subr.bf16.mxu0 %v3150
    %3349 = vmatpush1.bf16.msra.mxu0 %v3149
    %3350 = vmatprep.subr.bf16.mxu0 %v3210
    %3351 = vmatpush2.bf16.msra.mxu0 %v3209
    %3352 = vmatprep.subr.bf16.mxu0 %v3206
    %3353 = vmatpush2.bf16.msra.mxu0 %v3205
    %3354 = vmatprep.subr.bf16.mxu0 %v3202
    %3355 = vmatpush2.bf16.msra.mxu0 %v3201
    %3356 = vmatprep.subr.bf16.mxu0 %v3198
    %3357 = vmatpush2.bf16.msra.mxu0 %v3197
    %3358 = vmatprep.subr.bf16.mxu0 %v3194
    %3359 = vmatpush2.bf16.msra.mxu0 %v3193
    %3360 = vmatprep.subr.bf16.mxu0 %v3190
    %3361 = vmatpush2.bf16.msra.mxu0 %v3189
    %3362 = vmatprep.subr.bf16.mxu0 %v3186
    %3363 = vmatpush2.bf16.msra.mxu0 %v3185
    %3364 = vmatprep.subr.bf16.mxu0 %v3182
    %3365 = vmatpush2.bf16.msra.mxu0 %v3181
    %3366 = vmatprep.mubr.bf16.mxu0 %v3018
    %3367 = vmatmul.mubr.bf16.gmra.mxu0 %v3017
    %v3368 = vpop.f32.mrf.mxu0
    %v3369 = vadd.f32 %v3328, %v3368
    %v3370 = vpop.f32.mrf.mxu0
    %v3371 = vadd.f32 %v3330, %v3370
    %v3372 = vpop.f32.mrf.mxu0
    %v3373 = vpop.f32.mrf.mxu0
    %3374 = vdwg.mxu0
    %v3375 = vrot.slane %v3287, 4
    %v3376 = vadd.f32 %v3287, %v3375
    %v3377 = vrot.slane %v3376, 2
    %v3378 = vadd.f32 %v3376, %v3377
    %v3379 = vrot.slane %v3378, 1
    %v3380 = vadd.f32 %v3378, %v3379
    %v3381 = vrot.slane %v3289, 4
    %v3382 = vadd.f32 %v3289, %v3381
    %v3383 = vrot.slane %v3382, 2
    %v3384 = vadd.f32 %v3382, %v3383
    %v3385 = vrot.slane %v3384, 1
    %v3386 = vadd.f32 %v3384, %v3385
    %v3387 = vrot.slane %v3369, 4
    %v3388 = vadd.f32 %v3369, %v3387
    %v3389 = vrot.slane %v3388, 2
    %v3390 = vadd.f32 %v3388, %v3389
    %v3391 = vrot.slane %v3390, 1
    %v3392 = vadd.f32 %v3390, %v3391
    %v3393 = vrot.slane %v3371, 4
    %v3394 = vadd.f32 %v3371, %v3393
    %v3395 = vrot.slane %v3394, 2
    %v3396 = vadd.f32 %v3394, %v3395
    %v3397 = vrot.slane %v3396, 1
    %v3398 = vadd.f32 %v3396, %v3397
    %v3399 = vmul.f32 %v3380, %v625
    %v3400 = vmul.f32 %v3386, %v625
    %v3401 = vmul.f32 %v3392, %v625
    %v3402 = vmul.f32 %v3398, %v625
    %v3403 = vsub.f32 %v3287, %v3399
    %v3404 = vsub.f32 %v3289, %v3400
    %v3405 = vsub.f32 %v3369, %v3401
    %v3406 = vsub.f32 %v3371, %v3402
    %v3407 = vmul.f32 %v3403, %v3403
    %v3408 = vmul.f32 %v3404, %v3404
    %v3409 = vmul.f32 %v3405, %v3405
    %v3410 = vmul.f32 %v3406, %v3406
    %v3411 = vrot.slane %v3407, 4
    %v3412 = vadd.f32 %v3407, %v3411
    %v3413 = vrot.slane %v3412, 2
    %v3414 = vadd.f32 %v3412, %v3413
    %v3415 = vrot.slane %v3414, 1
    %v3416 = vadd.f32 %v3414, %v3415
    %v3417 = vrot.slane %v3408, 4
    %v3418 = vadd.f32 %v3408, %v3417
    %v3419 = vrot.slane %v3418, 2
    %v3420 = vadd.f32 %v3418, %v3419
    %v3421 = vrot.slane %v3420, 1
    %v3422 = vadd.f32 %v3420, %v3421
    %v3423 = vrot.slane %v3409, 4
    %v3424 = vadd.f32 %v3409, %v3423
    %v3425 = vrot.slane %v3424, 2
    %v3426 = vadd.f32 %v3424, %v3425
    %v3427 = vrot.slane %v3426, 1
    %v3428 = vadd.f32 %v3426, %v3427
    %v3429 = vrot.slane %v3410, 4
    %v3430 = vadd.f32 %v3410, %v3429
    %v3431 = vrot.slane %v3430, 2
    %v3432 = vadd.f32 %v3430, %v3431
    %v3433 = vrot.slane %v3432, 1
    %v3434 = vadd.f32 %v3432, %v3433
    %v3435 = vmul.f32 %v3416, %v625
    %v3436 = vmul.f32 %v3422, %v625
    %v3437 = vmul.f32 %v3428, %v625
    %v3438 = vmul.f32 %v3434, %v625
    %v3439 = vadd.f32 %v3435, 1e-05
    %v3440 = vadd.f32 %v3436, 1e-05
    %v3441 = vadd.f32 %v3437, 1e-05
    %v3442 = vadd.f32 %v3438, 1e-05
    %v3443 = vrsqrt.pop %v3439
    %v3444 = vrsqrt.pop %v3440
    %v3445 = vrsqrt.pop %v3441
    %v3446 = vrsqrt.pop %v3442
    %v3451 = vcombine.low %v3443, %v3444
    %v3452 = vcombine.low %v3445, %v3446
    %v3454 = vunpack.c.l.s4 1983009808
    %v3455 = vunpack.c.0.s8 %v3454
    %v3456 = vlaneseq
    %v3457 = vshrl.u32 %v3456, 7
    %v3458 = vsub.s32 %v3455, %v3457
    %v3459 = vrot.slane %v3451, %v3458
    %v3461 = vunpack.c.l.s4 1983009808
    %v3462 = vunpack.c.0.s8 %v3461
    %v3463 = vlaneseq
    %v3464 = vshrl.u32 %v3463, 7
    %v3465 = vsub.s32 %v3462, %v3464
    %v3466 = vrot.slane %v3452, %v3465
    %v3467 = vcombine.low %v3459, %v3466
    %v3469 = vmul.f32 %v96, %v3467
    %v3471 = vlaneseq
    %v3472 = vshrl.u32 %v3471, 7
    %v3473 = vsub.s32 0, %v3472
    %v3474 = vrot.slane %v3469, %v3473
    %v3475 = vlaneseq
    %v3476 = vshrl.u32 %v3475, 7
    %v3477 = vsub.s32 2, %v3476
    %v3478 = vrot.slane %v3469, %v3477
    %v3479 = vlaneseq
    %v3480 = vshrl.u32 %v3479, 7
    %v3481 = vsub.s32 4, %v3480
    %v3482 = vrot.slane %v3469, %v3481
    %v3483 = vlaneseq
    %v3484 = vshrl.u32 %v3483, 7
    %v3485 = vsub.s32 6, %v3484
    %v3486 = vrot.slane %v3469, %v3485
    %v3491 = vmul.f32 %v3399, %v3474
    %v3492 = vmul.f32 %v3400, %v3478
    %v3493 = vmul.f32 %v3401, %v3482
    %v3494 = vmul.f32 %v3402, %v3486
    %v3499 = vcombine.low %v3491, %v3492
    %v3500 = vcombine.low %v3493, %v3494
    %v3502 = vunpack.c.l.s4 1983009808
    %v3503 = vunpack.c.0.s8 %v3502
    %v3504 = vlaneseq
    %v3505 = vshrl.u32 %v3504, 7
    %v3506 = vsub.s32 %v3503, %v3505
    %v3507 = vrot.slane %v3499, %v3506
    %v3509 = vunpack.c.l.s4 1983009808
    %v3510 = vunpack.c.0.s8 %v3509
    %v3511 = vlaneseq
    %v3512 = vshrl.u32 %v3511, 7
    %v3513 = vsub.s32 %v3510, %v3512
    %v3514 = vrot.slane %v3500, %v3513
    %v3515 = vcombine.low %v3507, %v3514
    %v3516 = vrot.slane %v3515, 7
    %v3518 = vsub.f32 %v96, %v3516
    %v3519 = vlaneseq
    %v3520 = vshrl.u32 %v3519, 7
    %v3521 = vsub.s32 0, %v3520
    %v3522 = vrot.slane %v3474, %v3521
    %v3523 = vlaneseq
    %v3524 = vshrl.u32 %v3523, 7
    %v3525 = vsub.s32 0, %v3524
    %v3526 = vrot.slane %v3478, %v3525
    %v3527 = vlaneseq
    %v3528 = vshrl.u32 %v3527, 7
    %v3529 = vsub.s32 0, %v3528
    %v3530 = vrot.slane %v3482, %v3529
    %v3531 = vlaneseq
    %v3532 = vshrl.u32 %v3531, 7
    %v3533 = vsub.s32 0, %v3532
    %v3534 = vrot.slane %v3486, %v3533
    %v3535 = vmul.f32 %v3287, %v3522
    %v3536 = vmul.f32 %v3289, %v3526
    %v3537 = vmul.f32 %v3369, %v3530
    %v3538 = vmul.f32 %v3371, %v3534
    %v3540 = vlaneseq
    %v3541 = vshrl.u32 %v3540, 7
    %v3542 = vsub.s32 1, %v3541
    %v3543 = vrot.slane %v3518, %v3542
    %v3544 = vlaneseq
    %v3545 = vshrl.u32 %v3544, 7
    %v3546 = vsub.s32 3, %v3545
    %v3547 = vrot.slane %v3518, %v3546
    %v3548 = vlaneseq
    %v3549 = vshrl.u32 %v3548, 7
    %v3550 = vsub.s32 5, %v3549
    %v3551 = vrot.slane %v3518, %v3550
    %v3552 = vlaneseq
    %v3553 = vshrl.u32 %v3552, 7
    %v3554 = vsub.s32 7, %v3553
    %v3555 = vrot.slane %v3518, %v3554
    %v3560 = vlaneseq
    %v3561 = vshrl.u32 %v3560, 7
    %v3562 = vsub.s32 1, %v3561
    %v3563 = vrot.slane %v3543, %v3562
    %v3564 = vlaneseq
    %v3565 = vshrl.u32 %v3564, 7
    %v3566 = vsub.s32 1, %v3565
    %v3567 = vrot.slane %v3547, %v3566
    %v3568 = vlaneseq
    %v3569 = vshrl.u32 %v3568, 7
    %v3570 = vsub.s32 1, %v3569
    %v3571 = vrot.slane %v3551, %v3570
    %v3572 = vlaneseq
    %v3573 = vshrl.u32 %v3572, 7
    %v3574 = vsub.s32 1, %v3573
    %v3575 = vrot.slane %v3555, %v3574
    %v3576 = vadd.f32 %v3535, %v3563
    %v3577 = vadd.f32 %v3536, %v3567
    %v3578 = vadd.f32 %v3537, %v3571
    %v3579 = vadd.f32 %v3538, %v3575
    %v3580 = vmax.f32 %v3576, 0.0
    %v3581 = vmax.f32 %v3577, 0.0
    %v3582 = vmax.f32 %v3578, 0.0
    %v3583 = vmax.f32 %v3579, 0.0
    %v3584 = vpack.c.bf16 %v3580, %v3580
    %v3585 = vpack.c.bf16 %v3581, %v3581
    %v3586 = vpack.c.bf16 %v3582, %v3582
    %v3587 = vpack.c.bf16 %v3583, %v3583
    %v3588 = vld [vmem:[#allocation8] sm:$0xff]
    %v3589 = vld [vmem:[#allocation8 + $0x8] sm:$0xff]
    %v3590 = vld [vmem:[#allocation8 + $0x10] sm:$0xff]
    %v3591 = vld [vmem:[#allocation8 + $0x18] sm:$0xff]
    %v3592 = vld [vmem:[#allocation8 + $0x20] sm:$0xff]
    %v3593 = vld [vmem:[#allocation8 + $0x28] sm:$0xff]
    %v3594 = vld [vmem:[#allocation8 + $0x30] sm:$0xff]
    %v3595 = vld [vmem:[#allocation8 + $0x38] sm:$0xff]
    %v3596 = vld [vmem:[#allocation8 + $0x40] sm:$0xff]
    %v3597 = vld [vmem:[#allocation8 + $0x48] sm:$0xff]
    %v3598 = vld [vmem:[#allocation8 + $0x50] sm:$0xff]
    %v3599 = vld [vmem:[#allocation8 + $0x58] sm:$0xff]
    %v3600 = vld [vmem:[#allocation8 + $0x60] sm:$0xff]
    %v3601 = vld [vmem:[#allocation8 + $0x68] sm:$0xff]
    %v3602 = vld [vmem:[#allocation8 + $0x70] sm:$0xff]
    %v3603 = vld [vmem:[#allocation8 + $0x78] sm:$0xff]
    %v3604 = vld [vmem:[#allocation8 + $0x80] sm:$0xff]
    %v3605 = vld [vmem:[#allocation8 + $0x88] sm:$0xff]
    %v3606 = vld [vmem:[#allocation8 + $0x90] sm:$0xff]
    %v3607 = vld [vmem:[#allocation8 + $0x98] sm:$0xff]
    %v3608 = vld [vmem:[#allocation8 + $0xa0] sm:$0xff]
    %v3609 = vld [vmem:[#allocation8 + $0xa8] sm:$0xff]
    %v3610 = vld [vmem:[#allocation8 + $0xb0] sm:$0xff]
    %v3611 = vld [vmem:[#allocation8 + $0xb8] sm:$0xff]
    %v3612 = vld [vmem:[#allocation8 + $0xc0] sm:$0xff]
    %v3613 = vld [vmem:[#allocation8 + $0xc8] sm:$0xff]
    %v3614 = vld [vmem:[#allocation8 + $0xd0] sm:$0xff]
    %v3615 = vld [vmem:[#allocation8 + $0xd8] sm:$0xff]
    %v3616 = vld [vmem:[#allocation8 + $0xe0] sm:$0xff]
    %v3617 = vld [vmem:[#allocation8 + $0xe8] sm:$0xff]
    %v3618 = vld [vmem:[#allocation8 + $0xf0] sm:$0xff]
    %v3619 = vld [vmem:[#allocation8 + $0xf8] sm:$0xff]
    %v3620 = vld [vmem:[#allocation8 + $0x100] sm:$0xff]
    %v3621 = vld [vmem:[#allocation8 + $0x108] sm:$0xff]
    %v3622 = vld [vmem:[#allocation8 + $0x110] sm:$0xff]
    %v3623 = vld [vmem:[#allocation8 + $0x118] sm:$0xff]
    %v3624 = vld [vmem:[#allocation8 + $0x120] sm:$0xff]
    %v3625 = vld [vmem:[#allocation8 + $0x128] sm:$0xff]
    %v3626 = vld [vmem:[#allocation8 + $0x130] sm:$0xff]
    %v3627 = vld [vmem:[#allocation8 + $0x138] sm:$0xff]
    %v3628 = vld [vmem:[#allocation8 + $0x140] sm:$0xff]
    %v3629 = vld [vmem:[#allocation8 + $0x148] sm:$0xff]
    %v3630 = vld [vmem:[#allocation8 + $0x150] sm:$0xff]
    %v3631 = vld [vmem:[#allocation8 + $0x158] sm:$0xff]
    %v3632 = vld [vmem:[#allocation8 + $0x160] sm:$0xff]
    %v3633 = vld [vmem:[#allocation8 + $0x168] sm:$0xff]
    %v3634 = vld [vmem:[#allocation8 + $0x170] sm:$0xff]
    %v3635 = vld [vmem:[#allocation8 + $0x178] sm:$0xff]
    %v3636 = vld [vmem:[#allocation8 + $0x180] sm:$0xff]
    %v3637 = vld [vmem:[#allocation8 + $0x188] sm:$0xff]
    %v3638 = vld [vmem:[#allocation8 + $0x190] sm:$0xff]
    %v3639 = vld [vmem:[#allocation8 + $0x198] sm:$0xff]
    %v3640 = vld [vmem:[#allocation8 + $0x1a0] sm:$0xff]
    %v3641 = vld [vmem:[#allocation8 + $0x1a8] sm:$0xff]
    %v3642 = vld [vmem:[#allocation8 + $0x1b0] sm:$0xff]
    %v3643 = vld [vmem:[#allocation8 + $0x1b8] sm:$0xff]
    %v3644 = vld [vmem:[#allocation8 + $0x1c0] sm:$0xff]
    %v3645 = vld [vmem:[#allocation8 + $0x1c8] sm:$0xff]
    %v3646 = vld [vmem:[#allocation8 + $0x1d0] sm:$0xff]
    %v3647 = vld [vmem:[#allocation8 + $0x1d8] sm:$0xff]
    %v3648 = vld [vmem:[#allocation8 + $0x1e0] sm:$0xff]
    %v3649 = vld [vmem:[#allocation8 + $0x1e8] sm:$0xff]
    %v3650 = vld [vmem:[#allocation8 + $0x1f0] sm:$0xff]
    %v3651 = vld [vmem:[#allocation8 + $0x1f8] sm:$0xff]
    %v3652 = vld [vmem:[#allocation8 + $0x200] sm:$0xff]
    %v3653 = vld [vmem:[#allocation8 + $0x208] sm:$0xff]
    %v3654 = vld [vmem:[#allocation8 + $0x210] sm:$0xff]
    %v3655 = vld [vmem:[#allocation8 + $0x218] sm:$0xff]
    %v3656 = vld [vmem:[#allocation8 + $0x220] sm:$0xff]
    %v3657 = vld [vmem:[#allocation8 + $0x228] sm:$0xff]
    %v3658 = vld [vmem:[#allocation8 + $0x230] sm:$0xff]
    %v3659 = vld [vmem:[#allocation8 + $0x238] sm:$0xff]
    %v3660 = vld [vmem:[#allocation8 + $0x240] sm:$0xff]
    %v3661 = vld [vmem:[#allocation8 + $0x248] sm:$0xff]
    %v3662 = vld [vmem:[#allocation8 + $0x250] sm:$0xff]
    %v3663 = vld [vmem:[#allocation8 + $0x258] sm:$0xff]
    %v3664 = vld [vmem:[#allocation8 + $0x260] sm:$0xff]
    %v3665 = vld [vmem:[#allocation8 + $0x268] sm:$0xff]
    %v3666 = vld [vmem:[#allocation8 + $0x270] sm:$0xff]
    %v3667 = vld [vmem:[#allocation8 + $0x278] sm:$0xff]
    %v3668 = vld [vmem:[#allocation8 + $0x280] sm:$0xff]
    %v3669 = vld [vmem:[#allocation8 + $0x288] sm:$0xff]
    %v3670 = vld [vmem:[#allocation8 + $0x290] sm:$0xff]
    %v3671 = vld [vmem:[#allocation8 + $0x298] sm:$0xff]
    %v3672 = vld [vmem:[#allocation8 + $0x2a0] sm:$0xff]
    %v3673 = vld [vmem:[#allocation8 + $0x2a8] sm:$0xff]
    %v3674 = vld [vmem:[#allocation8 + $0x2b0] sm:$0xff]
    %v3675 = vld [vmem:[#allocation8 + $0x2b8] sm:$0xff]
    %v3676 = vld [vmem:[#allocation8 + $0x2c0] sm:$0xff]
    %v3677 = vld [vmem:[#allocation8 + $0x2c8] sm:$0xff]
    %v3678 = vld [vmem:[#allocation8 + $0x2d0] sm:$0xff]
    %v3679 = vld [vmem:[#allocation8 + $0x2d8] sm:$0xff]
    %v3680 = vld [vmem:[#allocation8 + $0x2e0] sm:$0xff]
    %v3681 = vld [vmem:[#allocation8 + $0x2e8] sm:$0xff]
    %v3682 = vld [vmem:[#allocation8 + $0x2f0] sm:$0xff]
    %v3683 = vld [vmem:[#allocation8 + $0x2f8] sm:$0xff]
    %v3684 = vld [vmem:[#allocation8 + $0x300] sm:$0xff]
    %v3685 = vld [vmem:[#allocation8 + $0x308] sm:$0xff]
    %v3686 = vld [vmem:[#allocation8 + $0x310] sm:$0xff]
    %v3687 = vld [vmem:[#allocation8 + $0x318] sm:$0xff]
    %v3688 = vld [vmem:[#allocation8 + $0x320] sm:$0xff]
    %v3689 = vld [vmem:[#allocation8 + $0x328] sm:$0xff]
    %v3690 = vld [vmem:[#allocation8 + $0x330] sm:$0xff]
    %v3691 = vld [vmem:[#allocation8 + $0x338] sm:$0xff]
    %v3692 = vld [vmem:[#allocation8 + $0x340] sm:$0xff]
    %v3693 = vld [vmem:[#allocation8 + $0x348] sm:$0xff]
    %v3694 = vld [vmem:[#allocation8 + $0x350] sm:$0xff]
    %v3695 = vld [vmem:[#allocation8 + $0x358] sm:$0xff]
    %v3696 = vld [vmem:[#allocation8 + $0x360] sm:$0xff]
    %v3697 = vld [vmem:[#allocation8 + $0x368] sm:$0xff]
    %v3698 = vld [vmem:[#allocation8 + $0x370] sm:$0xff]
    %v3699 = vld [vmem:[#allocation8 + $0x378] sm:$0xff]
    %v3700 = vunpack.c.l.s8.bf16 %v3588
    %v3701 = vunpack.c.l.s8.bf16 %v3589
    %v3702 = vunpack.c.l.s8.bf16 %v3590
    %v3703 = vunpack.c.l.s8.bf16 %v3591
    %v3704 = vunpack.c.l.s8.bf16 %v3592
    %v3705 = vunpack.c.l.s8.bf16 %v3593
    %v3706 = vunpack.c.l.s8.bf16 %v3594
    %v3707 = vunpack.c.h.s8.bf16 %v3588
    %v3708 = vunpack.c.h.s8.bf16 %v3589
    %v3709 = vunpack.c.h.s8.bf16 %v3590
    %v3710 = vunpack.c.h.s8.bf16 %v3591
    %v3711 = vunpack.c.h.s8.bf16 %v3592
    %v3712 = vunpack.c.h.s8.bf16 %v3593
    %v3713 = vunpack.c.h.s8.bf16 %v3594
    %v3714 = vunpack.c.l.s8.bf16 %v3595
    %v3715 = vunpack.c.l.s8.bf16 %v3596
    %v3716 = vunpack.c.l.s8.bf16 %v3597
    %v3717 = vunpack.c.l.s8.bf16 %v3598
    %v3718 = vunpack.c.l.s8.bf16 %v3599
    %v3719 = vunpack.c.l.s8.bf16 %v3600
    %v3720 = vunpack.c.l.s8.bf16 %v3601
    %v3721 = vunpack.c.h.s8.bf16 %v3595
    %v3722 = vunpack.c.h.s8.bf16 %v3596
    %v3723 = vunpack.c.h.s8.bf16 %v3597
    %v3724 = vunpack.c.h.s8.bf16 %v3598
    %v3725 = vunpack.c.h.s8.bf16 %v3599
    %v3726 = vunpack.c.h.s8.bf16 %v3600
    %v3727 = vunpack.c.h.s8.bf16 %v3601
    %v3728 = vunpack.c.l.s8.bf16 %v3602
    %v3729 = vunpack.c.l.s8.bf16 %v3603
    %v3730 = vunpack.c.l.s8.bf16 %v3604
    %v3731 = vunpack.c.l.s8.bf16 %v3605
    %v3732 = vunpack.c.l.s8.bf16 %v3606
    %v3733 = vunpack.c.l.s8.bf16 %v3607
    %v3734 = vunpack.c.l.s8.bf16 %v3608
    %v3735 = vunpack.c.h.s8.bf16 %v3602
    %v3736 = vunpack.c.h.s8.bf16 %v3603
    %v3737 = vunpack.c.h.s8.bf16 %v3604
    %v3738 = vunpack.c.h.s8.bf16 %v3605
    %v3739 = vunpack.c.h.s8.bf16 %v3606
    %v3740 = vunpack.c.h.s8.bf16 %v3607
    %v3741 = vunpack.c.h.s8.bf16 %v3608
    %v3742 = vunpack.c.l.s8.bf16 %v3609
    %v3743 = vunpack.c.l.s8.bf16 %v3610
    %v3744 = vunpack.c.l.s8.bf16 %v3611
    %v3745 = vunpack.c.l.s8.bf16 %v3612
    %v3746 = vunpack.c.l.s8.bf16 %v3613
    %v3747 = vunpack.c.l.s8.bf16 %v3614
    %v3748 = vunpack.c.l.s8.bf16 %v3615
    %v3749 = vunpack.c.h.s8.bf16 %v3609
    %v3750 = vunpack.c.h.s8.bf16 %v3610
    %v3751 = vunpack.c.h.s8.bf16 %v3611
    %v3752 = vunpack.c.h.s8.bf16 %v3612
    %v3753 = vunpack.c.h.s8.bf16 %v3613
    %v3754 = vunpack.c.h.s8.bf16 %v3614
    %v3755 = vunpack.c.h.s8.bf16 %v3615
    %v3756 = vunpack.c.l.s8.bf16 %v3616
    %v3757 = vunpack.c.l.s8.bf16 %v3617
    %v3758 = vunpack.c.l.s8.bf16 %v3618
    %v3759 = vunpack.c.l.s8.bf16 %v3619
    %v3760 = vunpack.c.l.s8.bf16 %v3620
    %v3761 = vunpack.c.l.s8.bf16 %v3621
    %v3762 = vunpack.c.l.s8.bf16 %v3622
    %v3763 = vunpack.c.h.s8.bf16 %v3616
    %v3764 = vunpack.c.h.s8.bf16 %v3617
    %v3765 = vunpack.c.h.s8.bf16 %v3618
    %v3766 = vunpack.c.h.s8.bf16 %v3619
    %v3767 = vunpack.c.h.s8.bf16 %v3620
    %v3768 = vunpack.c.h.s8.bf16 %v3621
    %v3769 = vunpack.c.h.s8.bf16 %v3622
    %v3770 = vunpack.c.l.s8.bf16 %v3623
    %v3771 = vunpack.c.l.s8.bf16 %v3624
    %v3772 = vunpack.c.l.s8.bf16 %v3625
    %v3773 = vunpack.c.l.s8.bf16 %v3626
    %v3774 = vunpack.c.l.s8.bf16 %v3627
    %v3775 = vunpack.c.l.s8.bf16 %v3628
    %v3776 = vunpack.c.l.s8.bf16 %v3629
    %v3777 = vunpack.c.h.s8.bf16 %v3623
    %v3778 = vunpack.c.h.s8.bf16 %v3624
    %v3779 = vunpack.c.h.s8.bf16 %v3625
    %v3780 = vunpack.c.h.s8.bf16 %v3626
    %v3781 = vunpack.c.h.s8.bf16 %v3627
    %v3782 = vunpack.c.h.s8.bf16 %v3628
    %v3783 = vunpack.c.h.s8.bf16 %v3629
    %v3784 = vunpack.c.l.s8.bf16 %v3630
    %v3785 = vunpack.c.l.s8.bf16 %v3631
    %v3786 = vunpack.c.l.s8.bf16 %v3632
    %v3787 = vunpack.c.l.s8.bf16 %v3633
    %v3788 = vunpack.c.l.s8.bf16 %v3634
    %v3789 = vunpack.c.l.s8.bf16 %v3635
    %v3790 = vunpack.c.l.s8.bf16 %v3636
    %v3791 = vunpack.c.h.s8.bf16 %v3630
    %v3792 = vunpack.c.h.s8.bf16 %v3631
    %v3793 = vunpack.c.h.s8.bf16 %v3632
    %v3794 = vunpack.c.h.s8.bf16 %v3633
    %v3795 = vunpack.c.h.s8.bf16 %v3634
    %v3796 = vunpack.c.h.s8.bf16 %v3635
    %v3797 = vunpack.c.h.s8.bf16 %v3636
    %v3798 = vunpack.c.l.s8.bf16 %v3637
    %v3799 = vunpack.c.l.s8.bf16 %v3638
    %v3800 = vunpack.c.l.s8.bf16 %v3639
    %v3801 = vunpack.c.l.s8.bf16 %v3640
    %v3802 = vunpack.c.l.s8.bf16 %v3641
    %v3803 = vunpack.c.l.s8.bf16 %v3642
    %v3804 = vunpack.c.l.s8.bf16 %v3643
    %v3805 = vunpack.c.h.s8.bf16 %v3637
    %v3806 = vunpack.c.h.s8.bf16 %v3638
    %v3807 = vunpack.c.h.s8.bf16 %v3639
    %v3808 = vunpack.c.h.s8.bf16 %v3640
    %v3809 = vunpack.c.h.s8.bf16 %v3641
    %v3810 = vunpack.c.h.s8.bf16 %v3642
    %v3811 = vunpack.c.h.s8.bf16 %v3643
    %v3812 = vunpack.c.l.s8.bf16 %v3644
    %v3813 = vunpack.c.l.s8.bf16 %v3645
    %v3814 = vunpack.c.l.s8.bf16 %v3646
    %v3815 = vunpack.c.l.s8.bf16 %v3647
    %v3816 = vunpack.c.l.s8.bf16 %v3648
    %v3817 = vunpack.c.l.s8.bf16 %v3649
    %v3818 = vunpack.c.l.s8.bf16 %v3650
    %v3819 = vunpack.c.h.s8.bf16 %v3644
    %v3820 = vunpack.c.h.s8.bf16 %v3645
    %v3821 = vunpack.c.h.s8.bf16 %v3646
    %v3822 = vunpack.c.h.s8.bf16 %v3647
    %v3823 = vunpack.c.h.s8.bf16 %v3648
    %v3824 = vunpack.c.h.s8.bf16 %v3649
    %v3825 = vunpack.c.h.s8.bf16 %v3650
    %v3826 = vunpack.c.l.s8.bf16 %v3651
    %v3827 = vunpack.c.l.s8.bf16 %v3652
    %v3828 = vunpack.c.l.s8.bf16 %v3653
    %v3829 = vunpack.c.l.s8.bf16 %v3654
    %v3830 = vunpack.c.l.s8.bf16 %v3655
    %v3831 = vunpack.c.l.s8.bf16 %v3656
    %v3832 = vunpack.c.l.s8.bf16 %v3657
    %v3833 = vunpack.c.h.s8.bf16 %v3651
    %v3834 = vunpack.c.h.s8.bf16 %v3652
    %v3835 = vunpack.c.h.s8.bf16 %v3653
    %v3836 = vunpack.c.h.s8.bf16 %v3654
    %v3837 = vunpack.c.h.s8.bf16 %v3655
    %v3838 = vunpack.c.h.s8.bf16 %v3656
    %v3839 = vunpack.c.h.s8.bf16 %v3657
    %v3840 = vunpack.c.l.s8.bf16 %v3658
    %v3841 = vunpack.c.l.s8.bf16 %v3659
    %v3842 = vunpack.c.l.s8.bf16 %v3660
    %v3843 = vunpack.c.l.s8.bf16 %v3661
    %v3844 = vunpack.c.l.s8.bf16 %v3662
    %v3845 = vunpack.c.l.s8.bf16 %v3663
    %v3846 = vunpack.c.l.s8.bf16 %v3664
    %v3847 = vunpack.c.h.s8.bf16 %v3658
    %v3848 = vunpack.c.h.s8.bf16 %v3659
    %v3849 = vunpack.c.h.s8.bf16 %v3660
    %v3850 = vunpack.c.h.s8.bf16 %v3661
    %v3851 = vunpack.c.h.s8.bf16 %v3662
    %v3852 = vunpack.c.h.s8.bf16 %v3663
    %v3853 = vunpack.c.h.s8.bf16 %v3664
    %v3854 = vunpack.c.l.s8.bf16 %v3665
    %v3855 = vunpack.c.l.s8.bf16 %v3666
    %v3856 = vunpack.c.l.s8.bf16 %v3667
    %v3857 = vunpack.c.l.s8.bf16 %v3668
    %v3858 = vunpack.c.l.s8.bf16 %v3669
    %v3859 = vunpack.c.l.s8.bf16 %v3670
    %v3860 = vunpack.c.l.s8.bf16 %v3671
    %v3861 = vunpack.c.h.s8.bf16 %v3665
    %v3862 = vunpack.c.h.s8.bf16 %v3666
    %v3863 = vunpack.c.h.s8.bf16 %v3667
    %v3864 = vunpack.c.h.s8.bf16 %v3668
    %v3865 = vunpack.c.h.s8.bf16 %v3669
    %v3866 = vunpack.c.h.s8.bf16 %v3670
    %v3867 = vunpack.c.h.s8.bf16 %v3671
    %v3868 = vunpack.c.l.s8.bf16 %v3672
    %v3869 = vunpack.c.l.s8.bf16 %v3673
    %v3870 = vunpack.c.l.s8.bf16 %v3674
    %v3871 = vunpack.c.l.s8.bf16 %v3675
    %v3872 = vunpack.c.l.s8.bf16 %v3676
    %v3873 = vunpack.c.l.s8.bf16 %v3677
    %v3874 = vunpack.c.l.s8.bf16 %v3678
    %v3875 = vunpack.c.h.s8.bf16 %v3672
    %v3876 = vunpack.c.h.s8.bf16 %v3673
    %v3877 = vunpack.c.h.s8.bf16 %v3674
    %v3878 = vunpack.c.h.s8.bf16 %v3675
    %v3879 = vunpack.c.h.s8.bf16 %v3676
    %v3880 = vunpack.c.h.s8.bf16 %v3677
    %v3881 = vunpack.c.h.s8.bf16 %v3678
    %v3882 = vunpack.c.l.s8.bf16 %v3679
    %v3883 = vunpack.c.l.s8.bf16 %v3680
    %v3884 = vunpack.c.l.s8.bf16 %v3681
    %v3885 = vunpack.c.l.s8.bf16 %v3682
    %v3886 = vunpack.c.l.s8.bf16 %v3683
    %v3887 = vunpack.c.l.s8.bf16 %v3684
    %v3888 = vunpack.c.l.s8.bf16 %v3685
    %v3889 = vunpack.c.h.s8.bf16 %v3679
    %v3890 = vunpack.c.h.s8.bf16 %v3680
    %v3891 = vunpack.c.h.s8.bf16 %v3681
    %v3892 = vunpack.c.h.s8.bf16 %v3682
    %v3893 = vunpack.c.h.s8.bf16 %v3683
    %v3894 = vunpack.c.h.s8.bf16 %v3684
    %v3895 = vunpack.c.h.s8.bf16 %v3685
    %v3896 = vunpack.c.l.s8.bf16 %v3686
    %v3897 = vunpack.c.l.s8.bf16 %v3687
    %v3898 = vunpack.c.l.s8.bf16 %v3688
    %v3899 = vunpack.c.l.s8.bf16 %v3689
    %v3900 = vunpack.c.l.s8.bf16 %v3690
    %v3901 = vunpack.c.l.s8.bf16 %v3691
    %v3902 = vunpack.c.l.s8.bf16 %v3692
    %v3903 = vunpack.c.h.s8.bf16 %v3686
    %v3904 = vunpack.c.h.s8.bf16 %v3687
    %v3905 = vunpack.c.h.s8.bf16 %v3688
    %v3906 = vunpack.c.h.s8.bf16 %v3689
    %v3907 = vunpack.c.h.s8.bf16 %v3690
    %v3908 = vunpack.c.h.s8.bf16 %v3691
    %v3909 = vunpack.c.h.s8.bf16 %v3692
    %v3910 = vunpack.c.l.s8.bf16 %v3693
    %v3911 = vunpack.c.l.s8.bf16 %v3694
    %v3912 = vunpack.c.l.s8.bf16 %v3695
    %v3913 = vunpack.c.l.s8.bf16 %v3696
    %v3914 = vunpack.c.l.s8.bf16 %v3697
    %v3915 = vunpack.c.l.s8.bf16 %v3698
    %v3916 = vunpack.c.l.s8.bf16 %v3699
    %v3917 = vunpack.c.h.s8.bf16 %v3693
    %v3918 = vunpack.c.h.s8.bf16 %v3694
    %v3919 = vunpack.c.h.s8.bf16 %v3695
    %v3920 = vunpack.c.h.s8.bf16 %v3696
    %v3921 = vunpack.c.h.s8.bf16 %v3697
    %v3922 = vunpack.c.h.s8.bf16 %v3698
    %v3923 = vunpack.c.h.s8.bf16 %v3699
    %3924 = vmatprep.subr.bf16.mxu0 %v3750
    %3925 = vmatpush1.bf16.msra.mxu0 %v3749
    %3926 = vmatprep.subr.bf16.mxu0 %v3743
    %3927 = vmatpush1.bf16.msra.mxu0 %v3742
    %3928 = vmatprep.subr.bf16.mxu0 %v3736
    %3929 = vmatpush1.bf16.msra.mxu0 %v3735
    %3930 = vmatprep.subr.bf16.mxu0 %v3729
    %3931 = vmatpush1.bf16.msra.mxu0 %v3728
    %3932 = vmatprep.subr.bf16.mxu0 %v3722
    %3933 = vmatpush1.bf16.msra.mxu0 %v3721
    %3934 = vmatprep.subr.bf16.mxu0 %v3715
    %3935 = vmatpush1.bf16.msra.mxu0 %v3714
    %3936 = vmatprep.subr.bf16.mxu0 %v3708
    %3937 = vmatpush1.bf16.msra.mxu0 %v3707
    %3938 = vmatprep.subr.bf16.mxu0 %v3701
    %3939 = vmatpush1.bf16.msra.mxu0 %v3700
    %3940 = vmatprep.subr.bf16.mxu0 %v3806
    %3941 = vmatpush2.bf16.msra.mxu0 %v3805
    %3942 = vmatprep.subr.bf16.mxu0 %v3799
    %3943 = vmatpush2.bf16.msra.mxu0 %v3798
    %3944 = vmatprep.subr.bf16.mxu0 %v3792
    %3945 = vmatpush2.bf16.msra.mxu0 %v3791
    %3946 = vmatprep.subr.bf16.mxu0 %v3785
    %3947 = vmatpush2.bf16.msra.mxu0 %v3784
    %3948 = vmatprep.subr.bf16.mxu0 %v3778
    %3949 = vmatpush2.bf16.msra.mxu0 %v3777
    %3950 = vmatprep.subr.bf16.mxu0 %v3771
    %3951 = vmatpush2.bf16.msra.mxu0 %v3770
    %3952 = vmatprep.subr.bf16.mxu0 %v3764
    %3953 = vmatpush2.bf16.msra.mxu0 %v3763
    %3954 = vmatprep.subr.bf16.mxu0 %v3757
    %3955 = vmatpush2.bf16.msra.mxu0 %v3756
    %3956 = vmatprep.mubr.bf16.mxu0 %v3585
    %3957 = vmatmul.mubr.bf16.gmra.mxu0 %v3584
    %v3958 = vpop.f32.mrf.mxu0
    %v3959 = vadd.f32 0.0, %v3958
    %v3960 = vpop.f32.mrf.mxu0
    %v3961 = vadd.f32 0.0, %v3960
    %v3962 = vpop.f32.mrf.mxu0
    %v3963 = vpop.f32.mrf.mxu0
    %3964 = vdwg.mxu0
    %3965 = vmatprep.subr.bf16.mxu0 %v3862
    %3966 = vmatpush1.bf16.msra.mxu0 %v3861
    %3967 = vmatprep.subr.bf16.mxu0 %v3855
    %3968 = vmatpush1.bf16.msra.mxu0 %v3854
    %3969 = vmatprep.subr.bf16.mxu0 %v3848
    %3970 = vmatpush1.bf16.msra.mxu0 %v3847
    %3971 = vmatprep.subr.bf16.mxu0 %v3841
    %3972 = vmatpush1.bf16.msra.mxu0 %v3840
    %3973 = vmatprep.subr.bf16.mxu0 %v3834
    %3974 = vmatpush1.bf16.msra.mxu0 %v3833
    %3975 = vmatprep.subr.bf16.mxu0 %v3827
    %3976 = vmatpush1.bf16.msra.mxu0 %v3826
    %3977 = vmatprep.subr.bf16.mxu0 %v3820
    %3978 = vmatpush1.bf16.msra.mxu0 %v3819
    %3979 = vmatprep.subr.bf16.mxu0 %v3813
    %3980 = vmatpush1.bf16.msra.mxu0 %v3812
    %3981 = vmatprep.subr.bf16.mxu0 %v3918
    %3982 = vmatpush2.bf16.msra.mxu0 %v3917
    %3983 = vmatprep.subr.bf16.mxu0 %v3911
    %3984 = vmatpush2.bf16.msra.mxu0 %v3910
    %3985 = vmatprep.subr.bf16.mxu0 %v3904
    %3986 = vmatpush2.bf16.msra.mxu0 %v3903
    %3987 = vmatprep.subr.bf16.mxu0 %v3897
    %3988 = vmatpush2.bf16.msra.mxu0 %v3896
    %3989 = vmatprep.subr.bf16.mxu0 %v3890
    %3990 = vmatpush2.bf16.msra.mxu0 %v3889
    %3991 = vmatprep.subr.bf16.mxu0 %v3883
    %3992 = vmatpush2.bf16.msra.mxu0 %v3882
    %3993 = vmatprep.subr.bf16.mxu0 %v3876
    %3994 = vmatpush2.bf16.msra.mxu0 %v3875
    %3995 = vmatprep.subr.bf16.mxu0 %v3869
    %3996 = vmatpush2.bf16.msra.mxu0 %v3868
    %3997 = vmatprep.mubr.bf16.mxu0 %v3587
    %3998 = vmatmul.mubr.bf16.gmra.mxu0 %v3586
    %v3999 = vpop.f32.mrf.mxu0
    %v4000 = vadd.f32 %v3959, %v3999
    %v4001 = vpop.f32.mrf.mxu0
    %v4002 = vadd.f32 %v3961, %v4001
    %v4003 = vpop.f32.mrf.mxu0
    %v4004 = vpop.f32.mrf.mxu0
    %4005 = vdwg.mxu0
    %4006 = vmatprep.subr.bf16.mxu0 %v3752
    %4007 = vmatpush1.bf16.msra.mxu0 %v3751
    %4008 = vmatprep.subr.bf16.mxu0 %v3745
    %4009 = vmatpush1.bf16.msra.mxu0 %v3744
    %4010 = vmatprep.subr.bf16.mxu0 %v3738
    %4011 = vmatpush1.bf16.msra.mxu0 %v3737
    %4012 = vmatprep.subr.bf16.mxu0 %v3731
    %4013 = vmatpush1.bf16.msra.mxu0 %v3730
    %4014 = vmatprep.subr.bf16.mxu0 %v3724
    %4015 = vmatpush1.bf16.msra.mxu0 %v3723
    %4016 = vmatprep.subr.bf16.mxu0 %v3717
    %4017 = vmatpush1.bf16.msra.mxu0 %v3716
    %4018 = vmatprep.subr.bf16.mxu0 %v3710
    %4019 = vmatpush1.bf16.msra.mxu0 %v3709
    %4020 = vmatprep.subr.bf16.mxu0 %v3703
    %4021 = vmatpush1.bf16.msra.mxu0 %v3702
    %4022 = vmatprep.subr.bf16.mxu0 %v3808
    %4023 = vmatpush2.bf16.msra.mxu0 %v3807
    %4024 = vmatprep.subr.bf16.mxu0 %v3801
    %4025 = vmatpush2.bf16.msra.mxu0 %v3800
    %4026 = vmatprep.subr.bf16.mxu0 %v3794
    %4027 = vmatpush2.bf16.msra.mxu0 %v3793
    %4028 = vmatprep.subr.bf16.mxu0 %v3787
    %4029 = vmatpush2.bf16.msra.mxu0 %v3786
    %4030 = vmatprep.subr.bf16.mxu0 %v3780
    %4031 = vmatpush2.bf16.msra.mxu0 %v3779
    %4032 = vmatprep.subr.bf16.mxu0 %v3773
    %4033 = vmatpush2.bf16.msra.mxu0 %v3772
    %4034 = vmatprep.subr.bf16.mxu0 %v3766
    %4035 = vmatpush2.bf16.msra.mxu0 %v3765
    %4036 = vmatprep.subr.bf16.mxu0 %v3759
    %4037 = vmatpush2.bf16.msra.mxu0 %v3758
    %4038 = vmatprep.mubr.bf16.mxu0 %v3585
    %4039 = vmatmul.mubr.bf16.gmra.mxu0 %v3584
    %v4040 = vpop.f32.mrf.mxu0
    %v4041 = vadd.f32 0.0, %v4040
    %v4042 = vpop.f32.mrf.mxu0
    %v4043 = vadd.f32 0.0, %v4042
    %v4044 = vpop.f32.mrf.mxu0
    %v4045 = vpop.f32.mrf.mxu0
    %4046 = vdwg.mxu0
    %4047 = vmatprep.subr.bf16.mxu0 %v3864
    %4048 = vmatpush1.bf16.msra.mxu0 %v3863
    %4049 = vmatprep.subr.bf16.mxu0 %v3857
    %4050 = vmatpush1.bf16.msra.mxu0 %v3856
    %4051 = vmatprep.subr.bf16.mxu0 %v3850
    %4052 = vmatpush1.bf16.msra.mxu0 %v3849
    %4053 = vmatprep.subr.bf16.mxu0 %v3843
    %4054 = vmatpush1.bf16.msra.mxu0 %v3842
    %4055 = vmatprep.subr.bf16.mxu0 %v3836
    %4056 = vmatpush1.bf16.msra.mxu0 %v3835
    %4057 = vmatprep.subr.bf16.mxu0 %v3829
    %4058 = vmatpush1.bf16.msra.mxu0 %v3828
    %4059 = vmatprep.subr.bf16.mxu0 %v3822
    %4060 = vmatpush1.bf16.msra.mxu0 %v3821
    %4061 = vmatprep.subr.bf16.mxu0 %v3815
    %4062 = vmatpush1.bf16.msra.mxu0 %v3814
    %4063 = vmatprep.subr.bf16.mxu0 %v3920
    %4064 = vmatpush2.bf16.msra.mxu0 %v3919
    %4065 = vmatprep.subr.bf16.mxu0 %v3913
    %4066 = vmatpush2.bf16.msra.mxu0 %v3912
    %4067 = vmatprep.subr.bf16.mxu0 %v3906
    %4068 = vmatpush2.bf16.msra.mxu0 %v3905
    %4069 = vmatprep.subr.bf16.mxu0 %v3899
    %4070 = vmatpush2.bf16.msra.mxu0 %v3898
    %4071 = vmatprep.subr.bf16.mxu0 %v3892
    %4072 = vmatpush2.bf16.msra.mxu0 %v3891
    %4073 = vmatprep.subr.bf16.mxu0 %v3885
    %4074 = vmatpush2.bf16.msra.mxu0 %v3884
    %4075 = vmatprep.subr.bf16.mxu0 %v3878
    %4076 = vmatpush2.bf16.msra.mxu0 %v3877
    %4077 = vmatprep.subr.bf16.mxu0 %v3871
    %4078 = vmatpush2.bf16.msra.mxu0 %v3870
    %4079 = vmatprep.mubr.bf16.mxu0 %v3587
    %4080 = vmatmul.mubr.bf16.gmra.mxu0 %v3586
    %v4081 = vpop.f32.mrf.mxu0
    %v4082 = vadd.f32 %v4041, %v4081
    %v4083 = vpop.f32.mrf.mxu0
    %v4084 = vadd.f32 %v4043, %v4083
    %v4085 = vpop.f32.mrf.mxu0
    %v4086 = vpop.f32.mrf.mxu0
    %4087 = vdwg.mxu0
    %4088 = vmatprep.subr.bf16.mxu0 %v3754
    %4089 = vmatpush1.bf16.msra.mxu0 %v3753
    %4090 = vmatprep.subr.bf16.mxu0 %v3747
    %4091 = vmatpush1.bf16.msra.mxu0 %v3746
    %4092 = vmatprep.subr.bf16.mxu0 %v3740
    %4093 = vmatpush1.bf16.msra.mxu0 %v3739
    %4094 = vmatprep.subr.bf16.mxu0 %v3733
    %4095 = vmatpush1.bf16.msra.mxu0 %v3732
    %4096 = vmatprep.subr.bf16.mxu0 %v3726
    %4097 = vmatpush1.bf16.msra.mxu0 %v3725
    %4098 = vmatprep.subr.bf16.mxu0 %v3719
    %4099 = vmatpush1.bf16.msra.mxu0 %v3718
    %4100 = vmatprep.subr.bf16.mxu0 %v3712
    %4101 = vmatpush1.bf16.msra.mxu0 %v3711
    %4102 = vmatprep.subr.bf16.mxu0 %v3705
    %4103 = vmatpush1.bf16.msra.mxu0 %v3704
    %4104 = vmatprep.subr.bf16.mxu0 %v3810
    %4105 = vmatpush2.bf16.msra.mxu0 %v3809
    %4106 = vmatprep.subr.bf16.mxu0 %v3803
    %4107 = vmatpush2.bf16.msra.mxu0 %v3802
    %4108 = vmatprep.subr.bf16.mxu0 %v3796
    %4109 = vmatpush2.bf16.msra.mxu0 %v3795
    %4110 = vmatprep.subr.bf16.mxu0 %v3789
    %4111 = vmatpush2.bf16.msra.mxu0 %v3788
    %4112 = vmatprep.subr.bf16.mxu0 %v3782
    %4113 = vmatpush2.bf16.msra.mxu0 %v3781
    %4114 = vmatprep.subr.bf16.mxu0 %v3775
    %4115 = vmatpush2.bf16.msra.mxu0 %v3774
    %4116 = vmatprep.subr.bf16.mxu0 %v3768
    %4117 = vmatpush2.bf16.msra.mxu0 %v3767
    %4118 = vmatprep.subr.bf16.mxu0 %v3761
    %4119 = vmatpush2.bf16.msra.mxu0 %v3760
    %4120 = vmatprep.mubr.bf16.mxu0 %v3585
    %4121 = vmatmul.mubr.bf16.gmra.mxu0 %v3584
    %v4122 = vpop.f32.mrf.mxu0
    %v4123 = vadd.f32 0.0, %v4122
    %v4124 = vpop.f32.mrf.mxu0
    %v4125 = vadd.f32 0.0, %v4124
    %v4126 = vpop.f32.mrf.mxu0
    %v4127 = vpop.f32.mrf.mxu0
    %4128 = vdwg.mxu0
    %4129 = vmatprep.subr.bf16.mxu0 %v3866
    %4130 = vmatpush1.bf16.msra.mxu0 %v3865
    %4131 = vmatprep.subr.bf16.mxu0 %v3859
    %4132 = vmatpush1.bf16.msra.mxu0 %v3858
    %4133 = vmatprep.subr.bf16.mxu0 %v3852
    %4134 = vmatpush1.bf16.msra.mxu0 %v3851
    %4135 = vmatprep.subr.bf16.mxu0 %v3845
    %4136 = vmatpush1.bf16.msra.mxu0 %v3844
    %4137 = vmatprep.subr.bf16.mxu0 %v3838
    %4138 = vmatpush1.bf16.msra.mxu0 %v3837
    %4139 = vmatprep.subr.bf16.mxu0 %v3831
    %4140 = vmatpush1.bf16.msra.mxu0 %v3830
    %4141 = vmatprep.subr.bf16.mxu0 %v3824
    %4142 = vmatpush1.bf16.msra.mxu0 %v3823
    %4143 = vmatprep.subr.bf16.mxu0 %v3817
    %4144 = vmatpush1.bf16.msra.mxu0 %v3816
    %4145 = vmatprep.subr.bf16.mxu0 %v3922
    %4146 = vmatpush2.bf16.msra.mxu0 %v3921
    %4147 = vmatprep.subr.bf16.mxu0 %v3915
    %4148 = vmatpush2.bf16.msra.mxu0 %v3914
    %4149 = vmatprep.subr.bf16.mxu0 %v3908
    %4150 = vmatpush2.bf16.msra.mxu0 %v3907
    %4151 = vmatprep.subr.bf16.mxu0 %v3901
    %4152 = vmatpush2.bf16.msra.mxu0 %v3900
    %4153 = vmatprep.subr.bf16.mxu0 %v3894
    %4154 = vmatpush2.bf16.msra.mxu0 %v3893
    %4155 = vmatprep.subr.bf16.mxu0 %v3887
    %4156 = vmatpush2.bf16.msra.mxu0 %v3886
    %4157 = vmatprep.subr.bf16.mxu0 %v3880
    %4158 = vmatpush2.bf16.msra.mxu0 %v3879
    %4159 = vmatprep.subr.bf16.mxu0 %v3873
    %4160 = vmatpush2.bf16.msra.mxu0 %v3872
    %4161 = vmatprep.mubr.bf16.mxu0 %v3587
    %4162 = vmatmul.mubr.bf16.gmra.mxu0 %v3586
    %v4163 = vpop.f32.mrf.mxu0
    %v4164 = vadd.f32 %v4123, %v4163
    %v4165 = vpop.f32.mrf.mxu0
    %v4166 = vadd.f32 %v4125, %v4165
    %v4167 = vpop.f32.mrf.mxu0
    %v4168 = vpop.f32.mrf.mxu0
    %4169 = vdwg.mxu0
    %4170 = vmatprep.subr.bf16.mxu0 0
    %4171 = vmatpush1.bf16.msra.mxu0 %v3755
    %4172 = vmatprep.subr.bf16.mxu0 0
    %4173 = vmatpush1.bf16.msra.mxu0 %v3748
    %4174 = vmatprep.subr.bf16.mxu0 0
    %4175 = vmatpush1.bf16.msra.mxu0 %v3741
    %4176 = vmatprep.subr.bf16.mxu0 0
    %4177 = vmatpush1.bf16.msra.mxu0 %v3734
    %4178 = vmatprep.subr.bf16.mxu0 0
    %4179 = vmatpush1.bf16.msra.mxu0 %v3727
    %4180 = vmatprep.subr.bf16.mxu0 0
    %4181 = vmatpush1.bf16.msra.mxu0 %v3720
    %4182 = vmatprep.subr.bf16.mxu0 0
    %4183 = vmatpush1.bf16.msra.mxu0 %v3713
    %4184 = vmatprep.subr.bf16.mxu0 0
    %4185 = vmatpush1.bf16.msra.mxu0 %v3706
    %4186 = vmatprep.subr.bf16.mxu0 0
    %4187 = vmatpush2.bf16.msra.mxu0 %v3811
    %4188 = vmatprep.subr.bf16.mxu0 0
    %4189 = vmatpush2.bf16.msra.mxu0 %v3804
    %4190 = vmatprep.subr.bf16.mxu0 0
    %4191 = vmatpush2.bf16.msra.mxu0 %v3797
    %4192 = vmatprep.subr.bf16.mxu0 0
    %4193 = vmatpush2.bf16.msra.mxu0 %v3790
    %4194 = vmatprep.subr.bf16.mxu0 0
    %4195 = vmatpush2.bf16.msra.mxu0 %v3783
    %4196 = vmatprep.subr.bf16.mxu0 0
    %4197 = vmatpush2.bf16.msra.mxu0 %v3776
    %4198 = vmatprep.subr.bf16.mxu0 0
    %4199 = vmatpush2.bf16.msra.mxu0 %v3769
    %4200 = vmatprep.subr.bf16.mxu0 0
    %4201 = vmatpush2.bf16.msra.mxu0 %v3762
    %4202 = vmatprep.mubr.bf16.mxu0 %v3585
    %4203 = vmatmul.mubr.bf16.gmra.mxu0 %v3584
    %v4204 = vpop.f32.mrf.mxu0
    %v4205 = vadd.f32 0.0, %v4204
    %v4206 = vpop.f32.mrf.mxu0
    %v4207 = vpop.f32.mrf.mxu0
    %v4208 = vpop.f32.mrf.mxu0
    %4209 = vdwg.mxu0
    %4210 = vmatprep.subr.bf16.mxu0 0
    %4211 = vmatpush1.bf16.msra.mxu0 %v3867
    %4212 = vmatprep.subr.bf16.mxu0 0
    %4213 = vmatpush1.bf16.msra.mxu0 %v3860
    %4214 = vmatprep.subr.bf16.mxu0 0
    %4215 = vmatpush1.bf16.msra.mxu0 %v3853
    %4216 = vmatprep.subr.bf16.mxu0 0
    %4217 = vmatpush1.bf16.msra.mxu0 %v3846
    %4218 = vmatprep.subr.bf16.mxu0 0
    %4219 = vmatpush1.bf16.msra.mxu0 %v3839
    %4220 = vmatprep.subr.bf16.mxu0 0
    %4221 = vmatpush1.bf16.msra.mxu0 %v3832
    %4222 = vmatprep.subr.bf16.mxu0 0
    %4223 = vmatpush1.bf16.msra.mxu0 %v3825
    %4224 = vmatprep.subr.bf16.mxu0 0
    %4225 = vmatpush1.bf16.msra.mxu0 %v3818
    %4226 = vmatprep.subr.bf16.mxu0 0
    %4227 = vmatpush2.bf16.msra.mxu0 %v3923
    %4228 = vmatprep.subr.bf16.mxu0 0
    %4229 = vmatpush2.bf16.msra.mxu0 %v3916
    %4230 = vmatprep.subr.bf16.mxu0 0
    %4231 = vmatpush2.bf16.msra.mxu0 %v3909
    %4232 = vmatprep.subr.bf16.mxu0 0
    %4233 = vmatpush2.bf16.msra.mxu0 %v3902
    %4234 = vmatprep.subr.bf16.mxu0 0
    %4235 = vmatpush2.bf16.msra.mxu0 %v3895
    %4236 = vmatprep.subr.bf16.mxu0 0
    %4237 = vmatpush2.bf16.msra.mxu0 %v3888
    %4238 = vmatprep.subr.bf16.mxu0 0
    %4239 = vmatpush2.bf16.msra.mxu0 %v3881
    %4240 = vmatprep.subr.bf16.mxu0 0
    %4241 = vmatpush2.bf16.msra.mxu0 %v3874
    %4242 = vmatprep.mubr.bf16.mxu0 %v3587
    %4243 = vmatmul.mubr.bf16.gmra.mxu0 %v3586
    %v4244 = vpop.f32.mrf.mxu0
    %v4245 = vadd.f32 %v4205, %v4244
    %v4246 = vpop.f32.mrf.mxu0
    %v4247 = vpop.f32.mrf.mxu0
    %v4248 = vpop.f32.mrf.mxu0
    %4249 = vdwg.mxu0
    %v4252 = vlaneseq
    %v4253 = vshrl.u32 %v4252, 7
    %v4254 = vsub.s32 0, %v4253
    %v4255 = vrot.slane %v97, %v4254
    %v4256 = vlaneseq
    %v4257 = vshrl.u32 %v4256, 7
    %v4258 = vsub.s32 2, %v4257
    %v4259 = vrot.slane %v97, %v4258
    %v4260 = vlaneseq
    %v4261 = vshrl.u32 %v4260, 7
    %v4262 = vsub.s32 4, %v4261
    %v4263 = vrot.slane %v97, %v4262
    %v4264 = vlaneseq
    %v4265 = vshrl.u32 %v4264, 7
    %v4266 = vsub.s32 6, %v4265
    %v4267 = vrot.slane %v97, %v4266
    %v4268 = vlaneseq
    %v4269 = vshrl.u32 %v4268, 7
    %v4270 = vsub.s32 0, %v4269
    %v4271 = vrot.slane %v98, %v4270
    %v4272 = vlaneseq
    %v4273 = vshrl.u32 %v4272, 7
    %v4274 = vsub.s32 2, %v4273
    %v4275 = vrot.slane %v98, %v4274
    %v4276 = vlaneseq
    %v4277 = vshrl.u32 %v4276, 7
    %v4278 = vsub.s32 4, %v4277
    %v4279 = vrot.slane %v98, %v4278
    %v4287 = vlaneseq
    %v4288 = vshrl.u32 %v4287, 7
    %v4289 = vsub.s32 0, %v4288
    %v4290 = vrot.slane %v4255, %v4289
    %v4291 = vlaneseq
    %v4292 = vshrl.u32 %v4291, 7
    %v4293 = vsub.s32 0, %v4292
    %v4294 = vrot.slane %v4259, %v4293
    %v4295 = vlaneseq
    %v4296 = vshrl.u32 %v4295, 7
    %v4297 = vsub.s32 0, %v4296
    %v4298 = vrot.slane %v4263, %v4297
    %v4299 = vlaneseq
    %v4300 = vshrl.u32 %v4299, 7
    %v4301 = vsub.s32 0, %v4300
    %v4302 = vrot.slane %v4267, %v4301
    %v4303 = vlaneseq
    %v4304 = vshrl.u32 %v4303, 7
    %v4305 = vsub.s32 0, %v4304
    %v4306 = vrot.slane %v4271, %v4305
    %v4307 = vlaneseq
    %v4308 = vshrl.u32 %v4307, 7
    %v4309 = vsub.s32 0, %v4308
    %v4310 = vrot.slane %v4275, %v4309
    %v4311 = vlaneseq
    %v4312 = vshrl.u32 %v4311, 7
    %v4313 = vsub.s32 0, %v4312
    %v4314 = vrot.slane %v4279, %v4313
    %v4315 = vmul.f32 %v4000, %v4290
    %v4316 = vmul.f32 %v4002, %v4294
    %v4317 = vmul.f32 %v4082, %v4298
    %v4318 = vmul.f32 %v4084, %v4302
    %v4319 = vmul.f32 %v4164, %v4306
    %v4320 = vmul.f32 %v4166, %v4310
    %v4321 = vmul.f32 %v4245, %v4314
    %v4322 = vlaneseq
    %v4323 = vshrl.u32 %v4322, 7
    %v4324 = vsub.s32 1, %v4323
    %v4325 = vrot.slane %v97, %v4324
    %v4326 = vlaneseq
    %v4327 = vshrl.u32 %v4326, 7
    %v4328 = vsub.s32 3, %v4327
    %v4329 = vrot.slane %v97, %v4328
    %v4330 = vlaneseq
    %v4331 = vshrl.u32 %v4330, 7
    %v4332 = vsub.s32 5, %v4331
    %v4333 = vrot.slane %v97, %v4332
    %v4334 = vlaneseq
    %v4335 = vshrl.u32 %v4334, 7
    %v4336 = vsub.s32 7, %v4335
    %v4337 = vrot.slane %v97, %v4336
    %v4338 = vlaneseq
    %v4339 = vshrl.u32 %v4338, 7
    %v4340 = vsub.s32 1, %v4339
    %v4341 = vrot.slane %v98, %v4340
    %v4342 = vlaneseq
    %v4343 = vshrl.u32 %v4342, 7
    %v4344 = vsub.s32 3, %v4343
    %v4345 = vrot.slane %v98, %v4344
    %v4346 = vlaneseq
    %v4347 = vshrl.u32 %v4346, 7
    %v4348 = vsub.s32 5, %v4347
    %v4349 = vrot.slane %v98, %v4348
    %v4357 = vlaneseq
    %v4358 = vshrl.u32 %v4357, 7
    %v4359 = vsub.s32 1, %v4358
    %v4360 = vrot.slane %v4325, %v4359
    %v4361 = vlaneseq
    %v4362 = vshrl.u32 %v4361, 7
    %v4363 = vsub.s32 1, %v4362
    %v4364 = vrot.slane %v4329, %v4363
    %v4365 = vlaneseq
    %v4366 = vshrl.u32 %v4365, 7
    %v4367 = vsub.s32 1, %v4366
    %v4368 = vrot.slane %v4333, %v4367
    %v4369 = vlaneseq
    %v4370 = vshrl.u32 %v4369, 7
    %v4371 = vsub.s32 1, %v4370
    %v4372 = vrot.slane %v4337, %v4371
    %v4373 = vlaneseq
    %v4374 = vshrl.u32 %v4373, 7
    %v4375 = vsub.s32 1, %v4374
    %v4376 = vrot.slane %v4341, %v4375
    %v4377 = vlaneseq
    %v4378 = vshrl.u32 %v4377, 7
    %v4379 = vsub.s32 1, %v4378
    %v4380 = vrot.slane %v4345, %v4379
    %v4381 = vlaneseq
    %v4382 = vshrl.u32 %v4381, 7
    %v4383 = vsub.s32 1, %v4382
    %v4384 = vrot.slane %v4349, %v4383
    %v4385 = vadd.f32 %v4315, %v4360
    %v4386 = vadd.f32 %v4316, %v4364
    %v4387 = vadd.f32 %v4317, %v4368
    %v4388 = vadd.f32 %v4318, %v4372
    %v4389 = vadd.f32 %v4319, %v4376
    %v4390 = vadd.f32 %v4320, %v4380
    %v4391 = vadd.f32 %v4321, %v4384
    %v4392 = vxor.u32 %v4385, 2147483648
    %v4393 = vxor.u32 %v4386, 2147483648
    %v4394 = vxor.u32 %v4387, 2147483648
    %v4395 = vxor.u32 %v4388, 2147483648
    %v4396 = vxor.u32 %v4389, 2147483648
    %v4397 = vxor.u32 %v4390, 2147483648
    %v4398 = vxor.u32 %v4391, 2147483648
    %v4399 = vmul.f32 %v4392, 1.442695
    %v4400 = vpow.pop %v4399
    %v4401 = vmul.f32 %v4393, 1.442695
    %v4402 = vpow.pop %v4401
    %v4403 = vmul.f32 %v4394, 1.442695
    %v4404 = vpow.pop %v4403
    %v4405 = vmul.f32 %v4395, 1.442695
    %v4406 = vpow.pop %v4405
    %v4407 = vmul.f32 %v4396, 1.442695
    %v4408 = vpow.pop %v4407
    %v4409 = vmul.f32 %v4397, 1.442695
    %v4410 = vpow.pop %v4409
    %v4411 = vmul.f32 %v4398, 1.442695
    %v4412 = vpow.pop %v4411
    %v4413 = vadd.f32 %v4400, 1.0
    %v4414 = vadd.f32 %v4402, 1.0
    %v4415 = vadd.f32 %v4404, 1.0
    %v4416 = vadd.f32 %v4406, 1.0
    %v4417 = vadd.f32 %v4408, 1.0
    %v4418 = vadd.f32 %v4410, 1.0
    %v4419 = vadd.f32 %v4412, 1.0
    %v4420 = vrcp.pop %v4413
    %v4421 = vmul.f32 1.0, %v4420
    %v4422 = vrcp.pop %v4414
    %v4423 = vmul.f32 1.0, %v4422
    %v4424 = vrcp.pop %v4415
    %v4425 = vmul.f32 1.0, %v4424
    %v4426 = vrcp.pop %v4416
    %v4427 = vmul.f32 1.0, %v4426
    %v4428 = vrcp.pop %v4417
    %v4429 = vmul.f32 1.0, %v4428
    %v4430 = vrcp.pop %v4418
    %v4431 = vmul.f32 1.0, %v4430
    %v4432 = vrcp.pop %v4419
    %v4433 = vmul.f32 1.0, %v4432
    %4434 = vst [vmem:[#allocation11] sm:$0xff] %v4421
    %4435 = vst [vmem:[#allocation11 + $0x8] sm:$0xff] %v4423
    %4436 = vst [vmem:[#allocation11 + $0x10] sm:$0xff] %v4425
    %4437 = vst [vmem:[#allocation11 + $0x18] sm:$0xff] %v4427
    %4438 = vst [vmem:[#allocation11 + $0x20] sm:$0xff] %v4429
    %4439 = vst [vmem:[#allocation11 + $0x28] sm:$0xff] %v4431
    %vm4440 = vcmask 130048
    %4441 = vst.msk [vmem:[#allocation11 + $0x30] sm:$0xff] %vm4440, %v4433
    // Predicated region
    $region46: #{generator_forward.1} parent=1 // pred_check
      _
    $region47: #{generator_forward.1} parent=1 // pred_check_branch
      %4443 = sbr.rel (0) target = $region49
    $region48: #{generator_forward.1} parent=1 // pred_region
      %s4445 = ssub.s32 896, 896
      %4446 = vsyncadd [#allocation4], %s4445
      %s4448 = sshll.u32 [#allocation11], 4
      %s4449 = int_to_ptr.vmem [resolvable:$true] %s4448
      %4451 = dma.vmem_to_hbm [thread:$0]  %s4449, 896, %s6, [#allocation4]
    $region49: #{generator_forward.1} parent=1 // pred_fallthru
      _
    // Predicated region
    $region50: #{generator_forward.1} parent=1 // pred_check
      _
    $region51: #{generator_forward.1} parent=1 // pred_check_branch
      %4453 = sbr.rel (0) target = $region53
    $region52: #{generator_forward.1} parent=1 // pred_region
      %4454 = dma.done [#allocation4], 896
    $region53: #{generator_forward.1} parent=1 // pred_fallthru
      _
    %4455 = vsyncpa [#allocation3], 1
    %4456 = vsyncpa [#allocation6], 1
    %4457 = vsyncpa [#allocation9], 1
    %4458 = vsyncpa [#allocation4], 1

</llo_original>
